<compile_context>
chip_gen: v5e
topology: v5e:2x2
jax: 0.10.0
libtpu: 0.0.40
codegen_flags: <defaults>
</compile_context>

<pallas_src>
import jax
import jax.numpy as jnp
from jax import lax
from jax.experimental import pallas as pl
from jax.experimental.pallas import tpu as pltpu


# ----------------------------- Pallas kernel ------------------------------ #
def bilstm_fc_kernel(emb_ref,     # (T, Bp, Ep)  embedded tokens (time-major)
                     wihf_ref,    # (Ep, 4Hp)    forward  W_ih^T (gate-padded)
                     whhf_ref,    # (Hp, 4Hp)    forward  W_hh^T
                     bf_ref,      # (1, 4Hp)     forward  b_ih + b_hh
                     wihb_ref,    # (Ep, 4Hp)    reverse  W_ih^T
                     whhb_ref,    # (Hp, 4Hp)    reverse  W_hh^T
                     bb_ref,      # (1, 4Hp)     reverse  b_ih + b_hh
                     fcwf_ref,    # (Hp, Cp)     fc weight rows for fwd hidden
                     fcwb_ref,    # (Hp, Cp)     fc weight rows for bwd hidden
                     fcb_ref,     # (1, Cp)      fc bias
                     out_ref,     # (T, Bp, Cp)  logits (time-major, padded C)
                     gxf_scr,     # scratch (T, Bp, 4Hp) hoisted x-gates, fwd
                     gxb_scr,     # scratch (T, Bp, 4Hp) hoisted x-gates, bwd
                     hf_scr,      # scratch (T, Bp, Hp)  forward hiddens
                     hb_scr):     # scratch (T, Bp, Hp)  backward hiddens
    T, Bp, Ep = emb_ref.shape
    Hp = whhf_ref.shape[0]
    G = 4 * Hp
    Cp = fcwf_ref.shape[1]

    # Flat (T*Bp, Ep) view: Bp is a multiple of 8 and Ep a multiple of 128, so
    # the merge of the two leading dims is layout-free.
    emb2d = emb_ref[...].reshape(T * Bp, Ep)

    # Hoisted input projections: one flat MXU matmul per direction, bias
    # folded in, so only h @ W_hh remains inside the serial recurrence.
    gxf_scr[...] = (jnp.dot(emb2d, wihf_ref[...],
                            preferred_element_type=jnp.float32)
                    + bf_ref[...]).reshape(T, Bp, G)
    gxb_scr[...] = (jnp.dot(emb2d, wihb_ref[...],
                            preferred_element_type=jnp.float32)
                    + bb_ref[...]).reshape(T, Bp, G)

    whhf = whhf_ref[...]
    whhb = whhb_ref[...]

    def cell(gx, h, c, whh):
        # PyTorch gate order: i, f, g, o (each gate block is Hp=128 lanes).
        gates = gx + jnp.dot(h, whh, preferred_element_type=jnp.float32)
        i_g = jax.nn.sigmoid(gates[:, 0 * Hp:1 * Hp])
        f_g = jax.nn.sigmoid(gates[:, 1 * Hp:2 * Hp])
        g_g = jnp.tanh(gates[:, 2 * Hp:3 * Hp])
        o_g = jax.nn.sigmoid(gates[:, 3 * Hp:4 * Hp])
        c_new = f_g * c + i_g * g_g
        h_new = o_g * jnp.tanh(c_new)
        return h_new, c_new

    z = jnp.zeros((Bp, Hp), jnp.float32)

    # Fused forward + backward recurrence: both independent chains advance in
    # the same (fully unrolled) iteration so their serial latencies overlap.
    # With Bp a multiple of 8, each hidden-state store is a full (8,128) tile.
    def body(s, carry):
        hf, cf, hb, cb = carry
        tb = T - 1 - s
        hf, cf = cell(gxf_scr[s], hf, cf, whhf)
        hb, cb = cell(gxb_scr[tb], hb, cb, whhb)
        hf_scr[s] = hf
        hb_scr[tb] = hb
        return (hf, cf, hb, cb)

    lax.fori_loop(0, T, body, (z, z, z, z), unroll=True)

    # Final Linear: no concat — fc weight split into fwd/bwd halves, one flat
    # MXU projection per direction, lane-dense (Cp=128) output store.
    hf2d = hf_scr[...].reshape(T * Bp, Hp)
    hb2d = hb_scr[...].reshape(T * Bp, Hp)
    logits = (jnp.dot(hf2d, fcwf_ref[...], preferred_element_type=jnp.float32)
              + jnp.dot(hb2d, fcwb_ref[...], preferred_element_type=jnp.float32)
              + fcb_ref[...])
    out_ref[...] = logits.reshape(T, Bp, Cp)


# ------------------------------ Wrapper ------------------------------------ #
def _pad_axis(x, axis, new_size):
    pad = new_size - x.shape[axis]
    if pad <= 0:
        return x
    widths = [(0, 0)] * x.ndim
    widths[axis] = (0, pad)
    return jnp.pad(x, widths)


def _pad_gate_cols(w, H, Hp):
    """(..., 4H) -> (..., 4Hp): zero-pad each of the 4 gate blocks to Hp."""
    parts = [_pad_axis(w[..., k * H:(k + 1) * H], w.ndim - 1, Hp)
             for k in range(4)]
    return jnp.concatenate(parts, axis=-1)


def make_ner_forward(T, B, E, H, C):
    LANE = 128
    SUB = 8
    Ep = ((E + LANE - 1) // LANE) * LANE
    Hp = ((H + LANE - 1) // LANE) * LANE
    Cp = ((C + LANE - 1) // LANE) * LANE
    Bp = ((B + SUB - 1) // SUB) * SUB        # sublane-aligned batch

    vmem = pl.BlockSpec(memory_space=pltpu.MemorySpace.VMEM)
    kernel_call = pl.pallas_call(
        bilstm_fc_kernel,
        out_shape=jax.ShapeDtypeStruct((T, Bp, Cp), jnp.float32),
        in_specs=[vmem] * 10,
        out_specs=vmem,
        scratch_shapes=[
            pltpu.VMEM((T, Bp, 4 * Hp), jnp.float32),   # hoisted x-gates fwd
            pltpu.VMEM((T, Bp, 4 * Hp), jnp.float32),   # hoisted x-gates bwd
            pltpu.VMEM((T, Bp, Hp), jnp.float32),       # forward hiddens
            pltpu.VMEM((T, Bp, Hp), jnp.float32),       # backward hiddens
        ],
    )
    # TODO(synk): at real batch sizes, add a grid over B with
    # dimension_semantics=("parallel",) so both v7x TensorCores are used;
    # pointless at B=2.

    @jax.jit
    def forward(tokens, params):
        # ---- pad params to 128-aligned shapes (tiny, exact zero-padding) ----
        emb_tab = _pad_axis(params['emb'], 1, Ep)                          # (V, Ep)
        wihf = _pad_gate_cols(_pad_axis(params['w_ih_f'], 0, Ep), H, Hp)   # (Ep, 4Hp)
        whhf = _pad_gate_cols(_pad_axis(params['w_hh_f'], 0, Hp), H, Hp)   # (Hp, 4Hp)
        bf = _pad_gate_cols(params['b_f'], H, Hp)                          # (1, 4Hp)
        wihb = _pad_gate_cols(_pad_axis(params['w_ih_b'], 0, Ep), H, Hp)
        whhb = _pad_gate_cols(_pad_axis(params['w_hh_b'], 0, Hp), H, Hp)
        bb = _pad_gate_cols(params['b_b'], H, Hp)
        fcwf = _pad_axis(_pad_axis(params['fc_w'][:H], 0, Hp), 1, Cp)      # (Hp, Cp)
        fcwb = _pad_axis(_pad_axis(params['fc_w'][H:], 0, Hp), 1, Cp)      # (Hp, Cp)
        fcb = _pad_axis(params['fc_b'], 1, Cp)                             # (1, Cp)

        # Pad batch to a multiple of 8; padded rows are independent & dropped.
        tokens_p = jnp.pad(tokens, ((0, Bp - B), (0, 0)))                  # (Bp, T)
        # Embedding gather directly in time-major (avoids a (B,T,E) transpose).
        emb_t = jnp.take(emb_tab, tokens_p.T, axis=0)                      # (T, Bp, Ep)

        out = kernel_call(emb_t, wihf, whhf, bf, wihb, whhb, bb,
                          fcwf, fcwb, fcb)                                 # (T, Bp, Cp)
        return jnp.transpose(out[:, :B, :C], (1, 0, 2))                    # (B, T, C)

    return forward


# --------------------------- Pure-JAX reference ----------------------------- #
def ref_forward(tokens, p, H):
    emb = jnp.take(p['emb'], tokens, axis=0)                 # (B, T, E)
    xs = jnp.transpose(emb, (1, 0, 2))                       # (T, B, E)
    B = tokens.shape[0]

    def run_dir(wih, whh, b, reverse):
        def step(carry, x_t):
            h, c = carry
            gates = x_t @ wih + h @ whh + b
            i_g = jax.nn.sigmoid(gates[:, 0 * H:1 * H])
            f_g = jax.nn.sigmoid(gates[:, 1 * H:2 * H])
            g_g = jnp.tanh(gates[:, 2 * H:3 * H])
            o_g = jax.nn.sigmoid(gates[:, 3 * H:4 * H])
            c_new = f_g * c + i_g * g_g
            h_new = o_g * jnp.tanh(c_new)
            return (h_new, c_new), h_new

        init = (jnp.zeros((B, H), jnp.float32), jnp.zeros((B, H), jnp.float32))
        _, hs = lax.scan(step, init, xs, reverse=reverse)
        return hs                                            # (T, B, H)

    hf = run_dir(p['w_ih_f'], p['w_hh_f'], p['b_f'], reverse=False)
    hb = run_dir(p['w_ih_b'], p['w_hh_b'], p['b_b'], reverse=True)
    hcat = jnp.concatenate([hf, hb], axis=-1)                # (T, B, 2H)
    out = jnp.einsum('tbh,hc->tbc', hcat, p['fc_w']) + p['fc_b']
    return jnp.transpose(out, (1, 0, 2))                     # (B, T, C)


# --------------------------------- Main ------------------------------------ #
if __name__ == "__main__":
    VOCAB = 50
    EMB = 100          # embedding_dim from the script
    HID = 64           # hidden_dim from the script
    # TODO(synk): num_classes = len(label_to_idx) is 0 in the source script
    # (empty label set); use a small nonzero class count instead.
    NUM_CLASSES = 8
    B, T = 2, 8

    key = jax.random.PRNGKey(0)
    keys = jax.random.split(key, 12)

    k_lstm = 1.0 / jnp.sqrt(jnp.float32(HID))
    k_fc = 1.0 / jnp.sqrt(jnp.float32(2 * HID))

    def uni(k, shape, bound):
        return jax.random.uniform(k, shape, jnp.float32, -bound, bound)

    params = {
        'emb': jax.random.normal(keys[0], (VOCAB, EMB), jnp.float32),
        # forward direction (PyTorch weight_ih_l0 is (4H,E); stored transposed)
        'w_ih_f': uni(keys[1], (EMB, 4 * HID), k_lstm),
        'w_hh_f': uni(keys[2], (HID, 4 * HID), k_lstm),
        'b_f': (uni(keys[3], (1, 4 * HID), k_lstm)
                + uni(keys[4], (1, 4 * HID), k_lstm)),       # b_ih + b_hh
        # reverse direction
        'w_ih_b': uni(keys[5], (EMB, 4 * HID), k_lstm),
        'w_hh_b': uni(keys[6], (HID, 4 * HID), k_lstm),
        'b_b': (uni(keys[7], (1, 4 * HID), k_lstm)
                + uni(keys[8], (1, 4 * HID), k_lstm)),
        # final Linear (PyTorch weight is (C, 2H); stored transposed)
        'fc_w': uni(keys[9], (2 * HID, NUM_CLASSES), k_fc),
        'fc_b': uni(keys[10], (1, NUM_CLASSES), k_fc),
    }

    tokens = jax.random.randint(keys[11], (B, T), 0, VOCAB, dtype=jnp.int32)

    forward = make_ner_forward(T, B, EMB, HID, NUM_CLASSES)
    out = forward(tokens, params)
    out = jax.block_until_ready(out)

    assert out.shape == (B, T, NUM_CLASSES), out.shape
    assert bool(jnp.all(jnp.isfinite(out)))

    # Sanity check against a pure-JAX reference of the same math.
    ref = jax.block_until_ready(ref_forward(tokens, params, HID))
    assert jnp.allclose(out, ref, atol=1e-4, rtol=1e-4), (
        float(jnp.max(jnp.abs(out - ref))))

    print("KERNEL_OK")
</pallas_src>

<mosaic_0001>
module attributes {stable_mosaic.version = 11 : i64} {
  func.func @bilstm_fc_kernel(%arg0: memref<8x8x128xf32, #tpu.memory_space<vmem>>, %arg1: memref<128x512xf32, #tpu.memory_space<vmem>>, %arg2: memref<128x512xf32, #tpu.memory_space<vmem>>, %arg3: memref<1x512xf32, #tpu.memory_space<vmem>>, %arg4: memref<128x512xf32, #tpu.memory_space<vmem>>, %arg5: memref<128x512xf32, #tpu.memory_space<vmem>>, %arg6: memref<1x512xf32, #tpu.memory_space<vmem>>, %arg7: memref<128x128xf32, #tpu.memory_space<vmem>>, %arg8: memref<128x128xf32, #tpu.memory_space<vmem>>, %arg9: memref<1x128xf32, #tpu.memory_space<vmem>>, %arg10: memref<8x8x128xf32, #tpu.memory_space<vmem>>, %arg11: memref<8x8x512xf32, #tpu.memory_space<vmem>>, %arg12: memref<8x8x512xf32, #tpu.memory_space<vmem>>, %arg13: memref<8x8x128xf32, #tpu.memory_space<vmem>>, %arg14: memref<8x8x128xf32, #tpu.memory_space<vmem>>) attributes {dimension_semantics = [], scalar_prefetch = 0 : i64, scratch_operands = 4 : i64, tpu.core_type = #tpu.core_type<tc>} {
    %c0 = arith.constant 0 : index
    %c0_0 = arith.constant 0 : index
    %c0_1 = arith.constant 0 : index
    %0 = vector.load %arg0[%c0, %c0_0, %c0_1] : memref<8x8x128xf32, #tpu.memory_space<vmem>>, vector<8x8x128xf32>
    %1 = vector.shape_cast %0 : vector<8x8x128xf32> to vector<64x128xf32>
    %c0_2 = arith.constant 0 : index
    %c0_3 = arith.constant 0 : index
    %2 = vector.load %arg1[%c0_2, %c0_3] : memref<128x512xf32, #tpu.memory_space<vmem>>, vector<128x512xf32>
    %cst = arith.constant dense<0.000000e+00> : vector<64x512xf32>
    %3 = tpu.matmul %1, %2, %cst {dimension_numbers = #tpu.dot_dimension_numbers<[1], [0], [0], [1], [0, 0, 1, 1], [], []>} : vector<64x128xf32>, vector<128x512xf32>, vector<64x512xf32> -> vector<64x512xf32>
    %c0_4 = arith.constant 0 : index
    %c0_5 = arith.constant 0 : index
    %4 = vector.load %arg3[%c0_4, %c0_5] : memref<1x512xf32, #tpu.memory_space<vmem>>, vector<1x512xf32>
    %5 = vector.broadcast %4 : vector<1x512xf32> to vector<64x512xf32>
    %6 = arith.addf %3, %5 : vector<64x512xf32>
    %7 = vector.shape_cast %6 : vector<64x512xf32> to vector<8x8x512xf32>
    %c0_6 = arith.constant 0 : index
    %c0_7 = arith.constant 0 : index
    %c0_8 = arith.constant 0 : index
    %8 = vector.load %arg11[%c0_6, %c0_7, %c0_8] : memref<8x8x512xf32, #tpu.memory_space<vmem>>, vector<8x8x512xf32>
    tpu.vector_store %arg11[%c0_6, %c0_7, %c0_8], %7 {strides = array<i32>} : memref<8x8x512xf32, #tpu.memory_space<vmem>>, vector<8x8x512xf32>,
    %c0_9 = arith.constant 0 : index
    %c0_10 = arith.constant 0 : index
    %9 = vector.load %arg4[%c0_9, %c0_10] : memref<128x512xf32, #tpu.memory_space<vmem>>, vector<128x512xf32>
    %cst_11 = arith.constant dense<0.000000e+00> : vector<64x512xf32>
    %10 = tpu.matmul %1, %9, %cst_11 {dimension_numbers = #tpu.dot_dimension_numbers<[1], [0], [0], [1], [0, 0, 1, 1], [], []>} : vector<64x128xf32>, vector<128x512xf32>, vector<64x512xf32> -> vector<64x512xf32>
    %c0_12 = arith.constant 0 : index
    %c0_13 = arith.constant 0 : index
    %11 = vector.load %arg6[%c0_12, %c0_13] : memref<1x512xf32, #tpu.memory_space<vmem>>, vector<1x512xf32>
    %12 = vector.broadcast %11 : vector<1x512xf32> to vector<64x512xf32>
    %13 = arith.addf %10, %12 : vector<64x512xf32>
    %14 = vector.shape_cast %13 : vector<64x512xf32> to vector<8x8x512xf32>
    %c0_14 = arith.constant 0 : index
    %c0_15 = arith.constant 0 : index
    %c0_16 = arith.constant 0 : index
    %15 = vector.load %arg12[%c0_14, %c0_15, %c0_16] : memref<8x8x512xf32, #tpu.memory_space<vmem>>, vector<8x8x512xf32>
    tpu.vector_store %arg12[%c0_14, %c0_15, %c0_16], %14 {strides = array<i32>} : memref<8x8x512xf32, #tpu.memory_space<vmem>>, vector<8x8x512xf32>,
    %c0_17 = arith.constant 0 : index
    %c0_18 = arith.constant 0 : index
    %16 = vector.load %arg2[%c0_17, %c0_18] : memref<128x512xf32, #tpu.memory_space<vmem>>, vector<128x512xf32>
    %c0_19 = arith.constant 0 : index
    %c0_20 = arith.constant 0 : index
    %17 = vector.load %arg5[%c0_19, %c0_20] : memref<128x512xf32, #tpu.memory_space<vmem>>, vector<128x512xf32>
    %cst_21 = arith.constant 0.000000e+00 : f32
    %18 = vector.broadcast %cst_21 : f32 to vector<8x128xf32>
    %c0_i32 = arith.constant 0 : i32
    %c7_i32 = arith.constant 7 : i32
    %19 = arith.subi %c7_i32, %c0_i32 : i32
    %20 = arith.index_cast %c0_i32 : i32 to index
    %c0_22 = arith.constant 0 : index
    %c0_23 = arith.constant 0 : index
    %21 = vector.load %arg11[%20, %c0_22, %c0_23] : memref<8x8x512xf32, #tpu.memory_space<vmem>>, vector<1x8x512xf32>
    %22 = vector.shape_cast %21 : vector<1x8x512xf32> to vector<8x512xf32>
    %cst_24 = arith.constant dense<0.000000e+00> : vector<8x512xf32>
    %23 = tpu.matmul %18, %16, %cst_24 {dimension_numbers = #tpu.dot_dimension_numbers<[1], [0], [0], [1], [0, 0, 1, 1], [], []>} : vector<8x128xf32>, vector<128x512xf32>, vector<8x512xf32> -> vector<8x512xf32>
    %24 = arith.addf %22, %23 : vector<8x512xf32>
    %25 = vector.extract_strided_slice %24 {offsets = [0, 0], sizes = [8, 128], strides = [1, 1]} : vector<8x512xf32> to vector<8x128xf32>
    %26 = arith.negf %25 : vector<8x128xf32>
    %27 = math.exp %26 : vector<8x128xf32>
    %cst_25 = arith.constant 1.000000e+00 : f32
    %28 = vector.broadcast %cst_25 : f32 to vector<8x128xf32>
    %29 = arith.addf %28, %27 : vector<8x128xf32>
    %30 = arith.divf %28, %29 : vector<8x128xf32>
    %31 = vector.extract_strided_slice %24 {offsets = [0, 128], sizes = [8, 128], strides = [1, 1]} : vector<8x512xf32> to vector<8x128xf32>
    %32 = arith.negf %31 : vector<8x128xf32>
    %33 = math.exp %32 : vector<8x128xf32>
    %cst_26 = arith.constant 1.000000e+00 : f32
    %34 = vector.broadcast %cst_26 : f32 to vector<8x128xf32>
    %35 = arith.addf %34, %33 : vector<8x128xf32>
    %36 = arith.divf %34, %35 : vector<8x128xf32>
    %37 = vector.extract_strided_slice %24 {offsets = [0, 256], sizes = [8, 128], strides = [1, 1]} : vector<8x512xf32> to vector<8x128xf32>
    %38 = math.tanh %37 : vector<8x128xf32>
    %39 = vector.extract_strided_slice %24 {offsets = [0, 384], sizes = [8, 128], strides = [1, 1]} : vector<8x512xf32> to vector<8x128xf32>
    %40 = arith.negf %39 : vector<8x128xf32>
    %41 = math.exp %40 : vector<8x128xf32>
    %cst_27 = arith.constant 1.000000e+00 : f32
    %42 = vector.broadcast %cst_27 : f32 to vector<8x128xf32>
    %43 = arith.addf %42, %41 : vector<8x128xf32>
    %44 = arith.divf %42, %43 : vector<8x128xf32>
    %45 = arith.mulf %36, %18 : vector<8x128xf32>
    %46 = arith.mulf %30, %38 : vector<8x128xf32>
    %47 = arith.addf %45, %46 : vector<8x128xf32>
    %48 = math.tanh %47 : vector<8x128xf32>
    %49 = arith.mulf %44, %48 : vector<8x128xf32>
    %50 = arith.index_cast %19 : i32 to index
    %c0_28 = arith.constant 0 : index
    %c0_29 = arith.constant 0 : index
    %51 = vector.load %arg12[%50, %c0_28, %c0_29] : memref<8x8x512xf32, #tpu.memory_space<vmem>>, vector<1x8x512xf32>
    %52 = vector.shape_cast %51 : vector<1x8x512xf32> to vector<8x512xf32>
    %cst_30 = arith.constant dense<0.000000e+00> : vector<8x512xf32>
    %53 = tpu.matmul %18, %17, %cst_30 {dimension_numbers = #tpu.dot_dimension_numbers<[1], [0], [0], [1], [0, 0, 1, 1], [], []>} : vector<8x128xf32>, vector<128x512xf32>, vector<8x512xf32> -> vector<8x512xf32>
    %54 = arith.addf %52, %53 : vector<8x512xf32>
    %55 = vector.extract_strided_slice %54 {offsets = [0, 0], sizes = [8, 128], strides = [1, 1]} : vector<8x512xf32> to vector<8x128xf32>
    %56 = arith.negf %55 : vector<8x128xf32>
    %57 = math.exp %56 : vector<8x128xf32>
    %cst_31 = arith.constant 1.000000e+00 : f32
    %58 = vector.broadcast %cst_31 : f32 to vector<8x128xf32>
    %59 = arith.addf %58, %57 : vector<8x128xf32>
    %60 = arith.divf %58, %59 : vector<8x128xf32>
    %61 = vector.extract_strided_slice %54 {offsets = [0, 128], sizes = [8, 128], strides = [1, 1]} : vector<8x512xf32> to vector<8x128xf32>
    %62 = arith.negf %61 : vector<8x128xf32>
    %63 = math.exp %62 : vector<8x128xf32>
    %cst_32 = arith.constant 1.000000e+00 : f32
    %64 = vector.broadcast %cst_32 : f32 to vector<8x128xf32>
    %65 = arith.addf %64, %63 : vector<8x128xf32>
    %66 = arith.divf %64, %65 : vector<8x128xf32>
    %67 = vector.extract_strided_slice %54 {offsets = [0, 256], sizes = [8, 128], strides = [1, 1]} : vector<8x512xf32> to vector<8x128xf32>
    %68 = math.tanh %67 : vector<8x128xf32>
    %69 = vector.extract_strided_slice %54 {offsets = [0, 384], sizes = [8, 128], strides = [1, 1]} : vector<8x512xf32> to vector<8x128xf32>
    %70 = arith.negf %69 : vector<8x128xf32>
    %71 = math.exp %70 : vector<8x128xf32>
    %cst_33 = arith.constant 1.000000e+00 : f32
    %72 = vector.broadcast %cst_33 : f32 to vector<8x128xf32>
    %73 = arith.addf %72, %71 : vector<8x128xf32>
    %74 = arith.divf %72, %73 : vector<8x128xf32>
    %75 = arith.mulf %66, %18 : vector<8x128xf32>
    %76 = arith.mulf %60, %68 : vector<8x128xf32>
    %77 = arith.addf %75, %76 : vector<8x128xf32>
    %78 = math.tanh %77 : vector<8x128xf32>
    %79 = arith.mulf %74, %78 : vector<8x128xf32>
    %80 = arith.index_cast %c0_i32 : i32 to index
    %c0_34 = arith.constant 0 : index
    %c0_35 = arith.constant 0 : index
    %81 = vector.load %arg13[%80, %c0_34, %c0_35] : memref<8x8x128xf32, #tpu.memory_space<vmem>>, vector<1x8x128xf32>
    %82 = vector.shape_cast %81 : vector<1x8x128xf32> to vector<8x128xf32>
    %83 = vector.shape_cast %49 : vector<8x128xf32> to vector<1x8x128xf32>
    tpu.vector_store %arg13[%80, %c0_34, %c0_35], %83 {strides = array<i32>} : memref<8x8x128xf32, #tpu.memory_space<vmem>>, vector<1x8x128xf32>,
    %84 = arith.index_cast %19 : i32 to index
    %c0_36 = arith.constant 0 : index
    %c0_37 = arith.constant 0 : index
    %85 = vector.load %arg14[%84, %c0_36, %c0_37] : memref<8x8x128xf32, #tpu.memory_space<vmem>>, vector<1x8x128xf32>
    %86 = vector.shape_cast %85 : vector<1x8x128xf32> to vector<8x128xf32>
    %87 = vector.shape_cast %79 : vector<8x128xf32> to vector<1x8x128xf32>
    tpu.vector_store %arg14[%84, %c0_36, %c0_37], %87 {strides = array<i32>} : memref<8x8x128xf32, #tpu.memory_space<vmem>>, vector<1x8x128xf32>,
    %c1_i32 = arith.constant 1 : i32
    %c7_i32_38 = arith.constant 7 : i32
    %88 = arith.subi %c7_i32_38, %c1_i32 : i32
    %89 = arith.index_cast %c1_i32 : i32 to index
    %c0_39 = arith.constant 0 : index
    %c0_40 = arith.constant 0 : index
    %90 = vector.load %arg11[%89, %c0_39, %c0_40] : memref<8x8x512xf32, #tpu.memory_space<vmem>>, vector<1x8x512xf32>
    %91 = vector.shape_cast %90 : vector<1x8x512xf32> to vector<8x512xf32>
    %cst_41 = arith.constant dense<0.000000e+00> : vector<8x512xf32>
    %92 = tpu.matmul %49, %16, %cst_41 {dimension_numbers = #tpu.dot_dimension_numbers<[1], [0], [0], [1], [0, 0, 1, 1], [], []>} : vector<8x128xf32>, vector<128x512xf32>, vector<8x512xf32> -> vector<8x512xf32>
    %93 = arith.addf %91, %92 : vector<8x512xf32>
    %94 = vector.extract_strided_slice %93 {offsets = [0, 0], sizes = [8, 128], strides = [1, 1]} : vector<8x512xf32> to vector<8x128xf32>
    %95 = arith.negf %94 : vector<8x128xf32>
    %96 = math.exp %95 : vector<8x128xf32>
    %cst_42 = arith.constant 1.000000e+00 : f32
    %97 = vector.broadcast %cst_42 : f32 to vector<8x128xf32>
    %98 = arith.addf %97, %96 : vector<8x128xf32>
    %99 = arith.divf %97, %98 : vector<8x128xf32>
    %100 = vector.extract_strided_slice %93 {offsets = [0, 128], sizes = [8, 128], strides = [1, 1]} : vector<8x512xf32> to vector<8x128xf32>
    %101 = arith.negf %100 : vector<8x128xf32>
    %102 = math.exp %101 : vector<8x128xf32>
    %cst_43 = arith.constant 1.000000e+00 : f32
    %103 = vector.broadcast %cst_43 : f32 to vector<8x128xf32>
    %104 = arith.addf %103, %102 : vector<8x128xf32>
    %105 = arith.divf %103, %104 : vector<8x128xf32>
    %106 = vector.extract_strided_slice %93 {offsets = [0, 256], sizes = [8, 128], strides = [1, 1]} : vector<8x512xf32> to vector<8x128xf32>
    %107 = math.tanh %106 : vector<8x128xf32>
    %108 = vector.extract_strided_slice %93 {offsets = [0, 384], sizes = [8, 128], strides = [1, 1]} : vector<8x512xf32> to vector<8x128xf32>
    %109 = arith.negf %108 : vector<8x128xf32>
    %110 = math.exp %109 : vector<8x128xf32>
    %cst_44 = arith.constant 1.000000e+00 : f32
    %111 = vector.broadcast %cst_44 : f32 to vector<8x128xf32>
    %112 = arith.addf %111, %110 : vector<8x128xf32>
    %113 = arith.divf %111, %112 : vector<8x128xf32>
    %114 = arith.mulf %105, %47 : vector<8x128xf32>
    %115 = arith.mulf %99, %107 : vector<8x128xf32>
    %116 = arith.addf %114, %115 : vector<8x128xf32>
    %117 = math.tanh %116 : vector<8x128xf32>
    %118 = arith.mulf %113, %117 : vector<8x128xf32>
    %119 = arith.index_cast %88 : i32 to index
    %c0_45 = arith.constant 0 : index
    %c0_46 = arith.constant 0 : index
    %120 = vector.load %arg12[%119, %c0_45, %c0_46] : memref<8x8x512xf32, #tpu.memory_space<vmem>>, vector<1x8x512xf32>
    %121 = vector.shape_cast %120 : vector<1x8x512xf32> to vector<8x512xf32>
    %cst_47 = arith.constant dense<0.000000e+00> : vector<8x512xf32>
    %122 = tpu.matmul %79, %17, %cst_47 {dimension_numbers = #tpu.dot_dimension_numbers<[1], [0], [0], [1], [0, 0, 1, 1], [], []>} : vector<8x128xf32>, vector<128x512xf32>, vector<8x512xf32> -> vector<8x512xf32>
    %123 = arith.addf %121, %122 : vector<8x512xf32>
    %124 = vector.extract_strided_slice %123 {offsets = [0, 0], sizes = [8, 128], strides = [1, 1]} : vector<8x512xf32> to vector<8x128xf32>
    %125 = arith.negf %124 : vector<8x128xf32>
    %126 = math.exp %125 : vector<8x128xf32>
    %cst_48 = arith.constant 1.000000e+00 : f32
    %127 = vector.broadcast %cst_48 : f32 to vector<8x128xf32>
    %128 = arith.addf %127, %126 : vector<8x128xf32>
    %129 = arith.divf %127, %128 : vector<8x128xf32>
    %130 = vector.extract_strided_slice %123 {offsets = [0, 128], sizes = [8, 128], strides = [1, 1]} : vector<8x512xf32> to vector<8x128xf32>
    %131 = arith.negf %130 : vector<8x128xf32>
    %132 = math.exp %131 : vector<8x128xf32>
    %cst_49 = arith.constant 1.000000e+00 : f32
    %133 = vector.broadcast %cst_49 : f32 to vector<8x128xf32>
    %134 = arith.addf %133, %132 : vector<8x128xf32>
    %135 = arith.divf %133, %134 : vector<8x128xf32>
    %136 = vector.extract_strided_slice %123 {offsets = [0, 256], sizes = [8, 128], strides = [1, 1]} : vector<8x512xf32> to vector<8x128xf32>
    %137 = math.tanh %136 : vector<8x128xf32>
    %138 = vector.extract_strided_slice %123 {offsets = [0, 384], sizes = [8, 128], strides = [1, 1]} : vector<8x512xf32> to vector<8x128xf32>
    %139 = arith.negf %138 : vector<8x128xf32>
    %140 = math.exp %139 : vector<8x128xf32>
    %cst_50 = arith.constant 1.000000e+00 : f32
    %141 = vector.broadcast %cst_50 : f32 to vector<8x128xf32>
    %142 = arith.addf %141, %140 : vector<8x128xf32>
    %143 = arith.divf %141, %142 : vector<8x128xf32>
    %144 = arith.mulf %135, %77 : vector<8x128xf32>
    %145 = arith.mulf %129, %137 : vector<8x128xf32>
    %146 = arith.addf %144, %145 : vector<8x128xf32>
    %147 = math.tanh %146 : vector<8x128xf32>
    %148 = arith.mulf %143, %147 : vector<8x128xf32>
    %149 = arith.index_cast %c1_i32 : i32 to index
    %c0_51 = arith.constant 0 : index
    %c0_52 = arith.constant 0 : index
    %150 = vector.load %arg13[%149, %c0_51, %c0_52] : memref<8x8x128xf32, #tpu.memory_space<vmem>>, vector<1x8x128xf32>
    %151 = vector.shape_cast %150 : vector<1x8x128xf32> to vector<8x128xf32>
    %152 = vector.shape_cast %118 : vector<8x128xf32> to vector<1x8x128xf32>
    tpu.vector_store %arg13[%149, %c0_51, %c0_52], %152 {strides = array<i32>} : memref<8x8x128xf32, #tpu.memory_space<vmem>>, vector<1x8x128xf32>,
    %153 = arith.index_cast %88 : i32 to index
    %c0_53 = arith.constant 0 : index
    %c0_54 = arith.constant 0 : index
    %154 = vector.load %arg14[%153, %c0_53, %c0_54] : memref<8x8x128xf32, #tpu.memory_space<vmem>>, vector<1x8x128xf32>
    %155 = vector.shape_cast %154 : vector<1x8x128xf32> to vector<8x128xf32>
    %156 = vector.shape_cast %148 : vector<8x128xf32> to vector<1x8x128xf32>
    tpu.vector_store %arg14[%153, %c0_53, %c0_54], %156 {strides = array<i32>} : memref<8x8x128xf32, #tpu.memory_space<vmem>>, vector<1x8x128xf32>,
    %c2_i32 = arith.constant 2 : i32
    %c7_i32_55 = arith.constant 7 : i32
    %157 = arith.subi %c7_i32_55, %c2_i32 : i32
    %158 = arith.index_cast %c2_i32 : i32 to index
    %c0_56 = arith.constant 0 : index
    %c0_57 = arith.constant 0 : index
    %159 = vector.load %arg11[%158, %c0_56, %c0_57] : memref<8x8x512xf32, #tpu.memory_space<vmem>>, vector<1x8x512xf32>
    %160 = vector.shape_cast %159 : vector<1x8x512xf32> to vector<8x512xf32>
    %cst_58 = arith.constant dense<0.000000e+00> : vector<8x512xf32>
    %161 = tpu.matmul %118, %16, %cst_58 {dimension_numbers = #tpu.dot_dimension_numbers<[1], [0], [0], [1], [0, 0, 1, 1], [], []>} : vector<8x128xf32>, vector<128x512xf32>, vector<8x512xf32> -> vector<8x512xf32>
    %162 = arith.addf %160, %161 : vector<8x512xf32>
    %163 = vector.extract_strided_slice %162 {offsets = [0, 0], sizes = [8, 128], strides = [1, 1]} : vector<8x512xf32> to vector<8x128xf32>
    %164 = arith.negf %163 : vector<8x128xf32>
    %165 = math.exp %164 : vector<8x128xf32>
    %cst_59 = arith.constant 1.000000e+00 : f32
    %166 = vector.broadcast %cst_59 : f32 to vector<8x128xf32>
    %167 = arith.addf %166, %165 : vector<8x128xf32>
    %168 = arith.divf %166, %167 : vector<8x128xf32>
    %169 = vector.extract_strided_slice %162 {offsets = [0, 128], sizes = [8, 128], strides = [1, 1]} : vector<8x512xf32> to vector<8x128xf32>
    %170 = arith.negf %169 : vector<8x128xf32>
    %171 = math.exp %170 : vector<8x128xf32>
    %cst_60 = arith.constant 1.000000e+00 : f32
    %172 = vector.broadcast %cst_60 : f32 to vector<8x128xf32>
    %173 = arith.addf %172, %171 : vector<8x128xf32>
    %174 = arith.divf %172, %173 : vector<8x128xf32>
    %175 = vector.extract_strided_slice %162 {offsets = [0, 256], sizes = [8, 128], strides = [1, 1]} : vector<8x512xf32> to vector<8x128xf32>
    %176 = math.tanh %175 : vector<8x128xf32>
    %177 = vector.extract_strided_slice %162 {offsets = [0, 384], sizes = [8, 128], strides = [1, 1]} : vector<8x512xf32> to vector<8x128xf32>
    %178 = arith.negf %177 : vector<8x128xf32>
    %179 = math.exp %178 : vector<8x128xf32>
    %cst_61 = arith.constant 1.000000e+00 : f32
    %180 = vector.broadcast %cst_61 : f32 to vector<8x128xf32>
    %181 = arith.addf %180, %179 : vector<8x128xf32>
    %182 = arith.divf %180, %181 : vector<8x128xf32>
    %183 = arith.mulf %174, %116 : vector<8x128xf32>
    %184 = arith.mulf %168, %176 : vector<8x128xf32>
    %185 = arith.addf %183, %184 : vector<8x128xf32>
    %186 = math.tanh %185 : vector<8x128xf32>
    %187 = arith.mulf %182, %186 : vector<8x128xf32>
    %188 = arith.index_cast %157 : i32 to index
    %c0_62 = arith.constant 0 : index
    %c0_63 = arith.constant 0 : index
    %189 = vector.load %arg12[%188, %c0_62, %c0_63] : memref<8x8x512xf32, #tpu.memory_space<vmem>>, vector<1x8x512xf32>
    %190 = vector.shape_cast %189 : vector<1x8x512xf32> to vector<8x512xf32>
    %cst_64 = arith.constant dense<0.000000e+00> : vector<8x512xf32>
    %191 = tpu.matmul %148, %17, %cst_64 {dimension_numbers = #tpu.dot_dimension_numbers<[1], [0], [0], [1], [0, 0, 1, 1], [], []>} : vector<8x128xf32>, vector<128x512xf32>, vector<8x512xf32> -> vector<8x512xf32>
    %192 = arith.addf %190, %191 : vector<8x512xf32>
    %193 = vector.extract_strided_slice %192 {offsets = [0, 0], sizes = [8, 128], strides = [1, 1]} : vector<8x512xf32> to vector<8x128xf32>
    %194 = arith.negf %193 : vector<8x128xf32>
    %195 = math.exp %194 : vector<8x128xf32>
    %cst_65 = arith.constant 1.000000e+00 : f32
    %196 = vector.broadcast %cst_65 : f32 to vector<8x128xf32>
    %197 = arith.addf %196, %195 : vector<8x128xf32>
    %198 = arith.divf %196, %197 : vector<8x128xf32>
    %199 = vector.extract_strided_slice %192 {offsets = [0, 128], sizes = [8, 128], strides = [1, 1]} : vector<8x512xf32> to vector<8x128xf32>
    %200 = arith.negf %199 : vector<8x128xf32>
    %201 = math.exp %200 : vector<8x128xf32>
    %cst_66 = arith.constant 1.000000e+00 : f32
    %202 = vector.broadcast %cst_66 : f32 to vector<8x128xf32>
    %203 = arith.addf %202, %201 : vector<8x128xf32>
    %204 = arith.divf %202, %203 : vector<8x128xf32>
    %205 = vector.extract_strided_slice %192 {offsets = [0, 256], sizes = [8, 128], strides = [1, 1]} : vector<8x512xf32> to vector<8x128xf32>
    %206 = math.tanh %205 : vector<8x128xf32>
    %207 = vector.extract_strided_slice %192 {offsets = [0, 384], sizes = [8, 128], strides = [1, 1]} : vector<8x512xf32> to vector<8x128xf32>
    %208 = arith.negf %207 : vector<8x128xf32>
    %209 = math.exp %208 : vector<8x128xf32>
    %cst_67 = arith.constant 1.000000e+00 : f32
    %210 = vector.broadcast %cst_67 : f32 to vector<8x128xf32>
    %211 = arith.addf %210, %209 : vector<8x128xf32>
    %212 = arith.divf %210, %211 : vector<8x128xf32>
    %213 = arith.mulf %204, %146 : vector<8x128xf32>
    %214 = arith.mulf %198, %206 : vector<8x128xf32>
    %215 = arith.addf %213, %214 : vector<8x128xf32>
    %216 = math.tanh %215 : vector<8x128xf32>
    %217 = arith.mulf %212, %216 : vector<8x128xf32>
    %218 = arith.index_cast %c2_i32 : i32 to index
    %c0_68 = arith.constant 0 : index
    %c0_69 = arith.constant 0 : index
    %219 = vector.load %arg13[%218, %c0_68, %c0_69] : memref<8x8x128xf32, #tpu.memory_space<vmem>>, vector<1x8x128xf32>
    %220 = vector.shape_cast %219 : vector<1x8x128xf32> to vector<8x128xf32>
    %221 = vector.shape_cast %187 : vector<8x128xf32> to vector<1x8x128xf32>
    tpu.vector_store %arg13[%218, %c0_68, %c0_69], %221 {strides = array<i32>} : memref<8x8x128xf32, #tpu.memory_space<vmem>>, vector<1x8x128xf32>,
    %222 = arith.index_cast %157 : i32 to index
    %c0_70 = arith.constant 0 : index
    %c0_71 = arith.constant 0 : index
    %223 = vector.load %arg14[%222, %c0_70, %c0_71] : memref<8x8x128xf32, #tpu.memory_space<vmem>>, vector<1x8x128xf32>
    %224 = vector.shape_cast %223 : vector<1x8x128xf32> to vector<8x128xf32>
    %225 = vector.shape_cast %217 : vector<8x128xf32> to vector<1x8x128xf32>
    tpu.vector_store %arg14[%222, %c0_70, %c0_71], %225 {strides = array<i32>} : memref<8x8x128xf32, #tpu.memory_space<vmem>>, vector<1x8x128xf32>,
    %c3_i32 = arith.constant 3 : i32
    %c7_i32_72 = arith.constant 7 : i32
    %226 = arith.subi %c7_i32_72, %c3_i32 : i32
    %227 = arith.index_cast %c3_i32 : i32 to index
    %c0_73 = arith.constant 0 : index
    %c0_74 = arith.constant 0 : index
    %228 = vector.load %arg11[%227, %c0_73, %c0_74] : memref<8x8x512xf32, #tpu.memory_space<vmem>>, vector<1x8x512xf32>
    %229 = vector.shape_cast %228 : vector<1x8x512xf32> to vector<8x512xf32>
    %cst_75 = arith.constant dense<0.000000e+00> : vector<8x512xf32>
    %230 = tpu.matmul %187, %16, %cst_75 {dimension_numbers = #tpu.dot_dimension_numbers<[1], [0], [0], [1], [0, 0, 1, 1], [], []>} : vector<8x128xf32>, vector<128x512xf32>, vector<8x512xf32> -> vector<8x512xf32>
    %231 = arith.addf %229, %230 : vector<8x512xf32>
    %232 = vector.extract_strided_slice %231 {offsets = [0, 0], sizes = [8, 128], strides = [1, 1]} : vector<8x512xf32> to vector<8x128xf32>
    %233 = arith.negf %232 : vector<8x128xf32>
    %234 = math.exp %233 : vector<8x128xf32>
    %cst_76 = arith.constant 1.000000e+00 : f32
    %235 = vector.broadcast %cst_76 : f32 to vector<8x128xf32>
    %236 = arith.addf %235, %234 : vector<8x128xf32>
    %237 = arith.divf %235, %236 : vector<8x128xf32>
    %238 = vector.extract_strided_slice %231 {offsets = [0, 128], sizes = [8, 128], strides = [1, 1]} : vector<8x512xf32> to vector<8x128xf32>
    %239 = arith.negf %238 : vector<8x128xf32>
    %240 = math.exp %239 : vector<8x128xf32>
    %cst_77 = arith.constant 1.000000e+00 : f32
    %241 = vector.broadcast %cst_77 : f32 to vector<8x128xf32>
    %242 = arith.addf %241, %240 : vector<8x128xf32>
    %243 = arith.divf %241, %242 : vector<8x128xf32>
    %244 = vector.extract_strided_slice %231 {offsets = [0, 256], sizes = [8, 128], strides = [1, 1]} : vector<8x512xf32> to vector<8x128xf32>
    %245 = math.tanh %244 : vector<8x128xf32>
    %246 = vector.extract_strided_slice %231 {offsets = [0, 384], sizes = [8, 128], strides = [1, 1]} : vector<8x512xf32> to vector<8x128xf32>
    %247 = arith.negf %246 : vector<8x128xf32>
    %248 = math.exp %247 : vector<8x128xf32>
    %cst_78 = arith.constant 1.000000e+00 : f32
    %249 = vector.broadcast %cst_78 : f32 to vector<8x128xf32>
    %250 = arith.addf %249, %248 : vector<8x128xf32>
    %251 = arith.divf %249, %250 : vector<8x128xf32>
    %252 = arith.mulf %243, %185 : vector<8x128xf32>
    %253 = arith.mulf %237, %245 : vector<8x128xf32>
    %254 = arith.addf %252, %253 : vector<8x128xf32>
    %255 = math.tanh %254 : vector<8x128xf32>
    %256 = arith.mulf %251, %255 : vector<8x128xf32>
    %257 = arith.index_cast %226 : i32 to index
    %c0_79 = arith.constant 0 : index
    %c0_80 = arith.constant 0 : index
    %258 = vector.load %arg12[%257, %c0_79, %c0_80] : memref<8x8x512xf32, #tpu.memory_space<vmem>>, vector<1x8x512xf32>
    %259 = vector.shape_cast %258 : vector<1x8x512xf32> to vector<8x512xf32>
    %cst_81 = arith.constant dense<0.000000e+00> : vector<8x512xf32>
    %260 = tpu.matmul %217, %17, %cst_81 {dimension_numbers = #tpu.dot_dimension_numbers<[1], [0], [0], [1], [0, 0, 1, 1], [], []>} : vector<8x128xf32>, vector<128x512xf32>, vector<8x512xf32> -> vector<8x512xf32>
    %261 = arith.addf %259, %260 : vector<8x512xf32>
    %262 = vector.extract_strided_slice %261 {offsets = [0, 0], sizes = [8, 128], strides = [1, 1]} : vector<8x512xf32> to vector<8x128xf32>
    %263 = arith.negf %262 : vector<8x128xf32>
    %264 = math.exp %263 : vector<8x128xf32>
    %cst_82 = arith.constant 1.000000e+00 : f32
    %265 = vector.broadcast %cst_82 : f32 to vector<8x128xf32>
    %266 = arith.addf %265, %264 : vector<8x128xf32>
    %267 = arith.divf %265, %266 : vector<8x128xf32>
    %268 = vector.extract_strided_slice %261 {offsets = [0, 128], sizes = [8, 128], strides = [1, 1]} : vector<8x512xf32> to vector<8x128xf32>
    %269 = arith.negf %268 : vector<8x128xf32>
    %270 = math.exp %269 : vector<8x128xf32>
    %cst_83 = arith.constant 1.000000e+00 : f32
    %271 = vector.broadcast %cst_83 : f32 to vector<8x128xf32>
    %272 = arith.addf %271, %270 : vector<8x128xf32>
    %273 = arith.divf %271, %272 : vector<8x128xf32>
    %274 = vector.extract_strided_slice %261 {offsets = [0, 256], sizes = [8, 128], strides = [1, 1]} : vector<8x512xf32> to vector<8x128xf32>
    %275 = math.tanh %274 : vector<8x128xf32>
    %276 = vector.extract_strided_slice %261 {offsets = [0, 384], sizes = [8, 128], strides = [1, 1]} : vector<8x512xf32> to vector<8x128xf32>
    %277 = arith.negf %276 : vector<8x128xf32>
    %278 = math.exp %277 : vector<8x128xf32>
    %cst_84 = arith.constant 1.000000e+00 : f32
    %279 = vector.broadcast %cst_84 : f32 to vector<8x128xf32>
    %280 = arith.addf %279, %278 : vector<8x128xf32>
    %281 = arith.divf %279, %280 : vector<8x128xf32>
    %282 = arith.mulf %273, %215 : vector<8x128xf32>
    %283 = arith.mulf %267, %275 : vector<8x128xf32>
    %284 = arith.addf %282, %283 : vector<8x128xf32>
    %285 = math.tanh %284 : vector<8x128xf32>
    %286 = arith.mulf %281, %285 : vector<8x128xf32>
    %287 = arith.index_cast %c3_i32 : i32 to index
    %c0_85 = arith.constant 0 : index
    %c0_86 = arith.constant 0 : index
    %288 = vector.load %arg13[%287, %c0_85, %c0_86] : memref<8x8x128xf32, #tpu.memory_space<vmem>>, vector<1x8x128xf32>
    %289 = vector.shape_cast %288 : vector<1x8x128xf32> to vector<8x128xf32>
    %290 = vector.shape_cast %256 : vector<8x128xf32> to vector<1x8x128xf32>
    tpu.vector_store %arg13[%287, %c0_85, %c0_86], %290 {strides = array<i32>} : memref<8x8x128xf32, #tpu.memory_space<vmem>>, vector<1x8x128xf32>,
    %291 = arith.index_cast %226 : i32 to index
    %c0_87 = arith.constant 0 : index
    %c0_88 = arith.constant 0 : index
    %292 = vector.load %arg14[%291, %c0_87, %c0_88] : memref<8x8x128xf32, #tpu.memory_space<vmem>>, vector<1x8x128xf32>
    %293 = vector.shape_cast %292 : vector<1x8x128xf32> to vector<8x128xf32>
    %294 = vector.shape_cast %286 : vector<8x128xf32> to vector<1x8x128xf32>
    tpu.vector_store %arg14[%291, %c0_87, %c0_88], %294 {strides = array<i32>} : memref<8x8x128xf32, #tpu.memory_space<vmem>>, vector<1x8x128xf32>,
    %c4_i32 = arith.constant 4 : i32
    %c7_i32_89 = arith.constant 7 : i32
    %295 = arith.subi %c7_i32_89, %c4_i32 : i32
    %296 = arith.index_cast %c4_i32 : i32 to index
    %c0_90 = arith.constant 0 : index
    %c0_91 = arith.constant 0 : index
    %297 = vector.load %arg11[%296, %c0_90, %c0_91] : memref<8x8x512xf32, #tpu.memory_space<vmem>>, vector<1x8x512xf32>
    %298 = vector.shape_cast %297 : vector<1x8x512xf32> to vector<8x512xf32>
    %cst_92 = arith.constant dense<0.000000e+00> : vector<8x512xf32>
    %299 = tpu.matmul %256, %16, %cst_92 {dimension_numbers = #tpu.dot_dimension_numbers<[1], [0], [0], [1], [0, 0, 1, 1], [], []>} : vector<8x128xf32>, vector<128x512xf32>, vector<8x512xf32> -> vector<8x512xf32>
    %300 = arith.addf %298, %299 : vector<8x512xf32>
    %301 = vector.extract_strided_slice %300 {offsets = [0, 0], sizes = [8, 128], strides = [1, 1]} : vector<8x512xf32> to vector<8x128xf32>
    %302 = arith.negf %301 : vector<8x128xf32>
    %303 = math.exp %302 : vector<8x128xf32>
    %cst_93 = arith.constant 1.000000e+00 : f32
    %304 = vector.broadcast %cst_93 : f32 to vector<8x128xf32>
    %305 = arith.addf %304, %303 : vector<8x128xf32>
    %306 = arith.divf %304, %305 : vector<8x128xf32>
    %307 = vector.extract_strided_slice %300 {offsets = [0, 128], sizes = [8, 128], strides = [1, 1]} : vector<8x512xf32> to vector<8x128xf32>
    %308 = arith.negf %307 : vector<8x128xf32>
    %309 = math.exp %308 : vector<8x128xf32>
    %cst_94 = arith.constant 1.000000e+00 : f32
    %310 = vector.broadcast %cst_94 : f32 to vector<8x128xf32>
    %311 = arith.addf %310, %309 : vector<8x128xf32>
    %312 = arith.divf %310, %311 : vector<8x128xf32>
    %313 = vector.extract_strided_slice %300 {offsets = [0, 256], sizes = [8, 128], strides = [1, 1]} : vector<8x512xf32> to vector<8x128xf32>
    %314 = math.tanh %313 : vector<8x128xf32>
    %315 = vector.extract_strided_slice %300 {offsets = [0, 384], sizes = [8, 128], strides = [1, 1]} : vector<8x512xf32> to vector<8x128xf32>
    %316 = arith.negf %315 : vector<8x128xf32>
    %317 = math.exp %316 : vector<8x128xf32>
    %cst_95 = arith.constant 1.000000e+00 : f32
    %318 = vector.broadcast %cst_95 : f32 to vector<8x128xf32>
    %319 = arith.addf %318, %317 : vector<8x128xf32>
    %320 = arith.divf %318, %319 : vector<8x128xf32>
    %321 = arith.mulf %312, %254 : vector<8x128xf32>
    %322 = arith.mulf %306, %314 : vector<8x128xf32>
    %323 = arith.addf %321, %322 : vector<8x128xf32>
    %324 = math.tanh %323 : vector<8x128xf32>
    %325 = arith.mulf %320, %324 : vector<8x128xf32>
    %326 = arith.index_cast %295 : i32 to index
    %c0_96 = arith.constant 0 : index
    %c0_97 = arith.constant 0 : index
    %327 = vector.load %arg12[%326, %c0_96, %c0_97] : memref<8x8x512xf32, #tpu.memory_space<vmem>>, vector<1x8x512xf32>
    %328 = vector.shape_cast %327 : vector<1x8x512xf32> to vector<8x512xf32>
    %cst_98 = arith.constant dense<0.000000e+00> : vector<8x512xf32>
    %329 = tpu.matmul %286, %17, %cst_98 {dimension_numbers = #tpu.dot_dimension_numbers<[1], [0], [0], [1], [0, 0, 1, 1], [], []>} : vector<8x128xf32>, vector<128x512xf32>, vector<8x512xf32> -> vector<8x512xf32>
    %330 = arith.addf %328, %329 : vector<8x512xf32>
    %331 = vector.extract_strided_slice %330 {offsets = [0, 0], sizes = [8, 128], strides = [1, 1]} : vector<8x512xf32> to vector<8x128xf32>
    %332 = arith.negf %331 : vector<8x128xf32>
    %333 = math.exp %332 : vector<8x128xf32>
    %cst_99 = arith.constant 1.000000e+00 : f32
    %334 = vector.broadcast %cst_99 : f32 to vector<8x128xf32>
    %335 = arith.addf %334, %333 : vector<8x128xf32>
    %336 = arith.divf %334, %335 : vector<8x128xf32>
    %337 = vector.extract_strided_slice %330 {offsets = [0, 128], sizes = [8, 128], strides = [1, 1]} : vector<8x512xf32> to vector<8x128xf32>
    %338 = arith.negf %337 : vector<8x128xf32>
    %339 = math.exp %338 : vector<8x128xf32>
    %cst_100 = arith.constant 1.000000e+00 : f32
    %340 = vector.broadcast %cst_100 : f32 to vector<8x128xf32>
    %341 = arith.addf %340, %339 : vector<8x128xf32>
    %342 = arith.divf %340, %341 : vector<8x128xf32>
    %343 = vector.extract_strided_slice %330 {offsets = [0, 256], sizes = [8, 128], strides = [1, 1]} : vector<8x512xf32> to vector<8x128xf32>
    %344 = math.tanh %343 : vector<8x128xf32>
    %345 = vector.extract_strided_slice %330 {offsets = [0, 384], sizes = [8, 128], strides = [1, 1]} : vector<8x512xf32> to vector<8x128xf32>
    %346 = arith.negf %345 : vector<8x128xf32>
    %347 = math.exp %346 : vector<8x128xf32>
    %cst_101 = arith.constant 1.000000e+00 : f32
    %348 = vector.broadcast %cst_101 : f32 to vector<8x128xf32>
    %349 = arith.addf %348, %347 : vector<8x128xf32>
    %350 = arith.divf %348, %349 : vector<8x128xf32>
    %351 = arith.mulf %342, %284 : vector<8x128xf32>
    %352 = arith.mulf %336, %344 : vector<8x128xf32>
    %353 = arith.addf %351, %352 : vector<8x128xf32>
    %354 = math.tanh %353 : vector<8x128xf32>
    %355 = arith.mulf %350, %354 : vector<8x128xf32>
    %356 = arith.index_cast %c4_i32 : i32 to index
    %c0_102 = arith.constant 0 : index
    %c0_103 = arith.constant 0 : index
    %357 = vector.load %arg13[%356, %c0_102, %c0_103] : memref<8x8x128xf32, #tpu.memory_space<vmem>>, vector<1x8x128xf32>
    %358 = vector.shape_cast %357 : vector<1x8x128xf32> to vector<8x128xf32>
    %359 = vector.shape_cast %325 : vector<8x128xf32> to vector<1x8x128xf32>
    tpu.vector_store %arg13[%356, %c0_102, %c0_103], %359 {strides = array<i32>} : memref<8x8x128xf32, #tpu.memory_space<vmem>>, vector<1x8x128xf32>,
    %360 = arith.index_cast %295 : i32 to index
    %c0_104 = arith.constant 0 : index
    %c0_105 = arith.constant 0 : index
    %361 = vector.load %arg14[%360, %c0_104, %c0_105] : memref<8x8x128xf32, #tpu.memory_space<vmem>>, vector<1x8x128xf32>
    %362 = vector.shape_cast %361 : vector<1x8x128xf32> to vector<8x128xf32>
    %363 = vector.shape_cast %355 : vector<8x128xf32> to vector<1x8x128xf32>
    tpu.vector_store %arg14[%360, %c0_104, %c0_105], %363 {strides = array<i32>} : memref<8x8x128xf32, #tpu.memory_space<vmem>>, vector<1x8x128xf32>,
    %c5_i32 = arith.constant 5 : i32
    %c7_i32_106 = arith.constant 7 : i32
    %364 = arith.subi %c7_i32_106, %c5_i32 : i32
    %365 = arith.index_cast %c5_i32 : i32 to index
    %c0_107 = arith.constant 0 : index
    %c0_108 = arith.constant 0 : index
    %366 = vector.load %arg11[%365, %c0_107, %c0_108] : memref<8x8x512xf32, #tpu.memory_space<vmem>>, vector<1x8x512xf32>
    %367 = vector.shape_cast %366 : vector<1x8x512xf32> to vector<8x512xf32>
    %cst_109 = arith.constant dense<0.000000e+00> : vector<8x512xf32>
    %368 = tpu.matmul %325, %16, %cst_109 {dimension_numbers = #tpu.dot_dimension_numbers<[1], [0], [0], [1], [0, 0, 1, 1], [], []>} : vector<8x128xf32>, vector<128x512xf32>, vector<8x512xf32> -> vector<8x512xf32>
    %369 = arith.addf %367, %368 : vector<8x512xf32>
    %370 = vector.extract_strided_slice %369 {offsets = [0, 0], sizes = [8, 128], strides = [1, 1]} : vector<8x512xf32> to vector<8x128xf32>
    %371 = arith.negf %370 : vector<8x128xf32>
    %372 = math.exp %371 : vector<8x128xf32>
    %cst_110 = arith.constant 1.000000e+00 : f32
    %373 = vector.broadcast %cst_110 : f32 to vector<8x128xf32>
    %374 = arith.addf %373, %372 : vector<8x128xf32>
    %375 = arith.divf %373, %374 : vector<8x128xf32>
    %376 = vector.extract_strided_slice %369 {offsets = [0, 128], sizes = [8, 128], strides = [1, 1]} : vector<8x512xf32> to vector<8x128xf32>
    %377 = arith.negf %376 : vector<8x128xf32>
    %378 = math.exp %377 : vector<8x128xf32>
    %cst_111 = arith.constant 1.000000e+00 : f32
    %379 = vector.broadcast %cst_111 : f32 to vector<8x128xf32>
    %380 = arith.addf %379, %378 : vector<8x128xf32>
    %381 = arith.divf %379, %380 : vector<8x128xf32>
    %382 = vector.extract_strided_slice %369 {offsets = [0, 256], sizes = [8, 128], strides = [1, 1]} : vector<8x512xf32> to vector<8x128xf32>
    %383 = math.tanh %382 : vector<8x128xf32>
    %384 = vector.extract_strided_slice %369 {offsets = [0, 384], sizes = [8, 128], strides = [1, 1]} : vector<8x512xf32> to vector<8x128xf32>
    %385 = arith.negf %384 : vector<8x128xf32>
    %386 = math.exp %385 : vector<8x128xf32>
    %cst_112 = arith.constant 1.000000e+00 : f32
    %387 = vector.broadcast %cst_112 : f32 to vector<8x128xf32>
    %388 = arith.addf %387, %386 : vector<8x128xf32>
    %389 = arith.divf %387, %388 : vector<8x128xf32>
    %390 = arith.mulf %381, %323 : vector<8x128xf32>
    %391 = arith.mulf %375, %383 : vector<8x128xf32>
    %392 = arith.addf %390, %391 : vector<8x128xf32>
    %393 = math.tanh %392 : vector<8x128xf32>
    %394 = arith.mulf %389, %393 : vector<8x128xf32>
    %395 = arith.index_cast %364 : i32 to index
    %c0_113 = arith.constant 0 : index
    %c0_114 = arith.constant 0 : index
    %396 = vector.load %arg12[%395, %c0_113, %c0_114] : memref<8x8x512xf32, #tpu.memory_space<vmem>>, vector<1x8x512xf32>
    %397 = vector.shape_cast %396 : vector<1x8x512xf32> to vector<8x512xf32>
    %cst_115 = arith.constant dense<0.000000e+00> : vector<8x512xf32>
    %398 = tpu.matmul %355, %17, %cst_115 {dimension_numbers = #tpu.dot_dimension_numbers<[1], [0], [0], [1], [0, 0, 1, 1], [], []>} : vector<8x128xf32>, vector<128x512xf32>, vector<8x512xf32> -> vector<8x512xf32>
    %399 = arith.addf %397, %398 : vector<8x512xf32>
    %400 = vector.extract_strided_slice %399 {offsets = [0, 0], sizes = [8, 128], strides = [1, 1]} : vector<8x512xf32> to vector<8x128xf32>
    %401 = arith.negf %400 : vector<8x128xf32>
    %402 = math.exp %401 : vector<8x128xf32>
    %cst_116 = arith.constant 1.000000e+00 : f32
    %403 = vector.broadcast %cst_116 : f32 to vector<8x128xf32>
    %404 = arith.addf %403, %402 : vector<8x128xf32>
    %405 = arith.divf %403, %404 : vector<8x128xf32>
    %406 = vector.extract_strided_slice %399 {offsets = [0, 128], sizes = [8, 128], strides = [1, 1]} : vector<8x512xf32> to vector<8x128xf32>
    %407 = arith.negf %406 : vector<8x128xf32>
    %408 = math.exp %407 : vector<8x128xf32>
    %cst_117 = arith.constant 1.000000e+00 : f32
    %409 = vector.broadcast %cst_117 : f32 to vector<8x128xf32>
    %410 = arith.addf %409, %408 : vector<8x128xf32>
    %411 = arith.divf %409, %410 : vector<8x128xf32>
    %412 = vector.extract_strided_slice %399 {offsets = [0, 256], sizes = [8, 128], strides = [1, 1]} : vector<8x512xf32> to vector<8x128xf32>
    %413 = math.tanh %412 : vector<8x128xf32>
    %414 = vector.extract_strided_slice %399 {offsets = [0, 384], sizes = [8, 128], strides = [1, 1]} : vector<8x512xf32> to vector<8x128xf32>
    %415 = arith.negf %414 : vector<8x128xf32>
    %416 = math.exp %415 : vector<8x128xf32>
    %cst_118 = arith.constant 1.000000e+00 : f32
    %417 = vector.broadcast %cst_118 : f32 to vector<8x128xf32>
    %418 = arith.addf %417, %416 : vector<8x128xf32>
    %419 = arith.divf %417, %418 : vector<8x128xf32>
    %420 = arith.mulf %411, %353 : vector<8x128xf32>
    %421 = arith.mulf %405, %413 : vector<8x128xf32>
    %422 = arith.addf %420, %421 : vector<8x128xf32>
    %423 = math.tanh %422 : vector<8x128xf32>
    %424 = arith.mulf %419, %423 : vector<8x128xf32>
    %425 = arith.index_cast %c5_i32 : i32 to index
    %c0_119 = arith.constant 0 : index
    %c0_120 = arith.constant 0 : index
    %426 = vector.load %arg13[%425, %c0_119, %c0_120] : memref<8x8x128xf32, #tpu.memory_space<vmem>>, vector<1x8x128xf32>
    %427 = vector.shape_cast %426 : vector<1x8x128xf32> to vector<8x128xf32>
    %428 = vector.shape_cast %394 : vector<8x128xf32> to vector<1x8x128xf32>
    tpu.vector_store %arg13[%425, %c0_119, %c0_120], %428 {strides = array<i32>} : memref<8x8x128xf32, #tpu.memory_space<vmem>>, vector<1x8x128xf32>,
    %429 = arith.index_cast %364 : i32 to index
    %c0_121 = arith.constant 0 : index
    %c0_122 = arith.constant 0 : index
    %430 = vector.load %arg14[%429, %c0_121, %c0_122] : memref<8x8x128xf32, #tpu.memory_space<vmem>>, vector<1x8x128xf32>
    %431 = vector.shape_cast %430 : vector<1x8x128xf32> to vector<8x128xf32>
    %432 = vector.shape_cast %424 : vector<8x128xf32> to vector<1x8x128xf32>
    tpu.vector_store %arg14[%429, %c0_121, %c0_122], %432 {strides = array<i32>} : memref<8x8x128xf32, #tpu.memory_space<vmem>>, vector<1x8x128xf32>,
    %c6_i32 = arith.constant 6 : i32
    %c7_i32_123 = arith.constant 7 : i32
    %433 = arith.subi %c7_i32_123, %c6_i32 : i32
    %434 = arith.index_cast %c6_i32 : i32 to index
    %c0_124 = arith.constant 0 : index
    %c0_125 = arith.constant 0 : index
    %435 = vector.load %arg11[%434, %c0_124, %c0_125] : memref<8x8x512xf32, #tpu.memory_space<vmem>>, vector<1x8x512xf32>
    %436 = vector.shape_cast %435 : vector<1x8x512xf32> to vector<8x512xf32>
    %cst_126 = arith.constant dense<0.000000e+00> : vector<8x512xf32>
    %437 = tpu.matmul %394, %16, %cst_126 {dimension_numbers = #tpu.dot_dimension_numbers<[1], [0], [0], [1], [0, 0, 1, 1], [], []>} : vector<8x128xf32>, vector<128x512xf32>, vector<8x512xf32> -> vector<8x512xf32>
    %438 = arith.addf %436, %437 : vector<8x512xf32>
    %439 = vector.extract_strided_slice %438 {offsets = [0, 0], sizes = [8, 128], strides = [1, 1]} : vector<8x512xf32> to vector<8x128xf32>
    %440 = arith.negf %439 : vector<8x128xf32>
    %441 = math.exp %440 : vector<8x128xf32>
    %cst_127 = arith.constant 1.000000e+00 : f32
    %442 = vector.broadcast %cst_127 : f32 to vector<8x128xf32>
    %443 = arith.addf %442, %441 : vector<8x128xf32>
    %444 = arith.divf %442, %443 : vector<8x128xf32>
    %445 = vector.extract_strided_slice %438 {offsets = [0, 128], sizes = [8, 128], strides = [1, 1]} : vector<8x512xf32> to vector<8x128xf32>
    %446 = arith.negf %445 : vector<8x128xf32>
    %447 = math.exp %446 : vector<8x128xf32>
    %cst_128 = arith.constant 1.000000e+00 : f32
    %448 = vector.broadcast %cst_128 : f32 to vector<8x128xf32>
    %449 = arith.addf %448, %447 : vector<8x128xf32>
    %450 = arith.divf %448, %449 : vector<8x128xf32>
    %451 = vector.extract_strided_slice %438 {offsets = [0, 256], sizes = [8, 128], strides = [1, 1]} : vector<8x512xf32> to vector<8x128xf32>
    %452 = math.tanh %451 : vector<8x128xf32>
    %453 = vector.extract_strided_slice %438 {offsets = [0, 384], sizes = [8, 128], strides = [1, 1]} : vector<8x512xf32> to vector<8x128xf32>
    %454 = arith.negf %453 : vector<8x128xf32>
    %455 = math.exp %454 : vector<8x128xf32>
    %cst_129 = arith.constant 1.000000e+00 : f32
    %456 = vector.broadcast %cst_129 : f32 to vector<8x128xf32>
    %457 = arith.addf %456, %455 : vector<8x128xf32>
    %458 = arith.divf %456, %457 : vector<8x128xf32>
    %459 = arith.mulf %450, %392 : vector<8x128xf32>
    %460 = arith.mulf %444, %452 : vector<8x128xf32>
    %461 = arith.addf %459, %460 : vector<8x128xf32>
    %462 = math.tanh %461 : vector<8x128xf32>
    %463 = arith.mulf %458, %462 : vector<8x128xf32>
    %464 = arith.index_cast %433 : i32 to index
    %c0_130 = arith.constant 0 : index
    %c0_131 = arith.constant 0 : index
    %465 = vector.load %arg12[%464, %c0_130, %c0_131] : memref<8x8x512xf32, #tpu.memory_space<vmem>>, vector<1x8x512xf32>
    %466 = vector.shape_cast %465 : vector<1x8x512xf32> to vector<8x512xf32>
    %cst_132 = arith.constant dense<0.000000e+00> : vector<8x512xf32>
    %467 = tpu.matmul %424, %17, %cst_132 {dimension_numbers = #tpu.dot_dimension_numbers<[1], [0], [0], [1], [0, 0, 1, 1], [], []>} : vector<8x128xf32>, vector<128x512xf32>, vector<8x512xf32> -> vector<8x512xf32>
    %468 = arith.addf %466, %467 : vector<8x512xf32>
    %469 = vector.extract_strided_slice %468 {offsets = [0, 0], sizes = [8, 128], strides = [1, 1]} : vector<8x512xf32> to vector<8x128xf32>
    %470 = arith.negf %469 : vector<8x128xf32>
    %471 = math.exp %470 : vector<8x128xf32>
    %cst_133 = arith.constant 1.000000e+00 : f32
    %472 = vector.broadcast %cst_133 : f32 to vector<8x128xf32>
    %473 = arith.addf %472, %471 : vector<8x128xf32>
    %474 = arith.divf %472, %473 : vector<8x128xf32>
    %475 = vector.extract_strided_slice %468 {offsets = [0, 128], sizes = [8, 128], strides = [1, 1]} : vector<8x512xf32> to vector<8x128xf32>
    %476 = arith.negf %475 : vector<8x128xf32>
    %477 = math.exp %476 : vector<8x128xf32>
    %cst_134 = arith.constant 1.000000e+00 : f32
    %478 = vector.broadcast %cst_134 : f32 to vector<8x128xf32>
    %479 = arith.addf %478, %477 : vector<8x128xf32>
    %480 = arith.divf %478, %479 : vector<8x128xf32>
    %481 = vector.extract_strided_slice %468 {offsets = [0, 256], sizes = [8, 128], strides = [1, 1]} : vector<8x512xf32> to vector<8x128xf32>
    %482 = math.tanh %481 : vector<8x128xf32>
    %483 = vector.extract_strided_slice %468 {offsets = [0, 384], sizes = [8, 128], strides = [1, 1]} : vector<8x512xf32> to vector<8x128xf32>
    %484 = arith.negf %483 : vector<8x128xf32>
    %485 = math.exp %484 : vector<8x128xf32>
    %cst_135 = arith.constant 1.000000e+00 : f32
    %486 = vector.broadcast %cst_135 : f32 to vector<8x128xf32>
    %487 = arith.addf %486, %485 : vector<8x128xf32>
    %488 = arith.divf %486, %487 : vector<8x128xf32>
    %489 = arith.mulf %480, %422 : vector<8x128xf32>
    %490 = arith.mulf %474, %482 : vector<8x128xf32>
    %491 = arith.addf %489, %490 : vector<8x128xf32>
    %492 = math.tanh %491 : vector<8x128xf32>
    %493 = arith.mulf %488, %492 : vector<8x128xf32>
    %494 = arith.index_cast %c6_i32 : i32 to index
    %c0_136 = arith.constant 0 : index
    %c0_137 = arith.constant 0 : index
    %495 = vector.load %arg13[%494, %c0_136, %c0_137] : memref<8x8x128xf32, #tpu.memory_space<vmem>>, vector<1x8x128xf32>
    %496 = vector.shape_cast %495 : vector<1x8x128xf32> to vector<8x128xf32>
    %497 = vector.shape_cast %463 : vector<8x128xf32> to vector<1x8x128xf32>
    tpu.vector_store %arg13[%494, %c0_136, %c0_137], %497 {strides = array<i32>} : memref<8x8x128xf32, #tpu.memory_space<vmem>>, vector<1x8x128xf32>,
    %498 = arith.index_cast %433 : i32 to index
    %c0_138 = arith.constant 0 : index
    %c0_139 = arith.constant 0 : index
    %499 = vector.load %arg14[%498, %c0_138, %c0_139] : memref<8x8x128xf32, #tpu.memory_space<vmem>>, vector<1x8x128xf32>
    %500 = vector.shape_cast %499 : vector<1x8x128xf32> to vector<8x128xf32>
    %501 = vector.shape_cast %493 : vector<8x128xf32> to vector<1x8x128xf32>
    tpu.vector_store %arg14[%498, %c0_138, %c0_139], %501 {strides = array<i32>} : memref<8x8x128xf32, #tpu.memory_space<vmem>>, vector<1x8x128xf32>,
    %c7_i32_140 = arith.constant 7 : i32
    %c7_i32_141 = arith.constant 7 : i32
    %502 = arith.subi %c7_i32_141, %c7_i32_140 : i32
    %503 = arith.index_cast %c7_i32_140 : i32 to index
    %c0_142 = arith.constant 0 : index
    %c0_143 = arith.constant 0 : index
    %504 = vector.load %arg11[%503, %c0_142, %c0_143] : memref<8x8x512xf32, #tpu.memory_space<vmem>>, vector<1x8x512xf32>
    %505 = vector.shape_cast %504 : vector<1x8x512xf32> to vector<8x512xf32>
    %cst_144 = arith.constant dense<0.000000e+00> : vector<8x512xf32>
    %506 = tpu.matmul %463, %16, %cst_144 {dimension_numbers = #tpu.dot_dimension_numbers<[1], [0], [0], [1], [0, 0, 1, 1], [], []>} : vector<8x128xf32>, vector<128x512xf32>, vector<8x512xf32> -> vector<8x512xf32>
    %507 = arith.addf %505, %506 : vector<8x512xf32>
    %508 = vector.extract_strided_slice %507 {offsets = [0, 0], sizes = [8, 128], strides = [1, 1]} : vector<8x512xf32> to vector<8x128xf32>
    %509 = arith.negf %508 : vector<8x128xf32>
    %510 = math.exp %509 : vector<8x128xf32>
    %cst_145 = arith.constant 1.000000e+00 : f32
    %511 = vector.broadcast %cst_145 : f32 to vector<8x128xf32>
    %512 = arith.addf %511, %510 : vector<8x128xf32>
    %513 = arith.divf %511, %512 : vector<8x128xf32>
    %514 = vector.extract_strided_slice %507 {offsets = [0, 128], sizes = [8, 128], strides = [1, 1]} : vector<8x512xf32> to vector<8x128xf32>
    %515 = arith.negf %514 : vector<8x128xf32>
    %516 = math.exp %515 : vector<8x128xf32>
    %cst_146 = arith.constant 1.000000e+00 : f32
    %517 = vector.broadcast %cst_146 : f32 to vector<8x128xf32>
    %518 = arith.addf %517, %516 : vector<8x128xf32>
    %519 = arith.divf %517, %518 : vector<8x128xf32>
    %520 = vector.extract_strided_slice %507 {offsets = [0, 256], sizes = [8, 128], strides = [1, 1]} : vector<8x512xf32> to vector<8x128xf32>
    %521 = math.tanh %520 : vector<8x128xf32>
    %522 = vector.extract_strided_slice %507 {offsets = [0, 384], sizes = [8, 128], strides = [1, 1]} : vector<8x512xf32> to vector<8x128xf32>
    %523 = arith.negf %522 : vector<8x128xf32>
    %524 = math.exp %523 : vector<8x128xf32>
    %cst_147 = arith.constant 1.000000e+00 : f32
    %525 = vector.broadcast %cst_147 : f32 to vector<8x128xf32>
    %526 = arith.addf %525, %524 : vector<8x128xf32>
    %527 = arith.divf %525, %526 : vector<8x128xf32>
    %528 = arith.mulf %519, %461 : vector<8x128xf32>
    %529 = arith.mulf %513, %521 : vector<8x128xf32>
    %530 = arith.addf %528, %529 : vector<8x128xf32>
    %531 = math.tanh %530 : vector<8x128xf32>
    %532 = arith.mulf %527, %531 : vector<8x128xf32>
    %533 = arith.index_cast %502 : i32 to index
    %c0_148 = arith.constant 0 : index
    %c0_149 = arith.constant 0 : index
    %534 = vector.load %arg12[%533, %c0_148, %c0_149] : memref<8x8x512xf32, #tpu.memory_space<vmem>>, vector<1x8x512xf32>
    %535 = vector.shape_cast %534 : vector<1x8x512xf32> to vector<8x512xf32>
    %cst_150 = arith.constant dense<0.000000e+00> : vector<8x512xf32>
    %536 = tpu.matmul %493, %17, %cst_150 {dimension_numbers = #tpu.dot_dimension_numbers<[1], [0], [0], [1], [0, 0, 1, 1], [], []>} : vector<8x128xf32>, vector<128x512xf32>, vector<8x512xf32> -> vector<8x512xf32>
    %537 = arith.addf %535, %536 : vector<8x512xf32>
    %538 = vector.extract_strided_slice %537 {offsets = [0, 0], sizes = [8, 128], strides = [1, 1]} : vector<8x512xf32> to vector<8x128xf32>
    %539 = arith.negf %538 : vector<8x128xf32>
    %540 = math.exp %539 : vector<8x128xf32>
    %cst_151 = arith.constant 1.000000e+00 : f32
    %541 = vector.broadcast %cst_151 : f32 to vector<8x128xf32>
    %542 = arith.addf %541, %540 : vector<8x128xf32>
    %543 = arith.divf %541, %542 : vector<8x128xf32>
    %544 = vector.extract_strided_slice %537 {offsets = [0, 128], sizes = [8, 128], strides = [1, 1]} : vector<8x512xf32> to vector<8x128xf32>
    %545 = arith.negf %544 : vector<8x128xf32>
    %546 = math.exp %545 : vector<8x128xf32>
    %cst_152 = arith.constant 1.000000e+00 : f32
    %547 = vector.broadcast %cst_152 : f32 to vector<8x128xf32>
    %548 = arith.addf %547, %546 : vector<8x128xf32>
    %549 = arith.divf %547, %548 : vector<8x128xf32>
    %550 = vector.extract_strided_slice %537 {offsets = [0, 256], sizes = [8, 128], strides = [1, 1]} : vector<8x512xf32> to vector<8x128xf32>
    %551 = math.tanh %550 : vector<8x128xf32>
    %552 = vector.extract_strided_slice %537 {offsets = [0, 384], sizes = [8, 128], strides = [1, 1]} : vector<8x512xf32> to vector<8x128xf32>
    %553 = arith.negf %552 : vector<8x128xf32>
    %554 = math.exp %553 : vector<8x128xf32>
    %cst_153 = arith.constant 1.000000e+00 : f32
    %555 = vector.broadcast %cst_153 : f32 to vector<8x128xf32>
    %556 = arith.addf %555, %554 : vector<8x128xf32>
    %557 = arith.divf %555, %556 : vector<8x128xf32>
    %558 = arith.mulf %549, %491 : vector<8x128xf32>
    %559 = arith.mulf %543, %551 : vector<8x128xf32>
    %560 = arith.addf %558, %559 : vector<8x128xf32>
    %561 = math.tanh %560 : vector<8x128xf32>
    %562 = arith.mulf %557, %561 : vector<8x128xf32>
    %563 = arith.index_cast %c7_i32_140 : i32 to index
    %c0_154 = arith.constant 0 : index
    %c0_155 = arith.constant 0 : index
    %564 = vector.load %arg13[%563, %c0_154, %c0_155] : memref<8x8x128xf32, #tpu.memory_space<vmem>>, vector<1x8x128xf32>
    %565 = vector.shape_cast %564 : vector<1x8x128xf32> to vector<8x128xf32>
    %566 = vector.shape_cast %532 : vector<8x128xf32> to vector<1x8x128xf32>
    tpu.vector_store %arg13[%563, %c0_154, %c0_155], %566 {strides = array<i32>} : memref<8x8x128xf32, #tpu.memory_space<vmem>>, vector<1x8x128xf32>,
    %567 = arith.index_cast %502 : i32 to index
    %c0_156 = arith.constant 0 : index
    %c0_157 = arith.constant 0 : index
    %568 = vector.load %arg14[%567, %c0_156, %c0_157] : memref<8x8x128xf32, #tpu.memory_space<vmem>>, vector<1x8x128xf32>
    %569 = vector.shape_cast %568 : vector<1x8x128xf32> to vector<8x128xf32>
    %570 = vector.shape_cast %562 : vector<8x128xf32> to vector<1x8x128xf32>
    tpu.vector_store %arg14[%567, %c0_156, %c0_157], %570 {strides = array<i32>} : memref<8x8x128xf32, #tpu.memory_space<vmem>>, vector<1x8x128xf32>,
    %c8_i32 = arith.constant 8 : i32
    %c0_158 = arith.constant 0 : index
    %c0_159 = arith.constant 0 : index
    %c0_160 = arith.constant 0 : index
    %571 = vector.load %arg13[%c0_158, %c0_159, %c0_160] : memref<8x8x128xf32, #tpu.memory_space<vmem>>, vector<8x8x128xf32>
    %572 = vector.shape_cast %571 : vector<8x8x128xf32> to vector<64x128xf32>
    %c0_161 = arith.constant 0 : index
    %c0_162 = arith.constant 0 : index
    %c0_163 = arith.constant 0 : index
    %573 = vector.load %arg14[%c0_161, %c0_162, %c0_163] : memref<8x8x128xf32, #tpu.memory_space<vmem>>, vector<8x8x128xf32>
    %574 = vector.shape_cast %573 : vector<8x8x128xf32> to vector<64x128xf32>
    %c0_164 = arith.constant 0 : index
    %c0_165 = arith.constant 0 : index
    %575 = vector.load %arg7[%c0_164, %c0_165] : memref<128x128xf32, #tpu.memory_space<vmem>>, vector<128x128xf32>
    %cst_166 = arith.constant dense<0.000000e+00> : vector<64x128xf32>
    %576 = tpu.matmul %572, %575, %cst_166 {dimension_numbers = #tpu.dot_dimension_numbers<[1], [0], [0], [1], [0, 0, 1, 1], [], []>} : vector<64x128xf32>, vector<128x128xf32>, vector<64x128xf32> -> vector<64x128xf32>
    %c0_167 = arith.constant 0 : index
    %c0_168 = arith.constant 0 : index
    %577 = vector.load %arg8[%c0_167, %c0_168] : memref<128x128xf32, #tpu.memory_space<vmem>>, vector<128x128xf32>
    %cst_169 = arith.constant dense<0.000000e+00> : vector<64x128xf32>
    %578 = tpu.matmul %574, %577, %cst_169 {dimension_numbers = #tpu.dot_dimension_numbers<[1], [0], [0], [1], [0, 0, 1, 1], [], []>} : vector<64x128xf32>, vector<128x128xf32>, vector<64x128xf32> -> vector<64x128xf32>
    %579 = arith.addf %576, %578 : vector<64x128xf32>
    %c0_170 = arith.constant 0 : index
    %c0_171 = arith.constant 0 : index
    %580 = vector.load %arg9[%c0_170, %c0_171] : memref<1x128xf32, #tpu.memory_space<vmem>>, vector<1x128xf32>
    %581 = vector.broadcast %580 : vector<1x128xf32> to vector<64x128xf32>
    %582 = arith.addf %579, %581 : vector<64x128xf32>
    %583 = vector.shape_cast %582 : vector<64x128xf32> to vector<8x8x128xf32>
    %c0_172 = arith.constant 0 : index
    %c0_173 = arith.constant 0 : index
    %c0_174 = arith.constant 0 : index
    %584 = vector.load %arg10[%c0_172, %c0_173, %c0_174] : memref<8x8x128xf32, #tpu.memory_space<vmem>>, vector<8x8x128xf32>
    tpu.vector_store %arg10[%c0_172, %c0_173, %c0_174], %583 {strides = array<i32>} : memref<8x8x128xf32, #tpu.memory_space<vmem>>, vector<8x8x128xf32>,
    return
  }
}

</mosaic_0001>

<llo_original>
// kernel: forward.1
$region0: #{forward.1}
  #allocation0 [shape = 'u32[]', space=smem, size = 0x4, offset = 0x4, fixed_abs, tag = 'smem constant byte address 0x4 - core index']
  #allocation1 [shape = 'u32[72,128]{1,0:T(1,128)}', space=vmem, size = 0x9000, scoped, tag = 'internal scratch']
  #allocation2 [shape = 'f32[8,8,512]{2,1,0:T(8,128)}', space=vmem, size = 0x20000, scoped, tag = 'scratch operand']
  #allocation3 [shape = 'f32[8,8,512]{2,1,0:T(8,128)}', space=vmem, size = 0x20000, scoped, tag = 'scratch operand']
  #allocation4 [shape = 'f32[8,8,128]{2,1,0:T(8,128)}', space=vmem, size = 0x8000, scoped, tag = 'scratch operand']
  #allocation5 [shape = 'f32[8,8,128]{2,1,0:T(8,128)}', space=vmem, size = 0x8000, scoped, tag = 'scratch operand']
  %s0 = inlined_call_operand.vmem [shape: f32[8,8,128], index: 0, kind: input, shape index: {}]
  %s1 = inlined_call_operand.vmem [shape: f32[128,512], index: 1, kind: input, shape index: {}]
  %s2 = inlined_call_operand.vmem [shape: f32[128,512], index: 2, kind: input, shape index: {}]
  %s3 = inlined_call_operand.vmem [shape: f32[1,512], index: 3, kind: input, shape index: {}]
  %s4 = inlined_call_operand.vmem [shape: f32[128,512], index: 4, kind: input, shape index: {}]
  %s5 = inlined_call_operand.vmem [shape: f32[128,512], index: 5, kind: input, shape index: {}]
  %s6 = inlined_call_operand.vmem [shape: f32[1,512], index: 6, kind: input, shape index: {}]
  %s7 = inlined_call_operand.vmem [shape: f32[128,128], index: 7, kind: input, shape index: {}]
  %s8 = inlined_call_operand.vmem [shape: f32[128,128], index: 8, kind: input, shape index: {}]
  %s9 = inlined_call_operand.vmem [shape: f32[1,128], index: 9, kind: input, shape index: {}]
  %s10 = inlined_call_operand.vmem [shape: f32[8,8,128], index: 10, kind: output, shape index: {}]
  %s11 = sld [smem:[#allocation0]]
  $region50: #{forward.1} parent=0
    _
  %s13 = ssub.s32 1, %s11
  %s14 = scalar_select 0, %s13, %s11
  // Predicated region
  $region2: #{forward.1} parent=0 // pred_check
    _
  $region3: #{forward.1} parent=0 // pred_check_branch
    %16 = sbr.rel (0) target = $region5
  $region4: #{forward.1} parent=0 // pred_region
    _
  $region5: #{forward.1} parent=0 // pred_fallthru
    _
  // Predicated region
  $region6: #{forward.1} parent=0 // pred_check
    _
  $region7: #{forward.1} parent=0 // pred_check_branch
    %18 = sbr.rel (0) target = $region9
  $region8: #{forward.1} parent=0 // pred_region
    _
  $region9: #{forward.1} parent=0 // pred_fallthru
    _
  // Predicated region
  $region10: #{forward.1} parent=0 // pred_check
    _
  $region11: #{forward.1} parent=0 // pred_check_branch
    %20 = sbr.rel (0) target = $region13
  $region12: #{forward.1} parent=0 // pred_region
    _
  $region13: #{forward.1} parent=0 // pred_fallthru
    _
  // Predicated region
  $region14: #{forward.1} parent=0 // pred_check
    _
  $region15: #{forward.1} parent=0 // pred_check_branch
    %22 = sbr.rel (0) target = $region17
  $region16: #{forward.1} parent=0 // pred_region
    _
  $region17: #{forward.1} parent=0 // pred_fallthru
    _
  // Predicated region
  $region18: #{forward.1} parent=0 // pred_check
    _
  $region19: #{forward.1} parent=0 // pred_check_branch
    %24 = sbr.rel (0) target = $region21
  $region20: #{forward.1} parent=0 // pred_region
    _
  $region21: #{forward.1} parent=0 // pred_fallthru
    _
  // Predicated region
  $region22: #{forward.1} parent=0 // pred_check
    _
  $region23: #{forward.1} parent=0 // pred_check_branch
    %26 = sbr.rel (0) target = $region25
  $region24: #{forward.1} parent=0 // pred_region
    _
  $region25: #{forward.1} parent=0 // pred_fallthru
    _
  // Predicated region
  $region26: #{forward.1} parent=0 // pred_check
    _
  $region27: #{forward.1} parent=0 // pred_check_branch
    %28 = sbr.rel (0) target = $region29
  $region28: #{forward.1} parent=0 // pred_region
    _
  $region29: #{forward.1} parent=0 // pred_fallthru
    _
  // Predicated region
  $region30: #{forward.1} parent=0 // pred_check
    _
  $region31: #{forward.1} parent=0 // pred_check_branch
    %30 = sbr.rel (0) target = $region33
  $region32: #{forward.1} parent=0 // pred_region
    _
  $region33: #{forward.1} parent=0 // pred_fallthru
    _
  // Predicated region
  $region34: #{forward.1} parent=0 // pred_check
    _
  $region35: #{forward.1} parent=0 // pred_check_branch
    %32 = sbr.rel (0) target = $region37
  $region36: #{forward.1} parent=0 // pred_region
    _
  $region37: #{forward.1} parent=0 // pred_fallthru
    _
  // Predicated region
  $region38: #{forward.1} parent=0 // pred_check
    _
  $region39: #{forward.1} parent=0 // pred_check_branch
    %34 = sbr.rel (0) target = $region41
  $region40: #{forward.1} parent=0 // pred_region
    _
  $region41: #{forward.1} parent=0 // pred_fallthru
    _
  %v35 = vld [vmem:[%s0] sm:$0xff]
  %v36 = vld [vmem:[%s0 + $0x8] sm:$0xff]
  %v37 = vld [vmem:[%s0 + $0x10] sm:$0xff]
  %v38 = vld [vmem:[%s0 + $0x18] sm:$0xff]
  %v39 = vld [vmem:[%s0 + $0x20] sm:$0xff]
  %v40 = vld [vmem:[%s0 + $0x28] sm:$0xff]
  %v41 = vld [vmem:[%s0 + $0x30] sm:$0xff]
  %v42 = vld [vmem:[%s0 + $0x38] sm:$0xff]
  %v43 = vld [vmem:[%s1] sm:$0xff]
  %v44 = vld [vmem:[%s1 + $0x8] sm:$0xff]
  %v45 = vld [vmem:[%s1 + $0x10] sm:$0xff]
  %v46 = vld [vmem:[%s1 + $0x18] sm:$0xff]
  %v47 = vld [vmem:[%s1 + $0x20] sm:$0xff]
  %v48 = vld [vmem:[%s1 + $0x28] sm:$0xff]
  %v49 = vld [vmem:[%s1 + $0x30] sm:$0xff]
  %v50 = vld [vmem:[%s1 + $0x38] sm:$0xff]
  %v51 = vld [vmem:[%s1 + $0x40] sm:$0xff]
  %v52 = vld [vmem:[%s1 + $0x48] sm:$0xff]
  %v53 = vld [vmem:[%s1 + $0x50] sm:$0xff]
  %v54 = vld [vmem:[%s1 + $0x58] sm:$0xff]
  %v55 = vld [vmem:[%s1 + $0x60] sm:$0xff]
  %v56 = vld [vmem:[%s1 + $0x68] sm:$0xff]
  %v57 = vld [vmem:[%s1 + $0x70] sm:$0xff]
  %v58 = vld [vmem:[%s1 + $0x78] sm:$0xff]
  %v59 = vld [vmem:[%s1 + $0x80] sm:$0xff]
  %v60 = vld [vmem:[%s1 + $0x88] sm:$0xff]
  %v61 = vld [vmem:[%s1 + $0x90] sm:$0xff]
  %v62 = vld [vmem:[%s1 + $0x98] sm:$0xff]
  %v63 = vld [vmem:[%s1 + $0xa0] sm:$0xff]
  %v64 = vld [vmem:[%s1 + $0xa8] sm:$0xff]
  %v65 = vld [vmem:[%s1 + $0xb0] sm:$0xff]
  %v66 = vld [vmem:[%s1 + $0xb8] sm:$0xff]
  %v67 = vld [vmem:[%s1 + $0xc0] sm:$0xff]
  %v68 = vld [vmem:[%s1 + $0xc8] sm:$0xff]
  %v69 = vld [vmem:[%s1 + $0xd0] sm:$0xff]
  %v70 = vld [vmem:[%s1 + $0xd8] sm:$0xff]
  %v71 = vld [vmem:[%s1 + $0xe0] sm:$0xff]
  %v72 = vld [vmem:[%s1 + $0xe8] sm:$0xff]
  %v73 = vld [vmem:[%s1 + $0xf0] sm:$0xff]
  %v74 = vld [vmem:[%s1 + $0xf8] sm:$0xff]
  %v75 = vld [vmem:[%s1 + $0x100] sm:$0xff]
  %v76 = vld [vmem:[%s1 + $0x108] sm:$0xff]
  %v77 = vld [vmem:[%s1 + $0x110] sm:$0xff]
  %v78 = vld [vmem:[%s1 + $0x118] sm:$0xff]
  %v79 = vld [vmem:[%s1 + $0x120] sm:$0xff]
  %v80 = vld [vmem:[%s1 + $0x128] sm:$0xff]
  %v81 = vld [vmem:[%s1 + $0x130] sm:$0xff]
  %v82 = vld [vmem:[%s1 + $0x138] sm:$0xff]
  %v83 = vld [vmem:[%s1 + $0x140] sm:$0xff]
  %v84 = vld [vmem:[%s1 + $0x148] sm:$0xff]
  %v85 = vld [vmem:[%s1 + $0x150] sm:$0xff]
  %v86 = vld [vmem:[%s1 + $0x158] sm:$0xff]
  %v87 = vld [vmem:[%s1 + $0x160] sm:$0xff]
  %v88 = vld [vmem:[%s1 + $0x168] sm:$0xff]
  %v89 = vld [vmem:[%s1 + $0x170] sm:$0xff]
  %v90 = vld [vmem:[%s1 + $0x178] sm:$0xff]
  %v91 = vld [vmem:[%s1 + $0x180] sm:$0xff]
  %v92 = vld [vmem:[%s1 + $0x188] sm:$0xff]
  %v93 = vld [vmem:[%s1 + $0x190] sm:$0xff]
  %v94 = vld [vmem:[%s1 + $0x198] sm:$0xff]
  %v95 = vld [vmem:[%s1 + $0x1a0] sm:$0xff]
  %v96 = vld [vmem:[%s1 + $0x1a8] sm:$0xff]
  %v97 = vld [vmem:[%s1 + $0x1b0] sm:$0xff]
  %v98 = vld [vmem:[%s1 + $0x1b8] sm:$0xff]
  %v99 = vld [vmem:[%s1 + $0x1c0] sm:$0xff]
  %v100 = vld [vmem:[%s1 + $0x1c8] sm:$0xff]
  %v101 = vld [vmem:[%s1 + $0x1d0] sm:$0xff]
  %v102 = vld [vmem:[%s1 + $0x1d8] sm:$0xff]
  %v103 = vld [vmem:[%s1 + $0x1e0] sm:$0xff]
  %v104 = vld [vmem:[%s1 + $0x1e8] sm:$0xff]
  %v105 = vld [vmem:[%s1 + $0x1f0] sm:$0xff]
  %v106 = vld [vmem:[%s1 + $0x1f8] sm:$0xff]
  %v107 = vld [vmem:[%s3] sm:$0xf]
  %v109 = vperm.slane %v107, 0
  %v110 = vperm.slane %v107, 1
  %v111 = vperm.slane %v107, 2
  %v112 = vperm.slane %v107, 3
  %117 = vmatpush.msra.mxu0 %v103
  %118 = vmatpush.msra.mxu0 %v99
  %119 = vmatpush.msra.mxu0 %v95
  %120 = vmatpush.msra.mxu0 %v91
  %121 = vmatpush.msra.mxu0 %v87
  %122 = vmatpush.msra.mxu0 %v83
  %123 = vmatpush.msra.mxu0 %v79
  %124 = vmatpush.msra.mxu0 %v75
  %125 = vmatpush.msra.mxu0 %v71
  %126 = vmatpush.msra.mxu0 %v67
  %127 = vmatpush.msra.mxu0 %v63
  %128 = vmatpush.msra.mxu0 %v59
  %129 = vmatpush.msra.mxu0 %v55
  %130 = vmatpush.msra.mxu0 %v51
  %131 = vmatpush.msra.mxu0 %v47
  %132 = vmatpush.msra.mxu0 %v43
  %133 = vmatmul.f32.gmra.mxu0 %v35
  %v134 = vpop.f32.mrf.mxu0
  %v135 = vadd.f32 %v109, %v134
  %136 = vmatmul.f32.gmra.mxu0 %v36
  %v137 = vpop.f32.mrf.mxu0
  %v138 = vadd.f32 %v109, %v137
  %139 = vmatmul.f32.gmra.mxu0 %v37
  %v140 = vpop.f32.mrf.mxu0
  %v141 = vadd.f32 %v109, %v140
  %142 = vmatmul.f32.gmra.mxu0 %v38
  %v143 = vpop.f32.mrf.mxu0
  %v144 = vadd.f32 %v109, %v143
  %145 = vmatmul.f32.gmra.mxu0 %v39
  %v146 = vpop.f32.mrf.mxu0
  %v147 = vadd.f32 %v109, %v146
  %148 = vmatmul.f32.gmra.mxu0 %v40
  %v149 = vpop.f32.mrf.mxu0
  %v150 = vadd.f32 %v109, %v149
  %151 = vmatmul.f32.gmra.mxu0 %v41
  %v152 = vpop.f32.mrf.mxu0
  %v153 = vadd.f32 %v109, %v152
  %154 = vmatmul.f32.gmra.mxu0 %v42
  %v155 = vpop.f32.mrf.mxu0
  %v156 = vadd.f32 %v109, %v155
  %157 = vdwg.mxu0
  %158 = vmatpush.msra.mxu0 %v104
  %159 = vmatpush.msra.mxu0 %v100
  %160 = vmatpush.msra.mxu0 %v96
  %161 = vmatpush.msra.mxu0 %v92
  %162 = vmatpush.msra.mxu0 %v88
  %163 = vmatpush.msra.mxu0 %v84
  %164 = vmatpush.msra.mxu0 %v80
  %165 = vmatpush.msra.mxu0 %v76
  %166 = vmatpush.msra.mxu0 %v72
  %167 = vmatpush.msra.mxu0 %v68
  %168 = vmatpush.msra.mxu0 %v64
  %169 = vmatpush.msra.mxu0 %v60
  %170 = vmatpush.msra.mxu0 %v56
  %171 = vmatpush.msra.mxu0 %v52
  %172 = vmatpush.msra.mxu0 %v48
  %173 = vmatpush.msra.mxu0 %v44
  %174 = vmatmul.f32.gmra.mxu0 %v35
  %v175 = vpop.f32.mrf.mxu0
  %v176 = vadd.f32 %v110, %v175
  %177 = vmatmul.f32.gmra.mxu0 %v36
  %v178 = vpop.f32.mrf.mxu0
  %v179 = vadd.f32 %v110, %v178
  %180 = vmatmul.f32.gmra.mxu0 %v37
  %v181 = vpop.f32.mrf.mxu0
  %v182 = vadd.f32 %v110, %v181
  %183 = vmatmul.f32.gmra.mxu0 %v38
  %v184 = vpop.f32.mrf.mxu0
  %v185 = vadd.f32 %v110, %v184
  %186 = vmatmul.f32.gmra.mxu0 %v39
  %v187 = vpop.f32.mrf.mxu0
  %v188 = vadd.f32 %v110, %v187
  %189 = vmatmul.f32.gmra.mxu0 %v40
  %v190 = vpop.f32.mrf.mxu0
  %v191 = vadd.f32 %v110, %v190
  %192 = vmatmul.f32.gmra.mxu0 %v41
  %v193 = vpop.f32.mrf.mxu0
  %v194 = vadd.f32 %v110, %v193
  %195 = vmatmul.f32.gmra.mxu0 %v42
  %v196 = vpop.f32.mrf.mxu0
  %v197 = vadd.f32 %v110, %v196
  %198 = vdwg.mxu0
  %199 = vmatpush.msra.mxu0 %v105
  %200 = vmatpush.msra.mxu0 %v101
  %201 = vmatpush.msra.mxu0 %v97
  %202 = vmatpush.msra.mxu0 %v93
  %203 = vmatpush.msra.mxu0 %v89
  %204 = vmatpush.msra.mxu0 %v85
  %205 = vmatpush.msra.mxu0 %v81
  %206 = vmatpush.msra.mxu0 %v77
  %207 = vmatpush.msra.mxu0 %v73
  %208 = vmatpush.msra.mxu0 %v69
  %209 = vmatpush.msra.mxu0 %v65
  %210 = vmatpush.msra.mxu0 %v61
  %211 = vmatpush.msra.mxu0 %v57
  %212 = vmatpush.msra.mxu0 %v53
  %213 = vmatpush.msra.mxu0 %v49
  %214 = vmatpush.msra.mxu0 %v45
  %215 = vmatmul.f32.gmra.mxu0 %v35
  %v216 = vpop.f32.mrf.mxu0
  %v217 = vadd.f32 %v111, %v216
  %218 = vmatmul.f32.gmra.mxu0 %v36
  %v219 = vpop.f32.mrf.mxu0
  %v220 = vadd.f32 %v111, %v219
  %221 = vmatmul.f32.gmra.mxu0 %v37
  %v222 = vpop.f32.mrf.mxu0
  %v223 = vadd.f32 %v111, %v222
  %224 = vmatmul.f32.gmra.mxu0 %v38
  %v225 = vpop.f32.mrf.mxu0
  %v226 = vadd.f32 %v111, %v225
  %227 = vmatmul.f32.gmra.mxu0 %v39
  %v228 = vpop.f32.mrf.mxu0
  %v229 = vadd.f32 %v111, %v228
  %230 = vmatmul.f32.gmra.mxu0 %v40
  %v231 = vpop.f32.mrf.mxu0
  %v232 = vadd.f32 %v111, %v231
  %233 = vmatmul.f32.gmra.mxu0 %v41
  %v234 = vpop.f32.mrf.mxu0
  %v235 = vadd.f32 %v111, %v234
  %236 = vmatmul.f32.gmra.mxu0 %v42
  %v237 = vpop.f32.mrf.mxu0
  %v238 = vadd.f32 %v111, %v237
  %239 = vdwg.mxu0
  %240 = vmatpush.msra.mxu0 %v106
  %241 = vmatpush.msra.mxu0 %v102
  %242 = vmatpush.msra.mxu0 %v98
  %243 = vmatpush.msra.mxu0 %v94
  %244 = vmatpush.msra.mxu0 %v90
  %245 = vmatpush.msra.mxu0 %v86
  %246 = vmatpush.msra.mxu0 %v82
  %247 = vmatpush.msra.mxu0 %v78
  %248 = vmatpush.msra.mxu0 %v74
  %249 = vmatpush.msra.mxu0 %v70
  %250 = vmatpush.msra.mxu0 %v66
  %251 = vmatpush.msra.mxu0 %v62
  %252 = vmatpush.msra.mxu0 %v58
  %253 = vmatpush.msra.mxu0 %v54
  %254 = vmatpush.msra.mxu0 %v50
  %255 = vmatpush.msra.mxu0 %v46
  %256 = vmatmul.f32.gmra.mxu0 %v35
  %v257 = vpop.f32.mrf.mxu0
  %v258 = vadd.f32 %v112, %v257
  %259 = vmatmul.f32.gmra.mxu0 %v36
  %v260 = vpop.f32.mrf.mxu0
  %v261 = vadd.f32 %v112, %v260
  %262 = vmatmul.f32.gmra.mxu0 %v37
  %v263 = vpop.f32.mrf.mxu0
  %v264 = vadd.f32 %v112, %v263
  %265 = vmatmul.f32.gmra.mxu0 %v38
  %v266 = vpop.f32.mrf.mxu0
  %v267 = vadd.f32 %v112, %v266
  %268 = vmatmul.f32.gmra.mxu0 %v39
  %v269 = vpop.f32.mrf.mxu0
  %v270 = vadd.f32 %v112, %v269
  %271 = vmatmul.f32.gmra.mxu0 %v40
  %v272 = vpop.f32.mrf.mxu0
  %v273 = vadd.f32 %v112, %v272
  %274 = vmatmul.f32.gmra.mxu0 %v41
  %v275 = vpop.f32.mrf.mxu0
  %v276 = vadd.f32 %v112, %v275
  %277 = vmatmul.f32.gmra.mxu0 %v42
  %v278 = vpop.f32.mrf.mxu0
  %v279 = vadd.f32 %v112, %v278
  %280 = vdwg.mxu0
  %281 = vst [vmem:[#allocation2] sm:$0xff] %v135
  %282 = vst [vmem:[#allocation2 + $0x8] sm:$0xff] %v176
  %283 = vst [vmem:[#allocation2 + $0x10] sm:$0xff] %v217
  %284 = vst [vmem:[#allocation2 + $0x18] sm:$0xff] %v258
  %285 = vst [vmem:[#allocation2 + $0x20] sm:$0xff] %v138
  %286 = vst [vmem:[#allocation2 + $0x28] sm:$0xff] %v179
  %287 = vst [vmem:[#allocation2 + $0x30] sm:$0xff] %v220
  %288 = vst [vmem:[#allocation2 + $0x38] sm:$0xff] %v261
  %289 = vst [vmem:[#allocation2 + $0x40] sm:$0xff] %v141
  %290 = vst [vmem:[#allocation2 + $0x48] sm:$0xff] %v182
  %291 = vst [vmem:[#allocation2 + $0x50] sm:$0xff] %v223
  %292 = vst [vmem:[#allocation2 + $0x58] sm:$0xff] %v264
  %293 = vst [vmem:[#allocation2 + $0x60] sm:$0xff] %v144
  %294 = vst [vmem:[#allocation2 + $0x68] sm:$0xff] %v185
  %295 = vst [vmem:[#allocation2 + $0x70] sm:$0xff] %v226
  %296 = vst [vmem:[#allocation2 + $0x78] sm:$0xff] %v267
  %297 = vst [vmem:[#allocation2 + $0x80] sm:$0xff] %v147
  %298 = vst [vmem:[#allocation2 + $0x88] sm:$0xff] %v188
  %299 = vst [vmem:[#allocation2 + $0x90] sm:$0xff] %v229
  %300 = vst [vmem:[#allocation2 + $0x98] sm:$0xff] %v270
  %301 = vst [vmem:[#allocation2 + $0xa0] sm:$0xff] %v150
  %302 = vst [vmem:[#allocation2 + $0xa8] sm:$0xff] %v191
  %303 = vst [vmem:[#allocation2 + $0xb0] sm:$0xff] %v232
  %304 = vst [vmem:[#allocation2 + $0xb8] sm:$0xff] %v273
  %305 = vst [vmem:[#allocation2 + $0xc0] sm:$0xff] %v153
  %306 = vst [vmem:[#allocation2 + $0xc8] sm:$0xff] %v194
  %307 = vst [vmem:[#allocation2 + $0xd0] sm:$0xff] %v235
  %308 = vst [vmem:[#allocation2 + $0xd8] sm:$0xff] %v276
  %309 = vst [vmem:[#allocation2 + $0xe0] sm:$0xff] %v156
  %310 = vst [vmem:[#allocation2 + $0xe8] sm:$0xff] %v197
  %311 = vst [vmem:[#allocation2 + $0xf0] sm:$0xff] %v238
  %312 = vst [vmem:[#allocation2 + $0xf8] sm:$0xff] %v279
  %v313 = vld [vmem:[%s4] sm:$0xff]
  %v314 = vld [vmem:[%s4 + $0x8] sm:$0xff]
  %v315 = vld [vmem:[%s4 + $0x10] sm:$0xff]
  %v316 = vld [vmem:[%s4 + $0x18] sm:$0xff]
  %v317 = vld [vmem:[%s4 + $0x20] sm:$0xff]
  %v318 = vld [vmem:[%s4 + $0x28] sm:$0xff]
  %v319 = vld [vmem:[%s4 + $0x30] sm:$0xff]
  %v320 = vld [vmem:[%s4 + $0x38] sm:$0xff]
  %v321 = vld [vmem:[%s4 + $0x40] sm:$0xff]
  %v322 = vld [vmem:[%s4 + $0x48] sm:$0xff]
  %v323 = vld [vmem:[%s4 + $0x50] sm:$0xff]
  %v324 = vld [vmem:[%s4 + $0x58] sm:$0xff]
  %v325 = vld [vmem:[%s4 + $0x60] sm:$0xff]
  %v326 = vld [vmem:[%s4 + $0x68] sm:$0xff]
  %v327 = vld [vmem:[%s4 + $0x70] sm:$0xff]
  %v328 = vld [vmem:[%s4 + $0x78] sm:$0xff]
  %v329 = vld [vmem:[%s4 + $0x80] sm:$0xff]
  %v330 = vld [vmem:[%s4 + $0x88] sm:$0xff]
  %v331 = vld [vmem:[%s4 + $0x90] sm:$0xff]
  %v332 = vld [vmem:[%s4 + $0x98] sm:$0xff]
  %v333 = vld [vmem:[%s4 + $0xa0] sm:$0xff]
  %v334 = vld [vmem:[%s4 + $0xa8] sm:$0xff]
  %v335 = vld [vmem:[%s4 + $0xb0] sm:$0xff]
  %v336 = vld [vmem:[%s4 + $0xb8] sm:$0xff]
  %v337 = vld [vmem:[%s4 + $0xc0] sm:$0xff]
  %v338 = vld [vmem:[%s4 + $0xc8] sm:$0xff]
  %v339 = vld [vmem:[%s4 + $0xd0] sm:$0xff]
  %v340 = vld [vmem:[%s4 + $0xd8] sm:$0xff]
  %v341 = vld [vmem:[%s4 + $0xe0] sm:$0xff]
  %v342 = vld [vmem:[%s4 + $0xe8] sm:$0xff]
  %v343 = vld [vmem:[%s4 + $0xf0] sm:$0xff]
  %v344 = vld [vmem:[%s4 + $0xf8] sm:$0xff]
  %v345 = vld [vmem:[%s4 + $0x100] sm:$0xff]
  %v346 = vld [vmem:[%s4 + $0x108] sm:$0xff]
  %v347 = vld [vmem:[%s4 + $0x110] sm:$0xff]
  %v348 = vld [vmem:[%s4 + $0x118] sm:$0xff]
  %v349 = vld [vmem:[%s4 + $0x120] sm:$0xff]
  %v350 = vld [vmem:[%s4 + $0x128] sm:$0xff]
  %v351 = vld [vmem:[%s4 + $0x130] sm:$0xff]
  %v352 = vld [vmem:[%s4 + $0x138] sm:$0xff]
  %v353 = vld [vmem:[%s4 + $0x140] sm:$0xff]
  %v354 = vld [vmem:[%s4 + $0x148] sm:$0xff]
  %v355 = vld [vmem:[%s4 + $0x150] sm:$0xff]
  %v356 = vld [vmem:[%s4 + $0x158] sm:$0xff]
  %v357 = vld [vmem:[%s4 + $0x160] sm:$0xff]
  %v358 = vld [vmem:[%s4 + $0x168] sm:$0xff]
  %v359 = vld [vmem:[%s4 + $0x170] sm:$0xff]
  %v360 = vld [vmem:[%s4 + $0x178] sm:$0xff]
  %v361 = vld [vmem:[%s4 + $0x180] sm:$0xff]
  %v362 = vld [vmem:[%s4 + $0x188] sm:$0xff]
  %v363 = vld [vmem:[%s4 + $0x190] sm:$0xff]
  %v364 = vld [vmem:[%s4 + $0x198] sm:$0xff]
  %v365 = vld [vmem:[%s4 + $0x1a0] sm:$0xff]
  %v366 = vld [vmem:[%s4 + $0x1a8] sm:$0xff]
  %v367 = vld [vmem:[%s4 + $0x1b0] sm:$0xff]
  %v368 = vld [vmem:[%s4 + $0x1b8] sm:$0xff]
  %v369 = vld [vmem:[%s4 + $0x1c0] sm:$0xff]
  %v370 = vld [vmem:[%s4 + $0x1c8] sm:$0xff]
  %v371 = vld [vmem:[%s4 + $0x1d0] sm:$0xff]
  %v372 = vld [vmem:[%s4 + $0x1d8] sm:$0xff]
  %v373 = vld [vmem:[%s4 + $0x1e0] sm:$0xff]
  %v374 = vld [vmem:[%s4 + $0x1e8] sm:$0xff]
  %v375 = vld [vmem:[%s4 + $0x1f0] sm:$0xff]
  %v376 = vld [vmem:[%s4 + $0x1f8] sm:$0xff]
  %v377 = vld [vmem:[%s6] sm:$0xf]
  %v379 = vperm.slane %v377, 0
  %v380 = vperm.slane %v377, 1
  %v381 = vperm.slane %v377, 2
  %v382 = vperm.slane %v377, 3
  %387 = vmatpush.msra.mxu0 %v373
  %388 = vmatpush.msra.mxu0 %v369
  %389 = vmatpush.msra.mxu0 %v365
  %390 = vmatpush.msra.mxu0 %v361
  %391 = vmatpush.msra.mxu0 %v357
  %392 = vmatpush.msra.mxu0 %v353
  %393 = vmatpush.msra.mxu0 %v349
  %394 = vmatpush.msra.mxu0 %v345
  %395 = vmatpush.msra.mxu0 %v341
  %396 = vmatpush.msra.mxu0 %v337
  %397 = vmatpush.msra.mxu0 %v333
  %398 = vmatpush.msra.mxu0 %v329
  %399 = vmatpush.msra.mxu0 %v325
  %400 = vmatpush.msra.mxu0 %v321
  %401 = vmatpush.msra.mxu0 %v317
  %402 = vmatpush.msra.mxu0 %v313
  %403 = vmatmul.f32.gmra.mxu0 %v35
  %v404 = vpop.f32.mrf.mxu0
  %v405 = vadd.f32 %v379, %v404
  %406 = vmatmul.f32.gmra.mxu0 %v36
  %v407 = vpop.f32.mrf.mxu0
  %v408 = vadd.f32 %v379, %v407
  %409 = vmatmul.f32.gmra.mxu0 %v37
  %v410 = vpop.f32.mrf.mxu0
  %v411 = vadd.f32 %v379, %v410
  %412 = vmatmul.f32.gmra.mxu0 %v38
  %v413 = vpop.f32.mrf.mxu0
  %v414 = vadd.f32 %v379, %v413
  %415 = vmatmul.f32.gmra.mxu0 %v39
  %v416 = vpop.f32.mrf.mxu0
  %v417 = vadd.f32 %v379, %v416
  %418 = vmatmul.f32.gmra.mxu0 %v40
  %v419 = vpop.f32.mrf.mxu0
  %v420 = vadd.f32 %v379, %v419
  %421 = vmatmul.f32.gmra.mxu0 %v41
  %v422 = vpop.f32.mrf.mxu0
  %v423 = vadd.f32 %v379, %v422
  %424 = vmatmul.f32.gmra.mxu0 %v42
  %v425 = vpop.f32.mrf.mxu0
  %v426 = vadd.f32 %v379, %v425
  %427 = vdwg.mxu0
  %428 = vmatpush.msra.mxu0 %v374
  %429 = vmatpush.msra.mxu0 %v370
  %430 = vmatpush.msra.mxu0 %v366
  %431 = vmatpush.msra.mxu0 %v362
  %432 = vmatpush.msra.mxu0 %v358
  %433 = vmatpush.msra.mxu0 %v354
  %434 = vmatpush.msra.mxu0 %v350
  %435 = vmatpush.msra.mxu0 %v346
  %436 = vmatpush.msra.mxu0 %v342
  %437 = vmatpush.msra.mxu0 %v338
  %438 = vmatpush.msra.mxu0 %v334
  %439 = vmatpush.msra.mxu0 %v330
  %440 = vmatpush.msra.mxu0 %v326
  %441 = vmatpush.msra.mxu0 %v322
  %442 = vmatpush.msra.mxu0 %v318
  %443 = vmatpush.msra.mxu0 %v314
  %444 = vmatmul.f32.gmra.mxu0 %v35
  %v445 = vpop.f32.mrf.mxu0
  %v446 = vadd.f32 %v380, %v445
  %447 = vmatmul.f32.gmra.mxu0 %v36
  %v448 = vpop.f32.mrf.mxu0
  %v449 = vadd.f32 %v380, %v448
  %450 = vmatmul.f32.gmra.mxu0 %v37
  %v451 = vpop.f32.mrf.mxu0
  %v452 = vadd.f32 %v380, %v451
  %453 = vmatmul.f32.gmra.mxu0 %v38
  %v454 = vpop.f32.mrf.mxu0
  %v455 = vadd.f32 %v380, %v454
  %456 = vmatmul.f32.gmra.mxu0 %v39
  %v457 = vpop.f32.mrf.mxu0
  %v458 = vadd.f32 %v380, %v457
  %459 = vmatmul.f32.gmra.mxu0 %v40
  %v460 = vpop.f32.mrf.mxu0
  %v461 = vadd.f32 %v380, %v460
  %462 = vmatmul.f32.gmra.mxu0 %v41
  %v463 = vpop.f32.mrf.mxu0
  %v464 = vadd.f32 %v380, %v463
  %465 = vmatmul.f32.gmra.mxu0 %v42
  %v466 = vpop.f32.mrf.mxu0
  %v467 = vadd.f32 %v380, %v466
  %468 = vdwg.mxu0
  %469 = vmatpush.msra.mxu0 %v375
  %470 = vmatpush.msra.mxu0 %v371
  %471 = vmatpush.msra.mxu0 %v367
  %472 = vmatpush.msra.mxu0 %v363
  %473 = vmatpush.msra.mxu0 %v359
  %474 = vmatpush.msra.mxu0 %v355
  %475 = vmatpush.msra.mxu0 %v351
  %476 = vmatpush.msra.mxu0 %v347
  %477 = vmatpush.msra.mxu0 %v343
  %478 = vmatpush.msra.mxu0 %v339
  %479 = vmatpush.msra.mxu0 %v335
  %480 = vmatpush.msra.mxu0 %v331
  %481 = vmatpush.msra.mxu0 %v327
  %482 = vmatpush.msra.mxu0 %v323
  %483 = vmatpush.msra.mxu0 %v319
  %484 = vmatpush.msra.mxu0 %v315
  %485 = vmatmul.f32.gmra.mxu0 %v35
  %v486 = vpop.f32.mrf.mxu0
  %v487 = vadd.f32 %v381, %v486
  %488 = vmatmul.f32.gmra.mxu0 %v36
  %v489 = vpop.f32.mrf.mxu0
  %v490 = vadd.f32 %v381, %v489
  %491 = vmatmul.f32.gmra.mxu0 %v37
  %v492 = vpop.f32.mrf.mxu0
  %v493 = vadd.f32 %v381, %v492
  %494 = vmatmul.f32.gmra.mxu0 %v38
  %v495 = vpop.f32.mrf.mxu0
  %v496 = vadd.f32 %v381, %v495
  %497 = vmatmul.f32.gmra.mxu0 %v39
  %v498 = vpop.f32.mrf.mxu0
  %v499 = vadd.f32 %v381, %v498
  %500 = vmatmul.f32.gmra.mxu0 %v40
  %v501 = vpop.f32.mrf.mxu0
  %v502 = vadd.f32 %v381, %v501
  %503 = vmatmul.f32.gmra.mxu0 %v41
  %v504 = vpop.f32.mrf.mxu0
  %v505 = vadd.f32 %v381, %v504
  %506 = vmatmul.f32.gmra.mxu0 %v42
  %v507 = vpop.f32.mrf.mxu0
  %v508 = vadd.f32 %v381, %v507
  %509 = vdwg.mxu0
  %510 = vmatpush.msra.mxu0 %v376
  %511 = vmatpush.msra.mxu0 %v372
  %512 = vmatpush.msra.mxu0 %v368
  %513 = vmatpush.msra.mxu0 %v364
  %514 = vmatpush.msra.mxu0 %v360
  %515 = vmatpush.msra.mxu0 %v356
  %516 = vmatpush.msra.mxu0 %v352
  %517 = vmatpush.msra.mxu0 %v348
  %518 = vmatpush.msra.mxu0 %v344
  %519 = vmatpush.msra.mxu0 %v340
  %520 = vmatpush.msra.mxu0 %v336
  %521 = vmatpush.msra.mxu0 %v332
  %522 = vmatpush.msra.mxu0 %v328
  %523 = vmatpush.msra.mxu0 %v324
  %524 = vmatpush.msra.mxu0 %v320
  %525 = vmatpush.msra.mxu0 %v316
  %526 = vmatmul.f32.gmra.mxu0 %v35
  %v527 = vpop.f32.mrf.mxu0
  %v528 = vadd.f32 %v382, %v527
  %529 = vmatmul.f32.gmra.mxu0 %v36
  %v530 = vpop.f32.mrf.mxu0
  %v531 = vadd.f32 %v382, %v530
  %532 = vmatmul.f32.gmra.mxu0 %v37
  %v533 = vpop.f32.mrf.mxu0
  %v534 = vadd.f32 %v382, %v533
  %535 = vmatmul.f32.gmra.mxu0 %v38
  %v536 = vpop.f32.mrf.mxu0
  %v537 = vadd.f32 %v382, %v536
  %538 = vmatmul.f32.gmra.mxu0 %v39
  %v539 = vpop.f32.mrf.mxu0
  %v540 = vadd.f32 %v382, %v539
  %541 = vmatmul.f32.gmra.mxu0 %v40
  %v542 = vpop.f32.mrf.mxu0
  %v543 = vadd.f32 %v382, %v542
  %544 = vmatmul.f32.gmra.mxu0 %v41
  %v545 = vpop.f32.mrf.mxu0
  %v546 = vadd.f32 %v382, %v545
  %547 = vmatmul.f32.gmra.mxu0 %v42
  %v548 = vpop.f32.mrf.mxu0
  %v549 = vadd.f32 %v382, %v548
  %550 = vdwg.mxu0
  %551 = vst [vmem:[#allocation3] sm:$0xff] %v405
  %552 = vst [vmem:[#allocation3 + $0x8] sm:$0xff] %v446
  %553 = vst [vmem:[#allocation3 + $0x10] sm:$0xff] %v487
  %554 = vst [vmem:[#allocation3 + $0x18] sm:$0xff] %v528
  %555 = vst [vmem:[#allocation3 + $0x20] sm:$0xff] %v408
  %556 = vst [vmem:[#allocation3 + $0x28] sm:$0xff] %v449
  %557 = vst [vmem:[#allocation3 + $0x30] sm:$0xff] %v490
  %558 = vst [vmem:[#allocation3 + $0x38] sm:$0xff] %v531
  %559 = vst [vmem:[#allocation3 + $0x40] sm:$0xff] %v411
  %560 = vst [vmem:[#allocation3 + $0x48] sm:$0xff] %v452
  %561 = vst [vmem:[#allocation3 + $0x50] sm:$0xff] %v493
  %562 = vst [vmem:[#allocation3 + $0x58] sm:$0xff] %v534
  %563 = vst [vmem:[#allocation3 + $0x60] sm:$0xff] %v414
  %564 = vst [vmem:[#allocation3 + $0x68] sm:$0xff] %v455
  %565 = vst [vmem:[#allocation3 + $0x70] sm:$0xff] %v496
  %566 = vst [vmem:[#allocation3 + $0x78] sm:$0xff] %v537
  %567 = vst [vmem:[#allocation3 + $0x80] sm:$0xff] %v417
  %568 = vst [vmem:[#allocation3 + $0x88] sm:$0xff] %v458
  %569 = vst [vmem:[#allocation3 + $0x90] sm:$0xff] %v499
  %570 = vst [vmem:[#allocation3 + $0x98] sm:$0xff] %v540
  %571 = vst [vmem:[#allocation3 + $0xa0] sm:$0xff] %v420
  %572 = vst [vmem:[#allocation3 + $0xa8] sm:$0xff] %v461
  %573 = vst [vmem:[#allocation3 + $0xb0] sm:$0xff] %v502
  %574 = vst [vmem:[#allocation3 + $0xb8] sm:$0xff] %v543
  %575 = vst [vmem:[#allocation3 + $0xc0] sm:$0xff] %v423
  %576 = vst [vmem:[#allocation3 + $0xc8] sm:$0xff] %v464
  %577 = vst [vmem:[#allocation3 + $0xd0] sm:$0xff] %v505
  %578 = vst [vmem:[#allocation3 + $0xd8] sm:$0xff] %v546
  %579 = vst [vmem:[#allocation3 + $0xe0] sm:$0xff] %v426
  %580 = vst [vmem:[#allocation3 + $0xe8] sm:$0xff] %v467
  %581 = vst [vmem:[#allocation3 + $0xf0] sm:$0xff] %v508
  %582 = vst [vmem:[#allocation3 + $0xf8] sm:$0xff] %v549
  %v583 = vld [vmem:[%s2] sm:$0xff]
  %v584 = vld [vmem:[%s2 + $0x8] sm:$0xff]
  %v585 = vld [vmem:[%s2 + $0x10] sm:$0xff]
  %v586 = vld [vmem:[%s2 + $0x18] sm:$0xff]
  %v587 = vld [vmem:[%s2 + $0x20] sm:$0xff]
  %v588 = vld [vmem:[%s2 + $0x28] sm:$0xff]
  %v589 = vld [vmem:[%s2 + $0x30] sm:$0xff]
  %v590 = vld [vmem:[%s2 + $0x38] sm:$0xff]
  %v591 = vld [vmem:[%s2 + $0x40] sm:$0xff]
  %v592 = vld [vmem:[%s2 + $0x48] sm:$0xff]
  %v593 = vld [vmem:[%s2 + $0x50] sm:$0xff]
  %v594 = vld [vmem:[%s2 + $0x58] sm:$0xff]
  %v595 = vld [vmem:[%s2 + $0x60] sm:$0xff]
  %v596 = vld [vmem:[%s2 + $0x68] sm:$0xff]
  %v597 = vld [vmem:[%s2 + $0x70] sm:$0xff]
  %v598 = vld [vmem:[%s2 + $0x78] sm:$0xff]
  %v599 = vld [vmem:[%s2 + $0x80] sm:$0xff]
  %v600 = vld [vmem:[%s2 + $0x88] sm:$0xff]
  %v601 = vld [vmem:[%s2 + $0x90] sm:$0xff]
  %v602 = vld [vmem:[%s2 + $0x98] sm:$0xff]
  %v603 = vld [vmem:[%s2 + $0xa0] sm:$0xff]
  %v604 = vld [vmem:[%s2 + $0xa8] sm:$0xff]
  %v605 = vld [vmem:[%s2 + $0xb0] sm:$0xff]
  %v606 = vld [vmem:[%s2 + $0xb8] sm:$0xff]
  %v607 = vld [vmem:[%s2 + $0xc0] sm:$0xff]
  %v608 = vld [vmem:[%s2 + $0xc8] sm:$0xff]
  %v609 = vld [vmem:[%s2 + $0xd0] sm:$0xff]
  %v610 = vld [vmem:[%s2 + $0xd8] sm:$0xff]
  %v611 = vld [vmem:[%s2 + $0xe0] sm:$0xff]
  %v612 = vld [vmem:[%s2 + $0xe8] sm:$0xff]
  %v613 = vld [vmem:[%s2 + $0xf0] sm:$0xff]
  %v614 = vld [vmem:[%s2 + $0xf8] sm:$0xff]
  %v615 = vld [vmem:[%s2 + $0x100] sm:$0xff]
  %v616 = vld [vmem:[%s2 + $0x108] sm:$0xff]
  %v617 = vld [vmem:[%s2 + $0x110] sm:$0xff]
  %v618 = vld [vmem:[%s2 + $0x118] sm:$0xff]
  %v619 = vld [vmem:[%s2 + $0x120] sm:$0xff]
  %v620 = vld [vmem:[%s2 + $0x128] sm:$0xff]
  %v621 = vld [vmem:[%s2 + $0x130] sm:$0xff]
  %v622 = vld [vmem:[%s2 + $0x138] sm:$0xff]
  %v623 = vld [vmem:[%s2 + $0x140] sm:$0xff]
  %v624 = vld [vmem:[%s2 + $0x148] sm:$0xff]
  %v625 = vld [vmem:[%s2 + $0x150] sm:$0xff]
  %v626 = vld [vmem:[%s2 + $0x158] sm:$0xff]
  %v627 = vld [vmem:[%s2 + $0x160] sm:$0xff]
  %v628 = vld [vmem:[%s2 + $0x168] sm:$0xff]
  %v629 = vld [vmem:[%s2 + $0x170] sm:$0xff]
  %v630 = vld [vmem:[%s2 + $0x178] sm:$0xff]
  %v631 = vld [vmem:[%s2 + $0x180] sm:$0xff]
  %v632 = vld [vmem:[%s2 + $0x188] sm:$0xff]
  %v633 = vld [vmem:[%s2 + $0x190] sm:$0xff]
  %v634 = vld [vmem:[%s2 + $0x198] sm:$0xff]
  %v635 = vld [vmem:[%s2 + $0x1a0] sm:$0xff]
  %v636 = vld [vmem:[%s2 + $0x1a8] sm:$0xff]
  %v637 = vld [vmem:[%s2 + $0x1b0] sm:$0xff]
  %v638 = vld [vmem:[%s2 + $0x1b8] sm:$0xff]
  %v639 = vld [vmem:[%s2 + $0x1c0] sm:$0xff]
  %v640 = vld [vmem:[%s2 + $0x1c8] sm:$0xff]
  %v641 = vld [vmem:[%s2 + $0x1d0] sm:$0xff]
  %v642 = vld [vmem:[%s2 + $0x1d8] sm:$0xff]
  %v643 = vld [vmem:[%s2 + $0x1e0] sm:$0xff]
  %v644 = vld [vmem:[%s2 + $0x1e8] sm:$0xff]
  %v645 = vld [vmem:[%s2 + $0x1f0] sm:$0xff]
  %v646 = vld [vmem:[%s2 + $0x1f8] sm:$0xff]
  %v647 = vld [vmem:[%s5] sm:$0xff]
  %v648 = vld [vmem:[%s5 + $0x8] sm:$0xff]
  %v649 = vld [vmem:[%s5 + $0x10] sm:$0xff]
  %v650 = vld [vmem:[%s5 + $0x18] sm:$0xff]
  %v651 = vld [vmem:[%s5 + $0x20] sm:$0xff]
  %v652 = vld [vmem:[%s5 + $0x28] sm:$0xff]
  %v653 = vld [vmem:[%s5 + $0x30] sm:$0xff]
  %v654 = vld [vmem:[%s5 + $0x38] sm:$0xff]
  %v655 = vld [vmem:[%s5 + $0x40] sm:$0xff]
  %v656 = vld [vmem:[%s5 + $0x48] sm:$0xff]
  %v657 = vld [vmem:[%s5 + $0x50] sm:$0xff]
  %v658 = vld [vmem:[%s5 + $0x58] sm:$0xff]
  %v659 = vld [vmem:[%s5 + $0x60] sm:$0xff]
  %v660 = vld [vmem:[%s5 + $0x68] sm:$0xff]
  %v661 = vld [vmem:[%s5 + $0x70] sm:$0xff]
  %v662 = vld [vmem:[%s5 + $0x78] sm:$0xff]
  %v663 = vld [vmem:[%s5 + $0x80] sm:$0xff]
  %v664 = vld [vmem:[%s5 + $0x88] sm:$0xff]
  %v665 = vld [vmem:[%s5 + $0x90] sm:$0xff]
  %v666 = vld [vmem:[%s5 + $0x98] sm:$0xff]
  %v667 = vld [vmem:[%s5 + $0xa0] sm:$0xff]
  %v668 = vld [vmem:[%s5 + $0xa8] sm:$0xff]
  %v669 = vld [vmem:[%s5 + $0xb0] sm:$0xff]
  %v670 = vld [vmem:[%s5 + $0xb8] sm:$0xff]
  %v671 = vld [vmem:[%s5 + $0xc0] sm:$0xff]
  %v672 = vld [vmem:[%s5 + $0xc8] sm:$0xff]
  %v673 = vld [vmem:[%s5 + $0xd0] sm:$0xff]
  %v674 = vld [vmem:[%s5 + $0xd8] sm:$0xff]
  %v675 = vld [vmem:[%s5 + $0xe0] sm:$0xff]
  %v676 = vld [vmem:[%s5 + $0xe8] sm:$0xff]
  %v677 = vld [vmem:[%s5 + $0xf0] sm:$0xff]
  %v678 = vld [vmem:[%s5 + $0xf8] sm:$0xff]
  %v679 = vld [vmem:[%s5 + $0x100] sm:$0xff]
  %v680 = vld [vmem:[%s5 + $0x108] sm:$0xff]
  %v681 = vld [vmem:[%s5 + $0x110] sm:$0xff]
  %v682 = vld [vmem:[%s5 + $0x118] sm:$0xff]
  %v683 = vld [vmem:[%s5 + $0x120] sm:$0xff]
  %v684 = vld [vmem:[%s5 + $0x128] sm:$0xff]
  %v685 = vld [vmem:[%s5 + $0x130] sm:$0xff]
  %v686 = vld [vmem:[%s5 + $0x138] sm:$0xff]
  %v687 = vld [vmem:[%s5 + $0x140] sm:$0xff]
  %v688 = vld [vmem:[%s5 + $0x148] sm:$0xff]
  %v689 = vld [vmem:[%s5 + $0x150] sm:$0xff]
  %v690 = vld [vmem:[%s5 + $0x158] sm:$0xff]
  %v691 = vld [vmem:[%s5 + $0x160] sm:$0xff]
  %v692 = vld [vmem:[%s5 + $0x168] sm:$0xff]
  %v693 = vld [vmem:[%s5 + $0x170] sm:$0xff]
  %v694 = vld [vmem:[%s5 + $0x178] sm:$0xff]
  %v695 = vld [vmem:[%s5 + $0x180] sm:$0xff]
  %v696 = vld [vmem:[%s5 + $0x188] sm:$0xff]
  %v697 = vld [vmem:[%s5 + $0x190] sm:$0xff]
  %v698 = vld [vmem:[%s5 + $0x198] sm:$0xff]
  %v699 = vld [vmem:[%s5 + $0x1a0] sm:$0xff]
  %v700 = vld [vmem:[%s5 + $0x1a8] sm:$0xff]
  %v701 = vld [vmem:[%s5 + $0x1b0] sm:$0xff]
  %v702 = vld [vmem:[%s5 + $0x1b8] sm:$0xff]
  %v703 = vld [vmem:[%s5 + $0x1c0] sm:$0xff]
  %v704 = vld [vmem:[%s5 + $0x1c8] sm:$0xff]
  %v705 = vld [vmem:[%s5 + $0x1d0] sm:$0xff]
  %v706 = vld [vmem:[%s5 + $0x1d8] sm:$0xff]
  %v707 = vld [vmem:[%s5 + $0x1e0] sm:$0xff]
  %v708 = vld [vmem:[%s5 + $0x1e8] sm:$0xff]
  %v709 = vld [vmem:[%s5 + $0x1f0] sm:$0xff]
  %v710 = vld [vmem:[%s5 + $0x1f8] sm:$0xff]
  %v711 = vld [vmem:[#allocation2] sm:$0xff]
  %v712 = vld [vmem:[#allocation2 + $0x8] sm:$0xff]
  %v713 = vld [vmem:[#allocation2 + $0x10] sm:$0xff]
  %v714 = vld [vmem:[#allocation2 + $0x18] sm:$0xff]
  %715 = vmatpush.msra.mxu0 %v643
  %716 = vmatpush.msra.mxu0 %v639
  %717 = vmatpush.msra.mxu0 %v635
  %718 = vmatpush.msra.mxu0 %v631
  %719 = vmatpush.msra.mxu0 %v627
  %720 = vmatpush.msra.mxu0 %v623
  %721 = vmatpush.msra.mxu0 %v619
  %722 = vmatpush.msra.mxu0 %v615
  %723 = vmatpush.msra.mxu0 %v611
  %724 = vmatpush.msra.mxu0 %v607
  %725 = vmatpush.msra.mxu0 %v603
  %726 = vmatpush.msra.mxu0 %v599
  %727 = vmatpush.msra.mxu0 %v595
  %728 = vmatpush.msra.mxu0 %v591
  %729 = vmatpush.msra.mxu0 %v587
  %730 = vmatpush.msra.mxu0 %v583
  %731 = vmatmul.f32.gmra.mxu0 0.0
  %v732 = vpop.f32.mrf.mxu0
  %v733 = vadd.f32 0.0, %v732
  %734 = vdwg.mxu0
  %735 = vmatpush.msra.mxu0 %v644
  %736 = vmatpush.msra.mxu0 %v640
  %737 = vmatpush.msra.mxu0 %v636
  %738 = vmatpush.msra.mxu0 %v632
  %739 = vmatpush.msra.mxu0 %v628
  %740 = vmatpush.msra.mxu0 %v624
  %741 = vmatpush.msra.mxu0 %v620
  %742 = vmatpush.msra.mxu0 %v616
  %743 = vmatpush.msra.mxu0 %v612
  %744 = vmatpush.msra.mxu0 %v608
  %745 = vmatpush.msra.mxu0 %v604
  %746 = vmatpush.msra.mxu0 %v600
  %747 = vmatpush.msra.mxu0 %v596
  %748 = vmatpush.msra.mxu0 %v592
  %749 = vmatpush.msra.mxu0 %v588
  %750 = vmatpush.msra.mxu0 %v584
  %751 = vmatmul.f32.gmra.mxu0 0.0
  %v752 = vpop.f32.mrf.mxu0
  %v753 = vadd.f32 0.0, %v752
  %754 = vdwg.mxu0
  %755 = vmatpush.msra.mxu0 %v645
  %756 = vmatpush.msra.mxu0 %v641
  %757 = vmatpush.msra.mxu0 %v637
  %758 = vmatpush.msra.mxu0 %v633
  %759 = vmatpush.msra.mxu0 %v629
  %760 = vmatpush.msra.mxu0 %v625
  %761 = vmatpush.msra.mxu0 %v621
  %762 = vmatpush.msra.mxu0 %v617
  %763 = vmatpush.msra.mxu0 %v613
  %764 = vmatpush.msra.mxu0 %v609
  %765 = vmatpush.msra.mxu0 %v605
  %766 = vmatpush.msra.mxu0 %v601
  %767 = vmatpush.msra.mxu0 %v597
  %768 = vmatpush.msra.mxu0 %v593
  %769 = vmatpush.msra.mxu0 %v589
  %770 = vmatpush.msra.mxu0 %v585
  %771 = vmatmul.f32.gmra.mxu0 0.0
  %v772 = vpop.f32.mrf.mxu0
  %v773 = vadd.f32 0.0, %v772
  %774 = vdwg.mxu0
  %775 = vmatpush.msra.mxu0 %v646
  %776 = vmatpush.msra.mxu0 %v642
  %777 = vmatpush.msra.mxu0 %v638
  %778 = vmatpush.msra.mxu0 %v634
  %779 = vmatpush.msra.mxu0 %v630
  %780 = vmatpush.msra.mxu0 %v626
  %781 = vmatpush.msra.mxu0 %v622
  %782 = vmatpush.msra.mxu0 %v618
  %783 = vmatpush.msra.mxu0 %v614
  %784 = vmatpush.msra.mxu0 %v610
  %785 = vmatpush.msra.mxu0 %v606
  %786 = vmatpush.msra.mxu0 %v602
  %787 = vmatpush.msra.mxu0 %v598
  %788 = vmatpush.msra.mxu0 %v594
  %789 = vmatpush.msra.mxu0 %v590
  %790 = vmatpush.msra.mxu0 %v586
  %791 = vmatmul.f32.gmra.mxu0 0.0
  %v792 = vpop.f32.mrf.mxu0
  %v793 = vadd.f32 0.0, %v792
  %794 = vdwg.mxu0
  %v795 = vadd.f32 %v711, %v733
  %v796 = vadd.f32 %v712, %v753
  %v797 = vadd.f32 %v713, %v773
  %v798 = vadd.f32 %v714, %v793
  %v799 = vxor.u32 %v795, 2147483648
  %v800 = vmul.f32 %v799, 1.442695
  %v801 = vpow.pop %v800
  %v802 = vadd.f32 %v801, 1.0
  %v803 = vrcp.pop %v802
  %v804 = vmul.f32 %v802, %v803
  %v805 = vsub.f32 1.0, %v804
  %v806 = vmul.f32 %v803, %v805
  %v807 = vadd.f32 %v803, %v806
  %vm808 = vweird.f32 %v802
  %vm809 = vweird.f32 %v803
  %vm810 = vmor %vm808, %vm809
  %v811 = vsel %vm810, %v803, %v807
  %v812 = vand.u32 2147483647, %v802
  %vm813 = vcmp.eq.f32.partialorder %v812, 8.507059e+37
  %v814 = vand.u32 %v802, 2147483648
  %v815 = vor.u32 1.1754944e-38, %v814
  %v816 = vsel %vm813, %v815, %v811
  %v817 = vmul.f32 1.0, %v816
  %v818 = vxor.u32 %v796, 2147483648
  %v819 = vmul.f32 %v818, 1.442695
  %v820 = vpow.pop %v819
  %v821 = vadd.f32 %v820, 1.0
  %v822 = vrcp.pop %v821
  %v823 = vmul.f32 %v821, %v822
  %v824 = vsub.f32 1.0, %v823
  %v825 = vmul.f32 %v822, %v824
  %v826 = vadd.f32 %v822, %v825
  %vm827 = vweird.f32 %v821
  %vm828 = vweird.f32 %v822
  %vm829 = vmor %vm827, %vm828
  %v830 = vsel %vm829, %v822, %v826
  %v831 = vand.u32 2147483647, %v821
  %vm832 = vcmp.eq.f32.partialorder %v831, 8.507059e+37
  %v833 = vand.u32 %v821, 2147483648
  %v834 = vor.u32 1.1754944e-38, %v833
  %v835 = vsel %vm832, %v834, %v830
  %v836 = vmul.f32 1.0, %v835
  %v837 = vtanh.pop %v797
  %v838 = vxor.u32 %v798, 2147483648
  %v839 = vmul.f32 %v838, 1.442695
  %v840 = vpow.pop %v839
  %v841 = vadd.f32 %v840, 1.0
  %v842 = vrcp.pop %v841
  %v843 = vmul.f32 %v841, %v842
  %v844 = vsub.f32 1.0, %v843
  %v845 = vmul.f32 %v842, %v844
  %v846 = vadd.f32 %v842, %v845
  %vm847 = vweird.f32 %v841
  %vm848 = vweird.f32 %v842
  %vm849 = vmor %vm847, %vm848
  %v850 = vsel %vm849, %v842, %v846
  %v851 = vand.u32 2147483647, %v841
  %vm852 = vcmp.eq.f32.partialorder %v851, 8.507059e+37
  %v853 = vand.u32 %v841, 2147483648
  %v854 = vor.u32 1.1754944e-38, %v853
  %v855 = vsel %vm852, %v854, %v850
  %v856 = vmul.f32 1.0, %v855
  %v857 = vmul.f32 %v836, 0.0
  %v858 = vmul.f32 %v817, %v837
  %v859 = vadd.f32 %v857, %v858
  %v860 = vtanh.pop %v859
  %v861 = vmul.f32 %v856, %v860
  %s862 = scalar_lea.vmem [#allocation3], 224
  %v863 = vld [vmem:[%s862] sm:$0xff]
  %v864 = vld [vmem:[%s862 + $0x8] sm:$0xff]
  %v865 = vld [vmem:[%s862 + $0x10] sm:$0xff]
  %v866 = vld [vmem:[%s862 + $0x18] sm:$0xff]
  %867 = vmatpush.msra.mxu0 %v707
  %868 = vmatpush.msra.mxu0 %v703
  %869 = vmatpush.msra.mxu0 %v699
  %870 = vmatpush.msra.mxu0 %v695
  %871 = vmatpush.msra.mxu0 %v691
  %872 = vmatpush.msra.mxu0 %v687
  %873 = vmatpush.msra.mxu0 %v683
  %874 = vmatpush.msra.mxu0 %v679
  %875 = vmatpush.msra.mxu0 %v675
  %876 = vmatpush.msra.mxu0 %v671
  %877 = vmatpush.msra.mxu0 %v667
  %878 = vmatpush.msra.mxu0 %v663
  %879 = vmatpush.msra.mxu0 %v659
  %880 = vmatpush.msra.mxu0 %v655
  %881 = vmatpush.msra.mxu0 %v651
  %882 = vmatpush.msra.mxu0 %v647
  %883 = vmatmul.f32.gmra.mxu0 0.0
  %v884 = vpop.f32.mrf.mxu0
  %v885 = vadd.f32 0.0, %v884
  %886 = vdwg.mxu0
  %887 = vmatpush.msra.mxu0 %v708
  %888 = vmatpush.msra.mxu0 %v704
  %889 = vmatpush.msra.mxu0 %v700
  %890 = vmatpush.msra.mxu0 %v696
  %891 = vmatpush.msra.mxu0 %v692
  %892 = vmatpush.msra.mxu0 %v688
  %893 = vmatpush.msra.mxu0 %v684
  %894 = vmatpush.msra.mxu0 %v680
  %895 = vmatpush.msra.mxu0 %v676
  %896 = vmatpush.msra.mxu0 %v672
  %897 = vmatpush.msra.mxu0 %v668
  %898 = vmatpush.msra.mxu0 %v664
  %899 = vmatpush.msra.mxu0 %v660
  %900 = vmatpush.msra.mxu0 %v656
  %901 = vmatpush.msra.mxu0 %v652
  %902 = vmatpush.msra.mxu0 %v648
  %903 = vmatmul.f32.gmra.mxu0 0.0
  %v904 = vpop.f32.mrf.mxu0
  %v905 = vadd.f32 0.0, %v904
  %906 = vdwg.mxu0
  %907 = vmatpush.msra.mxu0 %v709
  %908 = vmatpush.msra.mxu0 %v705
  %909 = vmatpush.msra.mxu0 %v701
  %910 = vmatpush.msra.mxu0 %v697
  %911 = vmatpush.msra.mxu0 %v693
  %912 = vmatpush.msra.mxu0 %v689
  %913 = vmatpush.msra.mxu0 %v685
  %914 = vmatpush.msra.mxu0 %v681
  %915 = vmatpush.msra.mxu0 %v677
  %916 = vmatpush.msra.mxu0 %v673
  %917 = vmatpush.msra.mxu0 %v669
  %918 = vmatpush.msra.mxu0 %v665
  %919 = vmatpush.msra.mxu0 %v661
  %920 = vmatpush.msra.mxu0 %v657
  %921 = vmatpush.msra.mxu0 %v653
  %922 = vmatpush.msra.mxu0 %v649
  %923 = vmatmul.f32.gmra.mxu0 0.0
  %v924 = vpop.f32.mrf.mxu0
  %v925 = vadd.f32 0.0, %v924
  %926 = vdwg.mxu0
  %927 = vmatpush.msra.mxu0 %v710
  %928 = vmatpush.msra.mxu0 %v706
  %929 = vmatpush.msra.mxu0 %v702
  %930 = vmatpush.msra.mxu0 %v698
  %931 = vmatpush.msra.mxu0 %v694
  %932 = vmatpush.msra.mxu0 %v690
  %933 = vmatpush.msra.mxu0 %v686
  %934 = vmatpush.msra.mxu0 %v682
  %935 = vmatpush.msra.mxu0 %v678
  %936 = vmatpush.msra.mxu0 %v674
  %937 = vmatpush.msra.mxu0 %v670
  %938 = vmatpush.msra.mxu0 %v666
  %939 = vmatpush.msra.mxu0 %v662
  %940 = vmatpush.msra.mxu0 %v658
  %941 = vmatpush.msra.mxu0 %v654
  %942 = vmatpush.msra.mxu0 %v650
  %943 = vmatmul.f32.gmra.mxu0 0.0
  %v944 = vpop.f32.mrf.mxu0
  %v945 = vadd.f32 0.0, %v944
  %946 = vdwg.mxu0
  %v947 = vadd.f32 %v863, %v885
  %v948 = vadd.f32 %v864, %v905
  %v949 = vadd.f32 %v865, %v925
  %v950 = vadd.f32 %v866, %v945
  %v951 = vxor.u32 %v947, 2147483648
  %v952 = vmul.f32 %v951, 1.442695
  %v953 = vpow.pop %v952
  %v954 = vadd.f32 %v953, 1.0
  %v955 = vrcp.pop %v954
  %v956 = vmul.f32 %v954, %v955
  %v957 = vsub.f32 1.0, %v956
  %v958 = vmul.f32 %v955, %v957
  %v959 = vadd.f32 %v955, %v958
  %vm960 = vweird.f32 %v954
  %vm961 = vweird.f32 %v955
  %vm962 = vmor %vm960, %vm961
  %v963 = vsel %vm962, %v955, %v959
  %v964 = vand.u32 2147483647, %v954
  %vm965 = vcmp.eq.f32.partialorder %v964, 8.507059e+37
  %v966 = vand.u32 %v954, 2147483648
  %v967 = vor.u32 1.1754944e-38, %v966
  %v968 = vsel %vm965, %v967, %v963
  %v969 = vmul.f32 1.0, %v968
  %v970 = vxor.u32 %v948, 2147483648
  %v971 = vmul.f32 %v970, 1.442695
  %v972 = vpow.pop %v971
  %v973 = vadd.f32 %v972, 1.0
  %v974 = vrcp.pop %v973
  %v975 = vmul.f32 %v973, %v974
  %v976 = vsub.f32 1.0, %v975
  %v977 = vmul.f32 %v974, %v976
  %v978 = vadd.f32 %v974, %v977
  %vm979 = vweird.f32 %v973
  %vm980 = vweird.f32 %v974
  %vm981 = vmor %vm979, %vm980
  %v982 = vsel %vm981, %v974, %v978
  %v983 = vand.u32 2147483647, %v973
  %vm984 = vcmp.eq.f32.partialorder %v983, 8.507059e+37
  %v985 = vand.u32 %v973, 2147483648
  %v986 = vor.u32 1.1754944e-38, %v985
  %v987 = vsel %vm984, %v986, %v982
  %v988 = vmul.f32 1.0, %v987
  %v989 = vtanh.pop %v949
  %v990 = vxor.u32 %v950, 2147483648
  %v991 = vmul.f32 %v990, 1.442695
  %v992 = vpow.pop %v991
  %v993 = vadd.f32 %v992, 1.0
  %v994 = vrcp.pop %v993
  %v995 = vmul.f32 %v993, %v994
  %v996 = vsub.f32 1.0, %v995
  %v997 = vmul.f32 %v994, %v996
  %v998 = vadd.f32 %v994, %v997
  %vm999 = vweird.f32 %v993
  %vm1000 = vweird.f32 %v994
  %vm1001 = vmor %vm999, %vm1000
  %v1002 = vsel %vm1001, %v994, %v998
  %v1003 = vand.u32 2147483647, %v993
  %vm1004 = vcmp.eq.f32.partialorder %v1003, 8.507059e+37
  %v1005 = vand.u32 %v993, 2147483648
  %v1006 = vor.u32 1.1754944e-38, %v1005
  %v1007 = vsel %vm1004, %v1006, %v1002
  %v1008 = vmul.f32 1.0, %v1007
  %v1009 = vmul.f32 %v988, 0.0
  %v1010 = vmul.f32 %v969, %v989
  %v1011 = vadd.f32 %v1009, %v1010
  %v1012 = vtanh.pop %v1011
  %v1013 = vmul.f32 %v1008, %v1012
  %1014 = vst [vmem:[#allocation4] sm:$0xff] %v861
  %s1015 = scalar_lea.vmem [#allocation5], 56
  %1016 = vst [vmem:[%s1015] sm:$0xff] %v1013
  %s1017 = scalar_lea.vmem [#allocation2], 32
  %v1018 = vld [vmem:[%s1017] sm:$0xff]
  %v1019 = vld [vmem:[%s1017 + $0x8] sm:$0xff]
  %v1020 = vld [vmem:[%s1017 + $0x10] sm:$0xff]
  %v1021 = vld [vmem:[%s1017 + $0x18] sm:$0xff]
  %1022 = vmatpush.msra.mxu0 %v643
  %1023 = vmatpush.msra.mxu0 %v639
  %1024 = vmatpush.msra.mxu0 %v635
  %1025 = vmatpush.msra.mxu0 %v631
  %1026 = vmatpush.msra.mxu0 %v627
  %1027 = vmatpush.msra.mxu0 %v623
  %1028 = vmatpush.msra.mxu0 %v619
  %1029 = vmatpush.msra.mxu0 %v615
  %1030 = vmatpush.msra.mxu0 %v611
  %1031 = vmatpush.msra.mxu0 %v607
  %1032 = vmatpush.msra.mxu0 %v603
  %1033 = vmatpush.msra.mxu0 %v599
  %1034 = vmatpush.msra.mxu0 %v595
  %1035 = vmatpush.msra.mxu0 %v591
  %1036 = vmatpush.msra.mxu0 %v587
  %1037 = vmatpush.msra.mxu0 %v583
  %1038 = vmatmul.f32.gmra.mxu0 %v861
  %v1039 = vpop.f32.mrf.mxu0
  %v1040 = vadd.f32 0.0, %v1039
  %1041 = vdwg.mxu0
  %1042 = vmatpush.msra.mxu0 %v644
  %1043 = vmatpush.msra.mxu0 %v640
  %1044 = vmatpush.msra.mxu0 %v636
  %1045 = vmatpush.msra.mxu0 %v632
  %1046 = vmatpush.msra.mxu0 %v628
  %1047 = vmatpush.msra.mxu0 %v624
  %1048 = vmatpush.msra.mxu0 %v620
  %1049 = vmatpush.msra.mxu0 %v616
  %1050 = vmatpush.msra.mxu0 %v612
  %1051 = vmatpush.msra.mxu0 %v608
  %1052 = vmatpush.msra.mxu0 %v604
  %1053 = vmatpush.msra.mxu0 %v600
  %1054 = vmatpush.msra.mxu0 %v596
  %1055 = vmatpush.msra.mxu0 %v592
  %1056 = vmatpush.msra.mxu0 %v588
  %1057 = vmatpush.msra.mxu0 %v584
  %1058 = vmatmul.f32.gmra.mxu0 %v861
  %v1059 = vpop.f32.mrf.mxu0
  %v1060 = vadd.f32 0.0, %v1059
  %1061 = vdwg.mxu0
  %1062 = vmatpush.msra.mxu0 %v645
  %1063 = vmatpush.msra.mxu0 %v641
  %1064 = vmatpush.msra.mxu0 %v637
  %1065 = vmatpush.msra.mxu0 %v633
  %1066 = vmatpush.msra.mxu0 %v629
  %1067 = vmatpush.msra.mxu0 %v625
  %1068 = vmatpush.msra.mxu0 %v621
  %1069 = vmatpush.msra.mxu0 %v617
  %1070 = vmatpush.msra.mxu0 %v613
  %1071 = vmatpush.msra.mxu0 %v609
  %1072 = vmatpush.msra.mxu0 %v605
  %1073 = vmatpush.msra.mxu0 %v601
  %1074 = vmatpush.msra.mxu0 %v597
  %1075 = vmatpush.msra.mxu0 %v593
  %1076 = vmatpush.msra.mxu0 %v589
  %1077 = vmatpush.msra.mxu0 %v585
  %1078 = vmatmul.f32.gmra.mxu0 %v861
  %v1079 = vpop.f32.mrf.mxu0
  %v1080 = vadd.f32 0.0, %v1079
  %1081 = vdwg.mxu0
  %1082 = vmatpush.msra.mxu0 %v646
  %1083 = vmatpush.msra.mxu0 %v642
  %1084 = vmatpush.msra.mxu0 %v638
  %1085 = vmatpush.msra.mxu0 %v634
  %1086 = vmatpush.msra.mxu0 %v630
  %1087 = vmatpush.msra.mxu0 %v626
  %1088 = vmatpush.msra.mxu0 %v622
  %1089 = vmatpush.msra.mxu0 %v618
  %1090 = vmatpush.msra.mxu0 %v614
  %1091 = vmatpush.msra.mxu0 %v610
  %1092 = vmatpush.msra.mxu0 %v606
  %1093 = vmatpush.msra.mxu0 %v602
  %1094 = vmatpush.msra.mxu0 %v598
  %1095 = vmatpush.msra.mxu0 %v594
  %1096 = vmatpush.msra.mxu0 %v590
  %1097 = vmatpush.msra.mxu0 %v586
  %1098 = vmatmul.f32.gmra.mxu0 %v861
  %v1099 = vpop.f32.mrf.mxu0
  %v1100 = vadd.f32 0.0, %v1099
  %1101 = vdwg.mxu0
  %v1102 = vadd.f32 %v1018, %v1040
  %v1103 = vadd.f32 %v1019, %v1060
  %v1104 = vadd.f32 %v1020, %v1080
  %v1105 = vadd.f32 %v1021, %v1100
  %v1106 = vxor.u32 %v1102, 2147483648
  %v1107 = vmul.f32 %v1106, 1.442695
  %v1108 = vpow.pop %v1107
  %v1109 = vadd.f32 %v1108, 1.0
  %v1110 = vrcp.pop %v1109
  %v1111 = vmul.f32 %v1109, %v1110
  %v1112 = vsub.f32 1.0, %v1111
  %v1113 = vmul.f32 %v1110, %v1112
  %v1114 = vadd.f32 %v1110, %v1113
  %vm1115 = vweird.f32 %v1109
  %vm1116 = vweird.f32 %v1110
  %vm1117 = vmor %vm1115, %vm1116
  %v1118 = vsel %vm1117, %v1110, %v1114
  %v1119 = vand.u32 2147483647, %v1109
  %vm1120 = vcmp.eq.f32.partialorder %v1119, 8.507059e+37
  %v1121 = vand.u32 %v1109, 2147483648
  %v1122 = vor.u32 1.1754944e-38, %v1121
  %v1123 = vsel %vm1120, %v1122, %v1118
  %v1124 = vmul.f32 1.0, %v1123
  %v1125 = vxor.u32 %v1103, 2147483648
  %v1126 = vmul.f32 %v1125, 1.442695
  %v1127 = vpow.pop %v1126
  %v1128 = vadd.f32 %v1127, 1.0
  %v1129 = vrcp.pop %v1128
  %v1130 = vmul.f32 %v1128, %v1129
  %v1131 = vsub.f32 1.0, %v1130
  %v1132 = vmul.f32 %v1129, %v1131
  %v1133 = vadd.f32 %v1129, %v1132
  %vm1134 = vweird.f32 %v1128
  %vm1135 = vweird.f32 %v1129
  %vm1136 = vmor %vm1134, %vm1135
  %v1137 = vsel %vm1136, %v1129, %v1133
  %v1138 = vand.u32 2147483647, %v1128
  %vm1139 = vcmp.eq.f32.partialorder %v1138, 8.507059e+37
  %v1140 = vand.u32 %v1128, 2147483648
  %v1141 = vor.u32 1.1754944e-38, %v1140
  %v1142 = vsel %vm1139, %v1141, %v1137
  %v1143 = vmul.f32 1.0, %v1142
  %v1144 = vtanh.pop %v1104
  %v1145 = vxor.u32 %v1105, 2147483648
  %v1146 = vmul.f32 %v1145, 1.442695
  %v1147 = vpow.pop %v1146
  %v1148 = vadd.f32 %v1147, 1.0
  %v1149 = vrcp.pop %v1148
  %v1150 = vmul.f32 %v1148, %v1149
  %v1151 = vsub.f32 1.0, %v1150
  %v1152 = vmul.f32 %v1149, %v1151
  %v1153 = vadd.f32 %v1149, %v1152
  %vm1154 = vweird.f32 %v1148
  %vm1155 = vweird.f32 %v1149
  %vm1156 = vmor %vm1154, %vm1155
  %v1157 = vsel %vm1156, %v1149, %v1153
  %v1158 = vand.u32 2147483647, %v1148
  %vm1159 = vcmp.eq.f32.partialorder %v1158, 8.507059e+37
  %v1160 = vand.u32 %v1148, 2147483648
  %v1161 = vor.u32 1.1754944e-38, %v1160
  %v1162 = vsel %vm1159, %v1161, %v1157
  %v1163 = vmul.f32 1.0, %v1162
  %v1164 = vmul.f32 %v1143, %v859
  %v1165 = vmul.f32 %v1124, %v1144
  %v1166 = vadd.f32 %v1164, %v1165
  %v1167 = vtanh.pop %v1166
  %v1168 = vmul.f32 %v1163, %v1167
  %s1169 = scalar_lea.vmem [#allocation3], 192
  %v1170 = vld [vmem:[%s1169] sm:$0xff]
  %v1171 = vld [vmem:[%s1169 + $0x8] sm:$0xff]
  %v1172 = vld [vmem:[%s1169 + $0x10] sm:$0xff]
  %v1173 = vld [vmem:[%s1169 + $0x18] sm:$0xff]
  %1174 = vmatpush.msra.mxu0 %v707
  %1175 = vmatpush.msra.mxu0 %v703
  %1176 = vmatpush.msra.mxu0 %v699
  %1177 = vmatpush.msra.mxu0 %v695
  %1178 = vmatpush.msra.mxu0 %v691
  %1179 = vmatpush.msra.mxu0 %v687
  %1180 = vmatpush.msra.mxu0 %v683
  %1181 = vmatpush.msra.mxu0 %v679
  %1182 = vmatpush.msra.mxu0 %v675
  %1183 = vmatpush.msra.mxu0 %v671
  %1184 = vmatpush.msra.mxu0 %v667
  %1185 = vmatpush.msra.mxu0 %v663
  %1186 = vmatpush.msra.mxu0 %v659
  %1187 = vmatpush.msra.mxu0 %v655
  %1188 = vmatpush.msra.mxu0 %v651
  %1189 = vmatpush.msra.mxu0 %v647
  %1190 = vmatmul.f32.gmra.mxu0 %v1013
  %v1191 = vpop.f32.mrf.mxu0
  %v1192 = vadd.f32 0.0, %v1191
  %1193 = vdwg.mxu0
  %1194 = vmatpush.msra.mxu0 %v708
  %1195 = vmatpush.msra.mxu0 %v704
  %1196 = vmatpush.msra.mxu0 %v700
  %1197 = vmatpush.msra.mxu0 %v696
  %1198 = vmatpush.msra.mxu0 %v692
  %1199 = vmatpush.msra.mxu0 %v688
  %1200 = vmatpush.msra.mxu0 %v684
  %1201 = vmatpush.msra.mxu0 %v680
  %1202 = vmatpush.msra.mxu0 %v676
  %1203 = vmatpush.msra.mxu0 %v672
  %1204 = vmatpush.msra.mxu0 %v668
  %1205 = vmatpush.msra.mxu0 %v664
  %1206 = vmatpush.msra.mxu0 %v660
  %1207 = vmatpush.msra.mxu0 %v656
  %1208 = vmatpush.msra.mxu0 %v652
  %1209 = vmatpush.msra.mxu0 %v648
  %1210 = vmatmul.f32.gmra.mxu0 %v1013
  %v1211 = vpop.f32.mrf.mxu0
  %v1212 = vadd.f32 0.0, %v1211
  %1213 = vdwg.mxu0
  %1214 = vmatpush.msra.mxu0 %v709
  %1215 = vmatpush.msra.mxu0 %v705
  %1216 = vmatpush.msra.mxu0 %v701
  %1217 = vmatpush.msra.mxu0 %v697
  %1218 = vmatpush.msra.mxu0 %v693
  %1219 = vmatpush.msra.mxu0 %v689
  %1220 = vmatpush.msra.mxu0 %v685
  %1221 = vmatpush.msra.mxu0 %v681
  %1222 = vmatpush.msra.mxu0 %v677
  %1223 = vmatpush.msra.mxu0 %v673
  %1224 = vmatpush.msra.mxu0 %v669
  %1225 = vmatpush.msra.mxu0 %v665
  %1226 = vmatpush.msra.mxu0 %v661
  %1227 = vmatpush.msra.mxu0 %v657
  %1228 = vmatpush.msra.mxu0 %v653
  %1229 = vmatpush.msra.mxu0 %v649
  %1230 = vmatmul.f32.gmra.mxu0 %v1013
  %v1231 = vpop.f32.mrf.mxu0
  %v1232 = vadd.f32 0.0, %v1231
  %1233 = vdwg.mxu0
  %1234 = vmatpush.msra.mxu0 %v710
  %1235 = vmatpush.msra.mxu0 %v706
  %1236 = vmatpush.msra.mxu0 %v702
  %1237 = vmatpush.msra.mxu0 %v698
  %1238 = vmatpush.msra.mxu0 %v694
  %1239 = vmatpush.msra.mxu0 %v690
  %1240 = vmatpush.msra.mxu0 %v686
  %1241 = vmatpush.msra.mxu0 %v682
  %1242 = vmatpush.msra.mxu0 %v678
  %1243 = vmatpush.msra.mxu0 %v674
  %1244 = vmatpush.msra.mxu0 %v670
  %1245 = vmatpush.msra.mxu0 %v666
  %1246 = vmatpush.msra.mxu0 %v662
  %1247 = vmatpush.msra.mxu0 %v658
  %1248 = vmatpush.msra.mxu0 %v654
  %1249 = vmatpush.msra.mxu0 %v650
  %1250 = vmatmul.f32.gmra.mxu0 %v1013
  %v1251 = vpop.f32.mrf.mxu0
  %v1252 = vadd.f32 0.0, %v1251
  %1253 = vdwg.mxu0
  %v1254 = vadd.f32 %v1170, %v1192
  %v1255 = vadd.f32 %v1171, %v1212
  %v1256 = vadd.f32 %v1172, %v1232
  %v1257 = vadd.f32 %v1173, %v1252
  %v1258 = vxor.u32 %v1254, 2147483648
  %v1259 = vmul.f32 %v1258, 1.442695
  %v1260 = vpow.pop %v1259
  %v1261 = vadd.f32 %v1260, 1.0
  %v1262 = vrcp.pop %v1261
  %v1263 = vmul.f32 %v1261, %v1262
  %v1264 = vsub.f32 1.0, %v1263
  %v1265 = vmul.f32 %v1262, %v1264
  %v1266 = vadd.f32 %v1262, %v1265
  %vm1267 = vweird.f32 %v1261
  %vm1268 = vweird.f32 %v1262
  %vm1269 = vmor %vm1267, %vm1268
  %v1270 = vsel %vm1269, %v1262, %v1266
  %v1271 = vand.u32 2147483647, %v1261
  %vm1272 = vcmp.eq.f32.partialorder %v1271, 8.507059e+37
  %v1273 = vand.u32 %v1261, 2147483648
  %v1274 = vor.u32 1.1754944e-38, %v1273
  %v1275 = vsel %vm1272, %v1274, %v1270
  %v1276 = vmul.f32 1.0, %v1275
  %v1277 = vxor.u32 %v1255, 2147483648
  %v1278 = vmul.f32 %v1277, 1.442695
  %v1279 = vpow.pop %v1278
  %v1280 = vadd.f32 %v1279, 1.0
  %v1281 = vrcp.pop %v1280
  %v1282 = vmul.f32 %v1280, %v1281
  %v1283 = vsub.f32 1.0, %v1282
  %v1284 = vmul.f32 %v1281, %v1283
  %v1285 = vadd.f32 %v1281, %v1284
  %vm1286 = vweird.f32 %v1280
  %vm1287 = vweird.f32 %v1281
  %vm1288 = vmor %vm1286, %vm1287
  %v1289 = vsel %vm1288, %v1281, %v1285
  %v1290 = vand.u32 2147483647, %v1280
  %vm1291 = vcmp.eq.f32.partialorder %v1290, 8.507059e+37
  %v1292 = vand.u32 %v1280, 2147483648
  %v1293 = vor.u32 1.1754944e-38, %v1292
  %v1294 = vsel %vm1291, %v1293, %v1289
  %v1295 = vmul.f32 1.0, %v1294
  %v1296 = vtanh.pop %v1256
  %v1297 = vxor.u32 %v1257, 2147483648
  %v1298 = vmul.f32 %v1297, 1.442695
  %v1299 = vpow.pop %v1298
  %v1300 = vadd.f32 %v1299, 1.0
  %v1301 = vrcp.pop %v1300
  %v1302 = vmul.f32 %v1300, %v1301
  %v1303 = vsub.f32 1.0, %v1302
  %v1304 = vmul.f32 %v1301, %v1303
  %v1305 = vadd.f32 %v1301, %v1304
  %vm1306 = vweird.f32 %v1300
  %vm1307 = vweird.f32 %v1301
  %vm1308 = vmor %vm1306, %vm1307
  %v1309 = vsel %vm1308, %v1301, %v1305
  %v1310 = vand.u32 2147483647, %v1300
  %vm1311 = vcmp.eq.f32.partialorder %v1310, 8.507059e+37
  %v1312 = vand.u32 %v1300, 2147483648
  %v1313 = vor.u32 1.1754944e-38, %v1312
  %v1314 = vsel %vm1311, %v1313, %v1309
  %v1315 = vmul.f32 1.0, %v1314
  %v1316 = vmul.f32 %v1295, %v1011
  %v1317 = vmul.f32 %v1276, %v1296
  %v1318 = vadd.f32 %v1316, %v1317
  %v1319 = vtanh.pop %v1318
  %v1320 = vmul.f32 %v1315, %v1319
  %s1321 = scalar_lea.vmem [#allocation4], 8
  %1322 = vst [vmem:[%s1321] sm:$0xff] %v1168
  %s1323 = scalar_lea.vmem [#allocation5], 48
  %1324 = vst [vmem:[%s1323] sm:$0xff] %v1320
  %s1325 = scalar_lea.vmem [#allocation2], 64
  %v1326 = vld [vmem:[%s1325] sm:$0xff]
  %v1327 = vld [vmem:[%s1325 + $0x8] sm:$0xff]
  %v1328 = vld [vmem:[%s1325 + $0x10] sm:$0xff]
  %v1329 = vld [vmem:[%s1325 + $0x18] sm:$0xff]
  %1330 = vmatpush.msra.mxu0 %v643
  %1331 = vmatpush.msra.mxu0 %v639
  %1332 = vmatpush.msra.mxu0 %v635
  %1333 = vmatpush.msra.mxu0 %v631
  %1334 = vmatpush.msra.mxu0 %v627
  %1335 = vmatpush.msra.mxu0 %v623
  %1336 = vmatpush.msra.mxu0 %v619
  %1337 = vmatpush.msra.mxu0 %v615
  %1338 = vmatpush.msra.mxu0 %v611
  %1339 = vmatpush.msra.mxu0 %v607
  %1340 = vmatpush.msra.mxu0 %v603
  %1341 = vmatpush.msra.mxu0 %v599
  %1342 = vmatpush.msra.mxu0 %v595
  %1343 = vmatpush.msra.mxu0 %v591
  %1344 = vmatpush.msra.mxu0 %v587
  %1345 = vmatpush.msra.mxu0 %v583
  %1346 = vmatmul.f32.gmra.mxu0 %v1168
  %v1347 = vpop.f32.mrf.mxu0
  %v1348 = vadd.f32 0.0, %v1347
  %1349 = vdwg.mxu0
  %1350 = vmatpush.msra.mxu0 %v644
  %1351 = vmatpush.msra.mxu0 %v640
  %1352 = vmatpush.msra.mxu0 %v636
  %1353 = vmatpush.msra.mxu0 %v632
  %1354 = vmatpush.msra.mxu0 %v628
  %1355 = vmatpush.msra.mxu0 %v624
  %1356 = vmatpush.msra.mxu0 %v620
  %1357 = vmatpush.msra.mxu0 %v616
  %1358 = vmatpush.msra.mxu0 %v612
  %1359 = vmatpush.msra.mxu0 %v608
  %1360 = vmatpush.msra.mxu0 %v604
  %1361 = vmatpush.msra.mxu0 %v600
  %1362 = vmatpush.msra.mxu0 %v596
  %1363 = vmatpush.msra.mxu0 %v592
  %1364 = vmatpush.msra.mxu0 %v588
  %1365 = vmatpush.msra.mxu0 %v584
  %1366 = vmatmul.f32.gmra.mxu0 %v1168
  %v1367 = vpop.f32.mrf.mxu0
  %v1368 = vadd.f32 0.0, %v1367
  %1369 = vdwg.mxu0
  %1370 = vmatpush.msra.mxu0 %v645
  %1371 = vmatpush.msra.mxu0 %v641
  %1372 = vmatpush.msra.mxu0 %v637
  %1373 = vmatpush.msra.mxu0 %v633
  %1374 = vmatpush.msra.mxu0 %v629
  %1375 = vmatpush.msra.mxu0 %v625
  %1376 = vmatpush.msra.mxu0 %v621
  %1377 = vmatpush.msra.mxu0 %v617
  %1378 = vmatpush.msra.mxu0 %v613
  %1379 = vmatpush.msra.mxu0 %v609
  %1380 = vmatpush.msra.mxu0 %v605
  %1381 = vmatpush.msra.mxu0 %v601
  %1382 = vmatpush.msra.mxu0 %v597
  %1383 = vmatpush.msra.mxu0 %v593
  %1384 = vmatpush.msra.mxu0 %v589
  %1385 = vmatpush.msra.mxu0 %v585
  %1386 = vmatmul.f32.gmra.mxu0 %v1168
  %v1387 = vpop.f32.mrf.mxu0
  %v1388 = vadd.f32 0.0, %v1387
  %1389 = vdwg.mxu0
  %1390 = vmatpush.msra.mxu0 %v646
  %1391 = vmatpush.msra.mxu0 %v642
  %1392 = vmatpush.msra.mxu0 %v638
  %1393 = vmatpush.msra.mxu0 %v634
  %1394 = vmatpush.msra.mxu0 %v630
  %1395 = vmatpush.msra.mxu0 %v626
  %1396 = vmatpush.msra.mxu0 %v622
  %1397 = vmatpush.msra.mxu0 %v618
  %1398 = vmatpush.msra.mxu0 %v614
  %1399 = vmatpush.msra.mxu0 %v610
  %1400 = vmatpush.msra.mxu0 %v606
  %1401 = vmatpush.msra.mxu0 %v602
  %1402 = vmatpush.msra.mxu0 %v598
  %1403 = vmatpush.msra.mxu0 %v594
  %1404 = vmatpush.msra.mxu0 %v590
  %1405 = vmatpush.msra.mxu0 %v586
  %1406 = vmatmul.f32.gmra.mxu0 %v1168
  %v1407 = vpop.f32.mrf.mxu0
  %v1408 = vadd.f32 0.0, %v1407
  %1409 = vdwg.mxu0
  %v1410 = vadd.f32 %v1326, %v1348
  %v1411 = vadd.f32 %v1327, %v1368
  %v1412 = vadd.f32 %v1328, %v1388
  %v1413 = vadd.f32 %v1329, %v1408
  %v1414 = vxor.u32 %v1410, 2147483648
  %v1415 = vmul.f32 %v1414, 1.442695
  %v1416 = vpow.pop %v1415
  %v1417 = vadd.f32 %v1416, 1.0
  %v1418 = vrcp.pop %v1417
  %v1419 = vmul.f32 %v1417, %v1418
  %v1420 = vsub.f32 1.0, %v1419
  %v1421 = vmul.f32 %v1418, %v1420
  %v1422 = vadd.f32 %v1418, %v1421
  %vm1423 = vweird.f32 %v1417
  %vm1424 = vweird.f32 %v1418
  %vm1425 = vmor %vm1423, %vm1424
  %v1426 = vsel %vm1425, %v1418, %v1422
  %v1427 = vand.u32 2147483647, %v1417
  %vm1428 = vcmp.eq.f32.partialorder %v1427, 8.507059e+37
  %v1429 = vand.u32 %v1417, 2147483648
  %v1430 = vor.u32 1.1754944e-38, %v1429
  %v1431 = vsel %vm1428, %v1430, %v1426
  %v1432 = vmul.f32 1.0, %v1431
  %v1433 = vxor.u32 %v1411, 2147483648
  %v1434 = vmul.f32 %v1433, 1.442695
  %v1435 = vpow.pop %v1434
  %v1436 = vadd.f32 %v1435, 1.0
  %v1437 = vrcp.pop %v1436
  %v1438 = vmul.f32 %v1436, %v1437
  %v1439 = vsub.f32 1.0, %v1438
  %v1440 = vmul.f32 %v1437, %v1439
  %v1441 = vadd.f32 %v1437, %v1440
  %vm1442 = vweird.f32 %v1436
  %vm1443 = vweird.f32 %v1437
  %vm1444 = vmor %vm1442, %vm1443
  %v1445 = vsel %vm1444, %v1437, %v1441
  %v1446 = vand.u32 2147483647, %v1436
  %vm1447 = vcmp.eq.f32.partialorder %v1446, 8.507059e+37
  %v1448 = vand.u32 %v1436, 2147483648
  %v1449 = vor.u32 1.1754944e-38, %v1448
  %v1450 = vsel %vm1447, %v1449, %v1445
  %v1451 = vmul.f32 1.0, %v1450
  %v1452 = vtanh.pop %v1412
  %v1453 = vxor.u32 %v1413, 2147483648
  %v1454 = vmul.f32 %v1453, 1.442695
  %v1455 = vpow.pop %v1454
  %v1456 = vadd.f32 %v1455, 1.0
  %v1457 = vrcp.pop %v1456
  %v1458 = vmul.f32 %v1456, %v1457
  %v1459 = vsub.f32 1.0, %v1458
  %v1460 = vmul.f32 %v1457, %v1459
  %v1461 = vadd.f32 %v1457, %v1460
  %vm1462 = vweird.f32 %v1456
  %vm1463 = vweird.f32 %v1457
  %vm1464 = vmor %vm1462, %vm1463
  %v1465 = vsel %vm1464, %v1457, %v1461
  %v1466 = vand.u32 2147483647, %v1456
  %vm1467 = vcmp.eq.f32.partialorder %v1466, 8.507059e+37
  %v1468 = vand.u32 %v1456, 2147483648
  %v1469 = vor.u32 1.1754944e-38, %v1468
  %v1470 = vsel %vm1467, %v1469, %v1465
  %v1471 = vmul.f32 1.0, %v1470
  %v1472 = vmul.f32 %v1451, %v1166
  %v1473 = vmul.f32 %v1432, %v1452
  %v1474 = vadd.f32 %v1472, %v1473
  %v1475 = vtanh.pop %v1474
  %v1476 = vmul.f32 %v1471, %v1475
  %s1477 = scalar_lea.vmem [#allocation3], 160
  %v1478 = vld [vmem:[%s1477] sm:$0xff]
  %v1479 = vld [vmem:[%s1477 + $0x8] sm:$0xff]
  %v1480 = vld [vmem:[%s1477 + $0x10] sm:$0xff]
  %v1481 = vld [vmem:[%s1477 + $0x18] sm:$0xff]
  %1482 = vmatpush.msra.mxu0 %v707
  %1483 = vmatpush.msra.mxu0 %v703
  %1484 = vmatpush.msra.mxu0 %v699
  %1485 = vmatpush.msra.mxu0 %v695
  %1486 = vmatpush.msra.mxu0 %v691
  %1487 = vmatpush.msra.mxu0 %v687
  %1488 = vmatpush.msra.mxu0 %v683
  %1489 = vmatpush.msra.mxu0 %v679
  %1490 = vmatpush.msra.mxu0 %v675
  %1491 = vmatpush.msra.mxu0 %v671
  %1492 = vmatpush.msra.mxu0 %v667
  %1493 = vmatpush.msra.mxu0 %v663
  %1494 = vmatpush.msra.mxu0 %v659
  %1495 = vmatpush.msra.mxu0 %v655
  %1496 = vmatpush.msra.mxu0 %v651
  %1497 = vmatpush.msra.mxu0 %v647
  %1498 = vmatmul.f32.gmra.mxu0 %v1320
  %v1499 = vpop.f32.mrf.mxu0
  %v1500 = vadd.f32 0.0, %v1499
  %1501 = vdwg.mxu0
  %1502 = vmatpush.msra.mxu0 %v708
  %1503 = vmatpush.msra.mxu0 %v704
  %1504 = vmatpush.msra.mxu0 %v700
  %1505 = vmatpush.msra.mxu0 %v696
  %1506 = vmatpush.msra.mxu0 %v692
  %1507 = vmatpush.msra.mxu0 %v688
  %1508 = vmatpush.msra.mxu0 %v684
  %1509 = vmatpush.msra.mxu0 %v680
  %1510 = vmatpush.msra.mxu0 %v676
  %1511 = vmatpush.msra.mxu0 %v672
  %1512 = vmatpush.msra.mxu0 %v668
  %1513 = vmatpush.msra.mxu0 %v664
  %1514 = vmatpush.msra.mxu0 %v660
  %1515 = vmatpush.msra.mxu0 %v656
  %1516 = vmatpush.msra.mxu0 %v652
  %1517 = vmatpush.msra.mxu0 %v648
  %1518 = vmatmul.f32.gmra.mxu0 %v1320
  %v1519 = vpop.f32.mrf.mxu0
  %v1520 = vadd.f32 0.0, %v1519
  %1521 = vdwg.mxu0
  %1522 = vmatpush.msra.mxu0 %v709
  %1523 = vmatpush.msra.mxu0 %v705
  %1524 = vmatpush.msra.mxu0 %v701
  %1525 = vmatpush.msra.mxu0 %v697
  %1526 = vmatpush.msra.mxu0 %v693
  %1527 = vmatpush.msra.mxu0 %v689
  %1528 = vmatpush.msra.mxu0 %v685
  %1529 = vmatpush.msra.mxu0 %v681
  %1530 = vmatpush.msra.mxu0 %v677
  %1531 = vmatpush.msra.mxu0 %v673
  %1532 = vmatpush.msra.mxu0 %v669
  %1533 = vmatpush.msra.mxu0 %v665
  %1534 = vmatpush.msra.mxu0 %v661
  %1535 = vmatpush.msra.mxu0 %v657
  %1536 = vmatpush.msra.mxu0 %v653
  %1537 = vmatpush.msra.mxu0 %v649
  %1538 = vmatmul.f32.gmra.mxu0 %v1320
  %v1539 = vpop.f32.mrf.mxu0
  %v1540 = vadd.f32 0.0, %v1539
  %1541 = vdwg.mxu0
  %1542 = vmatpush.msra.mxu0 %v710
  %1543 = vmatpush.msra.mxu0 %v706
  %1544 = vmatpush.msra.mxu0 %v702
  %1545 = vmatpush.msra.mxu0 %v698
  %1546 = vmatpush.msra.mxu0 %v694
  %1547 = vmatpush.msra.mxu0 %v690
  %1548 = vmatpush.msra.mxu0 %v686
  %1549 = vmatpush.msra.mxu0 %v682
  %1550 = vmatpush.msra.mxu0 %v678
  %1551 = vmatpush.msra.mxu0 %v674
  %1552 = vmatpush.msra.mxu0 %v670
  %1553 = vmatpush.msra.mxu0 %v666
  %1554 = vmatpush.msra.mxu0 %v662
  %1555 = vmatpush.msra.mxu0 %v658
  %1556 = vmatpush.msra.mxu0 %v654
  %1557 = vmatpush.msra.mxu0 %v650
  %1558 = vmatmul.f32.gmra.mxu0 %v1320
  %v1559 = vpop.f32.mrf.mxu0
  %v1560 = vadd.f32 0.0, %v1559
  %1561 = vdwg.mxu0
  %v1562 = vadd.f32 %v1478, %v1500
  %v1563 = vadd.f32 %v1479, %v1520
  %v1564 = vadd.f32 %v1480, %v1540
  %v1565 = vadd.f32 %v1481, %v1560
  %v1566 = vxor.u32 %v1562, 2147483648
  %v1567 = vmul.f32 %v1566, 1.442695
  %v1568 = vpow.pop %v1567
  %v1569 = vadd.f32 %v1568, 1.0
  %v1570 = vrcp.pop %v1569
  %v1571 = vmul.f32 %v1569, %v1570
  %v1572 = vsub.f32 1.0, %v1571
  %v1573 = vmul.f32 %v1570, %v1572
  %v1574 = vadd.f32 %v1570, %v1573
  %vm1575 = vweird.f32 %v1569
  %vm1576 = vweird.f32 %v1570
  %vm1577 = vmor %vm1575, %vm1576
  %v1578 = vsel %vm1577, %v1570, %v1574
  %v1579 = vand.u32 2147483647, %v1569
  %vm1580 = vcmp.eq.f32.partialorder %v1579, 8.507059e+37
  %v1581 = vand.u32 %v1569, 2147483648
  %v1582 = vor.u32 1.1754944e-38, %v1581
  %v1583 = vsel %vm1580, %v1582, %v1578
  %v1584 = vmul.f32 1.0, %v1583
  %v1585 = vxor.u32 %v1563, 2147483648
  %v1586 = vmul.f32 %v1585, 1.442695
  %v1587 = vpow.pop %v1586
  %v1588 = vadd.f32 %v1587, 1.0
  %v1589 = vrcp.pop %v1588
  %v1590 = vmul.f32 %v1588, %v1589
  %v1591 = vsub.f32 1.0, %v1590
  %v1592 = vmul.f32 %v1589, %v1591
  %v1593 = vadd.f32 %v1589, %v1592
  %vm1594 = vweird.f32 %v1588
  %vm1595 = vweird.f32 %v1589
  %vm1596 = vmor %vm1594, %vm1595
  %v1597 = vsel %vm1596, %v1589, %v1593
  %v1598 = vand.u32 2147483647, %v1588
  %vm1599 = vcmp.eq.f32.partialorder %v1598, 8.507059e+37
  %v1600 = vand.u32 %v1588, 2147483648
  %v1601 = vor.u32 1.1754944e-38, %v1600
  %v1602 = vsel %vm1599, %v1601, %v1597
  %v1603 = vmul.f32 1.0, %v1602
  %v1604 = vtanh.pop %v1564
  %v1605 = vxor.u32 %v1565, 2147483648
  %v1606 = vmul.f32 %v1605, 1.442695
  %v1607 = vpow.pop %v1606
  %v1608 = vadd.f32 %v1607, 1.0
  %v1609 = vrcp.pop %v1608
  %v1610 = vmul.f32 %v1608, %v1609
  %v1611 = vsub.f32 1.0, %v1610
  %v1612 = vmul.f32 %v1609, %v1611
  %v1613 = vadd.f32 %v1609, %v1612
  %vm1614 = vweird.f32 %v1608
  %vm1615 = vweird.f32 %v1609
  %vm1616 = vmor %vm1614, %vm1615
  %v1617 = vsel %vm1616, %v1609, %v1613
  %v1618 = vand.u32 2147483647, %v1608
  %vm1619 = vcmp.eq.f32.partialorder %v1618, 8.507059e+37
  %v1620 = vand.u32 %v1608, 2147483648
  %v1621 = vor.u32 1.1754944e-38, %v1620
  %v1622 = vsel %vm1619, %v1621, %v1617
  %v1623 = vmul.f32 1.0, %v1622
  %v1624 = vmul.f32 %v1603, %v1318
  %v1625 = vmul.f32 %v1584, %v1604
  %v1626 = vadd.f32 %v1624, %v1625
  %v1627 = vtanh.pop %v1626
  %v1628 = vmul.f32 %v1623, %v1627
  %s1629 = scalar_lea.vmem [#allocation4], 16
  %1630 = vst [vmem:[%s1629] sm:$0xff] %v1476
  %s1631 = scalar_lea.vmem [#allocation5], 40
  %1632 = vst [vmem:[%s1631] sm:$0xff] %v1628
  %s1633 = scalar_lea.vmem [#allocation2], 96
  %v1634 = vld [vmem:[%s1633] sm:$0xff]
  %v1635 = vld [vmem:[%s1633 + $0x8] sm:$0xff]
  %v1636 = vld [vmem:[%s1633 + $0x10] sm:$0xff]
  %v1637 = vld [vmem:[%s1633 + $0x18] sm:$0xff]
  %1638 = vmatpush.msra.mxu0 %v643
  %1639 = vmatpush.msra.mxu0 %v639
  %1640 = vmatpush.msra.mxu0 %v635
  %1641 = vmatpush.msra.mxu0 %v631
  %1642 = vmatpush.msra.mxu0 %v627
  %1643 = vmatpush.msra.mxu0 %v623
  %1644 = vmatpush.msra.mxu0 %v619
  %1645 = vmatpush.msra.mxu0 %v615
  %1646 = vmatpush.msra.mxu0 %v611
  %1647 = vmatpush.msra.mxu0 %v607
  %1648 = vmatpush.msra.mxu0 %v603
  %1649 = vmatpush.msra.mxu0 %v599
  %1650 = vmatpush.msra.mxu0 %v595
  %1651 = vmatpush.msra.mxu0 %v591
  %1652 = vmatpush.msra.mxu0 %v587
  %1653 = vmatpush.msra.mxu0 %v583
  %1654 = vmatmul.f32.gmra.mxu0 %v1476
  %v1655 = vpop.f32.mrf.mxu0
  %v1656 = vadd.f32 0.0, %v1655
  %1657 = vdwg.mxu0
  %1658 = vmatpush.msra.mxu0 %v644
  %1659 = vmatpush.msra.mxu0 %v640
  %1660 = vmatpush.msra.mxu0 %v636
  %1661 = vmatpush.msra.mxu0 %v632
  %1662 = vmatpush.msra.mxu0 %v628
  %1663 = vmatpush.msra.mxu0 %v624
  %1664 = vmatpush.msra.mxu0 %v620
  %1665 = vmatpush.msra.mxu0 %v616
  %1666 = vmatpush.msra.mxu0 %v612
  %1667 = vmatpush.msra.mxu0 %v608
  %1668 = vmatpush.msra.mxu0 %v604
  %1669 = vmatpush.msra.mxu0 %v600
  %1670 = vmatpush.msra.mxu0 %v596
  %1671 = vmatpush.msra.mxu0 %v592
  %1672 = vmatpush.msra.mxu0 %v588
  %1673 = vmatpush.msra.mxu0 %v584
  %1674 = vmatmul.f32.gmra.mxu0 %v1476
  %v1675 = vpop.f32.mrf.mxu0
  %v1676 = vadd.f32 0.0, %v1675
  %1677 = vdwg.mxu0
  %1678 = vmatpush.msra.mxu0 %v645
  %1679 = vmatpush.msra.mxu0 %v641
  %1680 = vmatpush.msra.mxu0 %v637
  %1681 = vmatpush.msra.mxu0 %v633
  %1682 = vmatpush.msra.mxu0 %v629
  %1683 = vmatpush.msra.mxu0 %v625
  %1684 = vmatpush.msra.mxu0 %v621
  %1685 = vmatpush.msra.mxu0 %v617
  %1686 = vmatpush.msra.mxu0 %v613
  %1687 = vmatpush.msra.mxu0 %v609
  %1688 = vmatpush.msra.mxu0 %v605
  %1689 = vmatpush.msra.mxu0 %v601
  %1690 = vmatpush.msra.mxu0 %v597
  %1691 = vmatpush.msra.mxu0 %v593
  %1692 = vmatpush.msra.mxu0 %v589
  %1693 = vmatpush.msra.mxu0 %v585
  %1694 = vmatmul.f32.gmra.mxu0 %v1476
  %v1695 = vpop.f32.mrf.mxu0
  %v1696 = vadd.f32 0.0, %v1695
  %1697 = vdwg.mxu0
  %1698 = vmatpush.msra.mxu0 %v646
  %1699 = vmatpush.msra.mxu0 %v642
  %1700 = vmatpush.msra.mxu0 %v638
  %1701 = vmatpush.msra.mxu0 %v634
  %1702 = vmatpush.msra.mxu0 %v630
  %1703 = vmatpush.msra.mxu0 %v626
  %1704 = vmatpush.msra.mxu0 %v622
  %1705 = vmatpush.msra.mxu0 %v618
  %1706 = vmatpush.msra.mxu0 %v614
  %1707 = vmatpush.msra.mxu0 %v610
  %1708 = vmatpush.msra.mxu0 %v606
  %1709 = vmatpush.msra.mxu0 %v602
  %1710 = vmatpush.msra.mxu0 %v598
  %1711 = vmatpush.msra.mxu0 %v594
  %1712 = vmatpush.msra.mxu0 %v590
  %1713 = vmatpush.msra.mxu0 %v586
  %1714 = vmatmul.f32.gmra.mxu0 %v1476
  %v1715 = vpop.f32.mrf.mxu0
  %v1716 = vadd.f32 0.0, %v1715
  %1717 = vdwg.mxu0
  %v1718 = vadd.f32 %v1634, %v1656
  %v1719 = vadd.f32 %v1635, %v1676
  %v1720 = vadd.f32 %v1636, %v1696
  %v1721 = vadd.f32 %v1637, %v1716
  %v1722 = vxor.u32 %v1718, 2147483648
  %v1723 = vmul.f32 %v1722, 1.442695
  %v1724 = vpow.pop %v1723
  %v1725 = vadd.f32 %v1724, 1.0
  %v1726 = vrcp.pop %v1725
  %v1727 = vmul.f32 %v1725, %v1726
  %v1728 = vsub.f32 1.0, %v1727
  %v1729 = vmul.f32 %v1726, %v1728
  %v1730 = vadd.f32 %v1726, %v1729
  %vm1731 = vweird.f32 %v1725
  %vm1732 = vweird.f32 %v1726
  %vm1733 = vmor %vm1731, %vm1732
  %v1734 = vsel %vm1733, %v1726, %v1730
  %v1735 = vand.u32 2147483647, %v1725
  %vm1736 = vcmp.eq.f32.partialorder %v1735, 8.507059e+37
  %v1737 = vand.u32 %v1725, 2147483648
  %v1738 = vor.u32 1.1754944e-38, %v1737
  %v1739 = vsel %vm1736, %v1738, %v1734
  %v1740 = vmul.f32 1.0, %v1739
  %v1741 = vxor.u32 %v1719, 2147483648
  %v1742 = vmul.f32 %v1741, 1.442695
  %v1743 = vpow.pop %v1742
  %v1744 = vadd.f32 %v1743, 1.0
  %v1745 = vrcp.pop %v1744
  %v1746 = vmul.f32 %v1744, %v1745
  %v1747 = vsub.f32 1.0, %v1746
  %v1748 = vmul.f32 %v1745, %v1747
  %v1749 = vadd.f32 %v1745, %v1748
  %vm1750 = vweird.f32 %v1744
  %vm1751 = vweird.f32 %v1745
  %vm1752 = vmor %vm1750, %vm1751
  %v1753 = vsel %vm1752, %v1745, %v1749
  %v1754 = vand.u32 2147483647, %v1744
  %vm1755 = vcmp.eq.f32.partialorder %v1754, 8.507059e+37
  %v1756 = vand.u32 %v1744, 2147483648
  %v1757 = vor.u32 1.1754944e-38, %v1756
  %v1758 = vsel %vm1755, %v1757, %v1753
  %v1759 = vmul.f32 1.0, %v1758
  %v1760 = vtanh.pop %v1720
  %v1761 = vxor.u32 %v1721, 2147483648
  %v1762 = vmul.f32 %v1761, 1.442695
  %v1763 = vpow.pop %v1762
  %v1764 = vadd.f32 %v1763, 1.0
  %v1765 = vrcp.pop %v1764
  %v1766 = vmul.f32 %v1764, %v1765
  %v1767 = vsub.f32 1.0, %v1766
  %v1768 = vmul.f32 %v1765, %v1767
  %v1769 = vadd.f32 %v1765, %v1768
  %vm1770 = vweird.f32 %v1764
  %vm1771 = vweird.f32 %v1765
  %vm1772 = vmor %vm1770, %vm1771
  %v1773 = vsel %vm1772, %v1765, %v1769
  %v1774 = vand.u32 2147483647, %v1764
  %vm1775 = vcmp.eq.f32.partialorder %v1774, 8.507059e+37
  %v1776 = vand.u32 %v1764, 2147483648
  %v1777 = vor.u32 1.1754944e-38, %v1776
  %v1778 = vsel %vm1775, %v1777, %v1773
  %v1779 = vmul.f32 1.0, %v1778
  %v1780 = vmul.f32 %v1759, %v1474
  %v1781 = vmul.f32 %v1740, %v1760
  %v1782 = vadd.f32 %v1780, %v1781
  %v1783 = vtanh.pop %v1782
  %v1784 = vmul.f32 %v1779, %v1783
  %s1785 = scalar_lea.vmem [#allocation3], 128
  %v1786 = vld [vmem:[%s1785] sm:$0xff]
  %v1787 = vld [vmem:[%s1785 + $0x8] sm:$0xff]
  %v1788 = vld [vmem:[%s1785 + $0x10] sm:$0xff]
  %v1789 = vld [vmem:[%s1785 + $0x18] sm:$0xff]
  %1790 = vmatpush.msra.mxu0 %v707
  %1791 = vmatpush.msra.mxu0 %v703
  %1792 = vmatpush.msra.mxu0 %v699
  %1793 = vmatpush.msra.mxu0 %v695
  %1794 = vmatpush.msra.mxu0 %v691
  %1795 = vmatpush.msra.mxu0 %v687
  %1796 = vmatpush.msra.mxu0 %v683
  %1797 = vmatpush.msra.mxu0 %v679
  %1798 = vmatpush.msra.mxu0 %v675
  %1799 = vmatpush.msra.mxu0 %v671
  %1800 = vmatpush.msra.mxu0 %v667
  %1801 = vmatpush.msra.mxu0 %v663
  %1802 = vmatpush.msra.mxu0 %v659
  %1803 = vmatpush.msra.mxu0 %v655
  %1804 = vmatpush.msra.mxu0 %v651
  %1805 = vmatpush.msra.mxu0 %v647
  %1806 = vmatmul.f32.gmra.mxu0 %v1628
  %v1807 = vpop.f32.mrf.mxu0
  %v1808 = vadd.f32 0.0, %v1807
  %1809 = vdwg.mxu0
  %1810 = vmatpush.msra.mxu0 %v708
  %1811 = vmatpush.msra.mxu0 %v704
  %1812 = vmatpush.msra.mxu0 %v700
  %1813 = vmatpush.msra.mxu0 %v696
  %1814 = vmatpush.msra.mxu0 %v692
  %1815 = vmatpush.msra.mxu0 %v688
  %1816 = vmatpush.msra.mxu0 %v684
  %1817 = vmatpush.msra.mxu0 %v680
  %1818 = vmatpush.msra.mxu0 %v676
  %1819 = vmatpush.msra.mxu0 %v672
  %1820 = vmatpush.msra.mxu0 %v668
  %1821 = vmatpush.msra.mxu0 %v664
  %1822 = vmatpush.msra.mxu0 %v660
  %1823 = vmatpush.msra.mxu0 %v656
  %1824 = vmatpush.msra.mxu0 %v652
  %1825 = vmatpush.msra.mxu0 %v648
  %1826 = vmatmul.f32.gmra.mxu0 %v1628
  %v1827 = vpop.f32.mrf.mxu0
  %v1828 = vadd.f32 0.0, %v1827
  %1829 = vdwg.mxu0
  %1830 = vmatpush.msra.mxu0 %v709
  %1831 = vmatpush.msra.mxu0 %v705
  %1832 = vmatpush.msra.mxu0 %v701
  %1833 = vmatpush.msra.mxu0 %v697
  %1834 = vmatpush.msra.mxu0 %v693
  %1835 = vmatpush.msra.mxu0 %v689
  %1836 = vmatpush.msra.mxu0 %v685
  %1837 = vmatpush.msra.mxu0 %v681
  %1838 = vmatpush.msra.mxu0 %v677
  %1839 = vmatpush.msra.mxu0 %v673
  %1840 = vmatpush.msra.mxu0 %v669
  %1841 = vmatpush.msra.mxu0 %v665
  %1842 = vmatpush.msra.mxu0 %v661
  %1843 = vmatpush.msra.mxu0 %v657
  %1844 = vmatpush.msra.mxu0 %v653
  %1845 = vmatpush.msra.mxu0 %v649
  %1846 = vmatmul.f32.gmra.mxu0 %v1628
  %v1847 = vpop.f32.mrf.mxu0
  %v1848 = vadd.f32 0.0, %v1847
  %1849 = vdwg.mxu0
  %1850 = vmatpush.msra.mxu0 %v710
  %1851 = vmatpush.msra.mxu0 %v706
  %1852 = vmatpush.msra.mxu0 %v702
  %1853 = vmatpush.msra.mxu0 %v698
  %1854 = vmatpush.msra.mxu0 %v694
  %1855 = vmatpush.msra.mxu0 %v690
  %1856 = vmatpush.msra.mxu0 %v686
  %1857 = vmatpush.msra.mxu0 %v682
  %1858 = vmatpush.msra.mxu0 %v678
  %1859 = vmatpush.msra.mxu0 %v674
  %1860 = vmatpush.msra.mxu0 %v670
  %1861 = vmatpush.msra.mxu0 %v666
  %1862 = vmatpush.msra.mxu0 %v662
  %1863 = vmatpush.msra.mxu0 %v658
  %1864 = vmatpush.msra.mxu0 %v654
  %1865 = vmatpush.msra.mxu0 %v650
  %1866 = vmatmul.f32.gmra.mxu0 %v1628
  %v1867 = vpop.f32.mrf.mxu0
  %v1868 = vadd.f32 0.0, %v1867
  %1869 = vdwg.mxu0
  %v1870 = vadd.f32 %v1786, %v1808
  %v1871 = vadd.f32 %v1787, %v1828
  %v1872 = vadd.f32 %v1788, %v1848
  %v1873 = vadd.f32 %v1789, %v1868
  %v1874 = vxor.u32 %v1870, 2147483648
  %v1875 = vmul.f32 %v1874, 1.442695
  %v1876 = vpow.pop %v1875
  %v1877 = vadd.f32 %v1876, 1.0
  %v1878 = vrcp.pop %v1877
  %v1879 = vmul.f32 %v1877, %v1878
  %v1880 = vsub.f32 1.0, %v1879
  %v1881 = vmul.f32 %v1878, %v1880
  %v1882 = vadd.f32 %v1878, %v1881
  %vm1883 = vweird.f32 %v1877
  %vm1884 = vweird.f32 %v1878
  %vm1885 = vmor %vm1883, %vm1884
  %v1886 = vsel %vm1885, %v1878, %v1882
  %v1887 = vand.u32 2147483647, %v1877
  %vm1888 = vcmp.eq.f32.partialorder %v1887, 8.507059e+37
  %v1889 = vand.u32 %v1877, 2147483648
  %v1890 = vor.u32 1.1754944e-38, %v1889
  %v1891 = vsel %vm1888, %v1890, %v1886
  %v1892 = vmul.f32 1.0, %v1891
  %v1893 = vxor.u32 %v1871, 2147483648
  %v1894 = vmul.f32 %v1893, 1.442695
  %v1895 = vpow.pop %v1894
  %v1896 = vadd.f32 %v1895, 1.0
  %v1897 = vrcp.pop %v1896
  %v1898 = vmul.f32 %v1896, %v1897
  %v1899 = vsub.f32 1.0, %v1898
  %v1900 = vmul.f32 %v1897, %v1899
  %v1901 = vadd.f32 %v1897, %v1900
  %vm1902 = vweird.f32 %v1896
  %vm1903 = vweird.f32 %v1897
  %vm1904 = vmor %vm1902, %vm1903
  %v1905 = vsel %vm1904, %v1897, %v1901
  %v1906 = vand.u32 2147483647, %v1896
  %vm1907 = vcmp.eq.f32.partialorder %v1906, 8.507059e+37
  %v1908 = vand.u32 %v1896, 2147483648
  %v1909 = vor.u32 1.1754944e-38, %v1908
  %v1910 = vsel %vm1907, %v1909, %v1905
  %v1911 = vmul.f32 1.0, %v1910
  %v1912 = vtanh.pop %v1872
  %v1913 = vxor.u32 %v1873, 2147483648
  %v1914 = vmul.f32 %v1913, 1.442695
  %v1915 = vpow.pop %v1914
  %v1916 = vadd.f32 %v1915, 1.0
  %v1917 = vrcp.pop %v1916
  %v1918 = vmul.f32 %v1916, %v1917
  %v1919 = vsub.f32 1.0, %v1918
  %v1920 = vmul.f32 %v1917, %v1919
  %v1921 = vadd.f32 %v1917, %v1920
  %vm1922 = vweird.f32 %v1916
  %vm1923 = vweird.f32 %v1917
  %vm1924 = vmor %vm1922, %vm1923
  %v1925 = vsel %vm1924, %v1917, %v1921
  %v1926 = vand.u32 2147483647, %v1916
  %vm1927 = vcmp.eq.f32.partialorder %v1926, 8.507059e+37
  %v1928 = vand.u32 %v1916, 2147483648
  %v1929 = vor.u32 1.1754944e-38, %v1928
  %v1930 = vsel %vm1927, %v1929, %v1925
  %v1931 = vmul.f32 1.0, %v1930
  %v1932 = vmul.f32 %v1911, %v1626
  %v1933 = vmul.f32 %v1892, %v1912
  %v1934 = vadd.f32 %v1932, %v1933
  %v1935 = vtanh.pop %v1934
  %v1936 = vmul.f32 %v1931, %v1935
  %s1937 = scalar_lea.vmem [#allocation4], 24
  %1938 = vst [vmem:[%s1937] sm:$0xff] %v1784
  %s1939 = scalar_lea.vmem [#allocation5], 32
  %1940 = vst [vmem:[%s1939] sm:$0xff] %v1936
  %s1941 = scalar_lea.vmem [#allocation2], 128
  %v1942 = vld [vmem:[%s1941] sm:$0xff]
  %v1943 = vld [vmem:[%s1941 + $0x8] sm:$0xff]
  %v1944 = vld [vmem:[%s1941 + $0x10] sm:$0xff]
  %v1945 = vld [vmem:[%s1941 + $0x18] sm:$0xff]
  %1946 = vmatpush.msra.mxu0 %v643
  %1947 = vmatpush.msra.mxu0 %v639
  %1948 = vmatpush.msra.mxu0 %v635
  %1949 = vmatpush.msra.mxu0 %v631
  %1950 = vmatpush.msra.mxu0 %v627
  %1951 = vmatpush.msra.mxu0 %v623
  %1952 = vmatpush.msra.mxu0 %v619
  %1953 = vmatpush.msra.mxu0 %v615
  %1954 = vmatpush.msra.mxu0 %v611
  %1955 = vmatpush.msra.mxu0 %v607
  %1956 = vmatpush.msra.mxu0 %v603
  %1957 = vmatpush.msra.mxu0 %v599
  %1958 = vmatpush.msra.mxu0 %v595
  %1959 = vmatpush.msra.mxu0 %v591
  %1960 = vmatpush.msra.mxu0 %v587
  %1961 = vmatpush.msra.mxu0 %v583
  %1962 = vmatmul.f32.gmra.mxu0 %v1784
  %v1963 = vpop.f32.mrf.mxu0
  %v1964 = vadd.f32 0.0, %v1963
  %1965 = vdwg.mxu0
  %1966 = vmatpush.msra.mxu0 %v644
  %1967 = vmatpush.msra.mxu0 %v640
  %1968 = vmatpush.msra.mxu0 %v636
  %1969 = vmatpush.msra.mxu0 %v632
  %1970 = vmatpush.msra.mxu0 %v628
  %1971 = vmatpush.msra.mxu0 %v624
  %1972 = vmatpush.msra.mxu0 %v620
  %1973 = vmatpush.msra.mxu0 %v616
  %1974 = vmatpush.msra.mxu0 %v612
  %1975 = vmatpush.msra.mxu0 %v608
  %1976 = vmatpush.msra.mxu0 %v604
  %1977 = vmatpush.msra.mxu0 %v600
  %1978 = vmatpush.msra.mxu0 %v596
  %1979 = vmatpush.msra.mxu0 %v592
  %1980 = vmatpush.msra.mxu0 %v588
  %1981 = vmatpush.msra.mxu0 %v584
  %1982 = vmatmul.f32.gmra.mxu0 %v1784
  %v1983 = vpop.f32.mrf.mxu0
  %v1984 = vadd.f32 0.0, %v1983
  %1985 = vdwg.mxu0
  %1986 = vmatpush.msra.mxu0 %v645
  %1987 = vmatpush.msra.mxu0 %v641
  %1988 = vmatpush.msra.mxu0 %v637
  %1989 = vmatpush.msra.mxu0 %v633
  %1990 = vmatpush.msra.mxu0 %v629
  %1991 = vmatpush.msra.mxu0 %v625
  %1992 = vmatpush.msra.mxu0 %v621
  %1993 = vmatpush.msra.mxu0 %v617
  %1994 = vmatpush.msra.mxu0 %v613
  %1995 = vmatpush.msra.mxu0 %v609
  %1996 = vmatpush.msra.mxu0 %v605
  %1997 = vmatpush.msra.mxu0 %v601
  %1998 = vmatpush.msra.mxu0 %v597
  %1999 = vmatpush.msra.mxu0 %v593
  %2000 = vmatpush.msra.mxu0 %v589
  %2001 = vmatpush.msra.mxu0 %v585
  %2002 = vmatmul.f32.gmra.mxu0 %v1784
  %v2003 = vpop.f32.mrf.mxu0
  %v2004 = vadd.f32 0.0, %v2003
  %2005 = vdwg.mxu0
  %2006 = vmatpush.msra.mxu0 %v646
  %2007 = vmatpush.msra.mxu0 %v642
  %2008 = vmatpush.msra.mxu0 %v638
  %2009 = vmatpush.msra.mxu0 %v634
  %2010 = vmatpush.msra.mxu0 %v630
  %2011 = vmatpush.msra.mxu0 %v626
  %2012 = vmatpush.msra.mxu0 %v622
  %2013 = vmatpush.msra.mxu0 %v618
  %2014 = vmatpush.msra.mxu0 %v614
  %2015 = vmatpush.msra.mxu0 %v610
  %2016 = vmatpush.msra.mxu0 %v606
  %2017 = vmatpush.msra.mxu0 %v602
  %2018 = vmatpush.msra.mxu0 %v598
  %2019 = vmatpush.msra.mxu0 %v594
  %2020 = vmatpush.msra.mxu0 %v590
  %2021 = vmatpush.msra.mxu0 %v586
  %2022 = vmatmul.f32.gmra.mxu0 %v1784
  %v2023 = vpop.f32.mrf.mxu0
  %v2024 = vadd.f32 0.0, %v2023
  %2025 = vdwg.mxu0
  %v2026 = vadd.f32 %v1942, %v1964
  %v2027 = vadd.f32 %v1943, %v1984
  %v2028 = vadd.f32 %v1944, %v2004
  %v2029 = vadd.f32 %v1945, %v2024
  %v2030 = vxor.u32 %v2026, 2147483648
  %v2031 = vmul.f32 %v2030, 1.442695
  %v2032 = vpow.pop %v2031
  %v2033 = vadd.f32 %v2032, 1.0
  %v2034 = vrcp.pop %v2033
  %v2035 = vmul.f32 %v2033, %v2034
  %v2036 = vsub.f32 1.0, %v2035
  %v2037 = vmul.f32 %v2034, %v2036
  %v2038 = vadd.f32 %v2034, %v2037
  %vm2039 = vweird.f32 %v2033
  %vm2040 = vweird.f32 %v2034
  %vm2041 = vmor %vm2039, %vm2040
  %v2042 = vsel %vm2041, %v2034, %v2038
  %v2043 = vand.u32 2147483647, %v2033
  %vm2044 = vcmp.eq.f32.partialorder %v2043, 8.507059e+37
  %v2045 = vand.u32 %v2033, 2147483648
  %v2046 = vor.u32 1.1754944e-38, %v2045
  %v2047 = vsel %vm2044, %v2046, %v2042
  %v2048 = vmul.f32 1.0, %v2047
  %v2049 = vxor.u32 %v2027, 2147483648
  %v2050 = vmul.f32 %v2049, 1.442695
  %v2051 = vpow.pop %v2050
  %v2052 = vadd.f32 %v2051, 1.0
  %v2053 = vrcp.pop %v2052
  %v2054 = vmul.f32 %v2052, %v2053
  %v2055 = vsub.f32 1.0, %v2054
  %v2056 = vmul.f32 %v2053, %v2055
  %v2057 = vadd.f32 %v2053, %v2056
  %vm2058 = vweird.f32 %v2052
  %vm2059 = vweird.f32 %v2053
  %vm2060 = vmor %vm2058, %vm2059
  %v2061 = vsel %vm2060, %v2053, %v2057
  %v2062 = vand.u32 2147483647, %v2052
  %vm2063 = vcmp.eq.f32.partialorder %v2062, 8.507059e+37
  %v2064 = vand.u32 %v2052, 2147483648
  %v2065 = vor.u32 1.1754944e-38, %v2064
  %v2066 = vsel %vm2063, %v2065, %v2061
  %v2067 = vmul.f32 1.0, %v2066
  %v2068 = vtanh.pop %v2028
  %v2069 = vxor.u32 %v2029, 2147483648
  %v2070 = vmul.f32 %v2069, 1.442695
  %v2071 = vpow.pop %v2070
  %v2072 = vadd.f32 %v2071, 1.0
  %v2073 = vrcp.pop %v2072
  %v2074 = vmul.f32 %v2072, %v2073
  %v2075 = vsub.f32 1.0, %v2074
  %v2076 = vmul.f32 %v2073, %v2075
  %v2077 = vadd.f32 %v2073, %v2076
  %vm2078 = vweird.f32 %v2072
  %vm2079 = vweird.f32 %v2073
  %vm2080 = vmor %vm2078, %vm2079
  %v2081 = vsel %vm2080, %v2073, %v2077
  %v2082 = vand.u32 2147483647, %v2072
  %vm2083 = vcmp.eq.f32.partialorder %v2082, 8.507059e+37
  %v2084 = vand.u32 %v2072, 2147483648
  %v2085 = vor.u32 1.1754944e-38, %v2084
  %v2086 = vsel %vm2083, %v2085, %v2081
  %v2087 = vmul.f32 1.0, %v2086
  %v2088 = vmul.f32 %v2067, %v1782
  %v2089 = vmul.f32 %v2048, %v2068
  %v2090 = vadd.f32 %v2088, %v2089
  %v2091 = vtanh.pop %v2090
  %v2092 = vmul.f32 %v2087, %v2091
  %s2093 = scalar_lea.vmem [#allocation3], 96
  %v2094 = vld [vmem:[%s2093] sm:$0xff]
  %v2095 = vld [vmem:[%s2093 + $0x8] sm:$0xff]
  %v2096 = vld [vmem:[%s2093 + $0x10] sm:$0xff]
  %v2097 = vld [vmem:[%s2093 + $0x18] sm:$0xff]
  %2098 = vmatpush.msra.mxu0 %v707
  %2099 = vmatpush.msra.mxu0 %v703
  %2100 = vmatpush.msra.mxu0 %v699
  %2101 = vmatpush.msra.mxu0 %v695
  %2102 = vmatpush.msra.mxu0 %v691
  %2103 = vmatpush.msra.mxu0 %v687
  %2104 = vmatpush.msra.mxu0 %v683
  %2105 = vmatpush.msra.mxu0 %v679
  %2106 = vmatpush.msra.mxu0 %v675
  %2107 = vmatpush.msra.mxu0 %v671
  %2108 = vmatpush.msra.mxu0 %v667
  %2109 = vmatpush.msra.mxu0 %v663
  %2110 = vmatpush.msra.mxu0 %v659
  %2111 = vmatpush.msra.mxu0 %v655
  %2112 = vmatpush.msra.mxu0 %v651
  %2113 = vmatpush.msra.mxu0 %v647
  %2114 = vmatmul.f32.gmra.mxu0 %v1936
  %v2115 = vpop.f32.mrf.mxu0
  %v2116 = vadd.f32 0.0, %v2115
  %2117 = vdwg.mxu0
  %2118 = vmatpush.msra.mxu0 %v708
  %2119 = vmatpush.msra.mxu0 %v704
  %2120 = vmatpush.msra.mxu0 %v700
  %2121 = vmatpush.msra.mxu0 %v696
  %2122 = vmatpush.msra.mxu0 %v692
  %2123 = vmatpush.msra.mxu0 %v688
  %2124 = vmatpush.msra.mxu0 %v684
  %2125 = vmatpush.msra.mxu0 %v680
  %2126 = vmatpush.msra.mxu0 %v676
  %2127 = vmatpush.msra.mxu0 %v672
  %2128 = vmatpush.msra.mxu0 %v668
  %2129 = vmatpush.msra.mxu0 %v664
  %2130 = vmatpush.msra.mxu0 %v660
  %2131 = vmatpush.msra.mxu0 %v656
  %2132 = vmatpush.msra.mxu0 %v652
  %2133 = vmatpush.msra.mxu0 %v648
  %2134 = vmatmul.f32.gmra.mxu0 %v1936
  %v2135 = vpop.f32.mrf.mxu0
  %v2136 = vadd.f32 0.0, %v2135
  %2137 = vdwg.mxu0
  %2138 = vmatpush.msra.mxu0 %v709
  %2139 = vmatpush.msra.mxu0 %v705
  %2140 = vmatpush.msra.mxu0 %v701
  %2141 = vmatpush.msra.mxu0 %v697
  %2142 = vmatpush.msra.mxu0 %v693
  %2143 = vmatpush.msra.mxu0 %v689
  %2144 = vmatpush.msra.mxu0 %v685
  %2145 = vmatpush.msra.mxu0 %v681
  %2146 = vmatpush.msra.mxu0 %v677
  %2147 = vmatpush.msra.mxu0 %v673
  %2148 = vmatpush.msra.mxu0 %v669
  %2149 = vmatpush.msra.mxu0 %v665
  %2150 = vmatpush.msra.mxu0 %v661
  %2151 = vmatpush.msra.mxu0 %v657
  %2152 = vmatpush.msra.mxu0 %v653
  %2153 = vmatpush.msra.mxu0 %v649
  %2154 = vmatmul.f32.gmra.mxu0 %v1936
  %v2155 = vpop.f32.mrf.mxu0
  %v2156 = vadd.f32 0.0, %v2155
  %2157 = vdwg.mxu0
  %2158 = vmatpush.msra.mxu0 %v710
  %2159 = vmatpush.msra.mxu0 %v706
  %2160 = vmatpush.msra.mxu0 %v702
  %2161 = vmatpush.msra.mxu0 %v698
  %2162 = vmatpush.msra.mxu0 %v694
  %2163 = vmatpush.msra.mxu0 %v690
  %2164 = vmatpush.msra.mxu0 %v686
  %2165 = vmatpush.msra.mxu0 %v682
  %2166 = vmatpush.msra.mxu0 %v678
  %2167 = vmatpush.msra.mxu0 %v674
  %2168 = vmatpush.msra.mxu0 %v670
  %2169 = vmatpush.msra.mxu0 %v666
  %2170 = vmatpush.msra.mxu0 %v662
  %2171 = vmatpush.msra.mxu0 %v658
  %2172 = vmatpush.msra.mxu0 %v654
  %2173 = vmatpush.msra.mxu0 %v650
  %2174 = vmatmul.f32.gmra.mxu0 %v1936
  %v2175 = vpop.f32.mrf.mxu0
  %v2176 = vadd.f32 0.0, %v2175
  %2177 = vdwg.mxu0
  %v2178 = vadd.f32 %v2094, %v2116
  %v2179 = vadd.f32 %v2095, %v2136
  %v2180 = vadd.f32 %v2096, %v2156
  %v2181 = vadd.f32 %v2097, %v2176
  %v2182 = vxor.u32 %v2178, 2147483648
  %v2183 = vmul.f32 %v2182, 1.442695
  %v2184 = vpow.pop %v2183
  %v2185 = vadd.f32 %v2184, 1.0
  %v2186 = vrcp.pop %v2185
  %v2187 = vmul.f32 %v2185, %v2186
  %v2188 = vsub.f32 1.0, %v2187
  %v2189 = vmul.f32 %v2186, %v2188
  %v2190 = vadd.f32 %v2186, %v2189
  %vm2191 = vweird.f32 %v2185
  %vm2192 = vweird.f32 %v2186
  %vm2193 = vmor %vm2191, %vm2192
  %v2194 = vsel %vm2193, %v2186, %v2190
  %v2195 = vand.u32 2147483647, %v2185
  %vm2196 = vcmp.eq.f32.partialorder %v2195, 8.507059e+37
  %v2197 = vand.u32 %v2185, 2147483648
  %v2198 = vor.u32 1.1754944e-38, %v2197
  %v2199 = vsel %vm2196, %v2198, %v2194
  %v2200 = vmul.f32 1.0, %v2199
  %v2201 = vxor.u32 %v2179, 2147483648
  %v2202 = vmul.f32 %v2201, 1.442695
  %v2203 = vpow.pop %v2202
  %v2204 = vadd.f32 %v2203, 1.0
  %v2205 = vrcp.pop %v2204
  %v2206 = vmul.f32 %v2204, %v2205
  %v2207 = vsub.f32 1.0, %v2206
  %v2208 = vmul.f32 %v2205, %v2207
  %v2209 = vadd.f32 %v2205, %v2208
  %vm2210 = vweird.f32 %v2204
  %vm2211 = vweird.f32 %v2205
  %vm2212 = vmor %vm2210, %vm2211
  %v2213 = vsel %vm2212, %v2205, %v2209
  %v2214 = vand.u32 2147483647, %v2204
  %vm2215 = vcmp.eq.f32.partialorder %v2214, 8.507059e+37
  %v2216 = vand.u32 %v2204, 2147483648
  %v2217 = vor.u32 1.1754944e-38, %v2216
  %v2218 = vsel %vm2215, %v2217, %v2213
  %v2219 = vmul.f32 1.0, %v2218
  %v2220 = vtanh.pop %v2180
  %v2221 = vxor.u32 %v2181, 2147483648
  %v2222 = vmul.f32 %v2221, 1.442695
  %v2223 = vpow.pop %v2222
  %v2224 = vadd.f32 %v2223, 1.0
  %v2225 = vrcp.pop %v2224
  %v2226 = vmul.f32 %v2224, %v2225
  %v2227 = vsub.f32 1.0, %v2226
  %v2228 = vmul.f32 %v2225, %v2227
  %v2229 = vadd.f32 %v2225, %v2228
  %vm2230 = vweird.f32 %v2224
  %vm2231 = vweird.f32 %v2225
  %vm2232 = vmor %vm2230, %vm2231
  %v2233 = vsel %vm2232, %v2225, %v2229
  %v2234 = vand.u32 2147483647, %v2224
  %vm2235 = vcmp.eq.f32.partialorder %v2234, 8.507059e+37
  %v2236 = vand.u32 %v2224, 2147483648
  %v2237 = vor.u32 1.1754944e-38, %v2236
  %v2238 = vsel %vm2235, %v2237, %v2233
  %v2239 = vmul.f32 1.0, %v2238
  %v2240 = vmul.f32 %v2219, %v1934
  %v2241 = vmul.f32 %v2200, %v2220
  %v2242 = vadd.f32 %v2240, %v2241
  %v2243 = vtanh.pop %v2242
  %v2244 = vmul.f32 %v2239, %v2243
  %s2245 = scalar_lea.vmem [#allocation4], 32
  %2246 = vst [vmem:[%s2245] sm:$0xff] %v2092
  %s2247 = scalar_lea.vmem [#allocation5], 24
  %2248 = vst [vmem:[%s2247] sm:$0xff] %v2244
  %s2249 = scalar_lea.vmem [#allocation2], 160
  %v2250 = vld [vmem:[%s2249] sm:$0xff]
  %v2251 = vld [vmem:[%s2249 + $0x8] sm:$0xff]
  %v2252 = vld [vmem:[%s2249 + $0x10] sm:$0xff]
  %v2253 = vld [vmem:[%s2249 + $0x18] sm:$0xff]
  %2254 = vmatpush.msra.mxu0 %v643
  %2255 = vmatpush.msra.mxu0 %v639
  %2256 = vmatpush.msra.mxu0 %v635
  %2257 = vmatpush.msra.mxu0 %v631
  %2258 = vmatpush.msra.mxu0 %v627
  %2259 = vmatpush.msra.mxu0 %v623
  %2260 = vmatpush.msra.mxu0 %v619
  %2261 = vmatpush.msra.mxu0 %v615
  %2262 = vmatpush.msra.mxu0 %v611
  %2263 = vmatpush.msra.mxu0 %v607
  %2264 = vmatpush.msra.mxu0 %v603
  %2265 = vmatpush.msra.mxu0 %v599
  %2266 = vmatpush.msra.mxu0 %v595
  %2267 = vmatpush.msra.mxu0 %v591
  %2268 = vmatpush.msra.mxu0 %v587
  %2269 = vmatpush.msra.mxu0 %v583
  %2270 = vmatmul.f32.gmra.mxu0 %v2092
  %v2271 = vpop.f32.mrf.mxu0
  %v2272 = vadd.f32 0.0, %v2271
  %2273 = vdwg.mxu0
  %2274 = vmatpush.msra.mxu0 %v644
  %2275 = vmatpush.msra.mxu0 %v640
  %2276 = vmatpush.msra.mxu0 %v636
  %2277 = vmatpush.msra.mxu0 %v632
  %2278 = vmatpush.msra.mxu0 %v628
  %2279 = vmatpush.msra.mxu0 %v624
  %2280 = vmatpush.msra.mxu0 %v620
  %2281 = vmatpush.msra.mxu0 %v616
  %2282 = vmatpush.msra.mxu0 %v612
  %2283 = vmatpush.msra.mxu0 %v608
  %2284 = vmatpush.msra.mxu0 %v604
  %2285 = vmatpush.msra.mxu0 %v600
  %2286 = vmatpush.msra.mxu0 %v596
  %2287 = vmatpush.msra.mxu0 %v592
  %2288 = vmatpush.msra.mxu0 %v588
  %2289 = vmatpush.msra.mxu0 %v584
  %2290 = vmatmul.f32.gmra.mxu0 %v2092
  %v2291 = vpop.f32.mrf.mxu0
  %v2292 = vadd.f32 0.0, %v2291
  %2293 = vdwg.mxu0
  %2294 = vmatpush.msra.mxu0 %v645
  %2295 = vmatpush.msra.mxu0 %v641
  %2296 = vmatpush.msra.mxu0 %v637
  %2297 = vmatpush.msra.mxu0 %v633
  %2298 = vmatpush.msra.mxu0 %v629
  %2299 = vmatpush.msra.mxu0 %v625
  %2300 = vmatpush.msra.mxu0 %v621
  %2301 = vmatpush.msra.mxu0 %v617
  %2302 = vmatpush.msra.mxu0 %v613
  %2303 = vmatpush.msra.mxu0 %v609
  %2304 = vmatpush.msra.mxu0 %v605
  %2305 = vmatpush.msra.mxu0 %v601
  %2306 = vmatpush.msra.mxu0 %v597
  %2307 = vmatpush.msra.mxu0 %v593
  %2308 = vmatpush.msra.mxu0 %v589
  %2309 = vmatpush.msra.mxu0 %v585
  %2310 = vmatmul.f32.gmra.mxu0 %v2092
  %v2311 = vpop.f32.mrf.mxu0
  %v2312 = vadd.f32 0.0, %v2311
  %2313 = vdwg.mxu0
  %2314 = vmatpush.msra.mxu0 %v646
  %2315 = vmatpush.msra.mxu0 %v642
  %2316 = vmatpush.msra.mxu0 %v638
  %2317 = vmatpush.msra.mxu0 %v634
  %2318 = vmatpush.msra.mxu0 %v630
  %2319 = vmatpush.msra.mxu0 %v626
  %2320 = vmatpush.msra.mxu0 %v622
  %2321 = vmatpush.msra.mxu0 %v618
  %2322 = vmatpush.msra.mxu0 %v614
  %2323 = vmatpush.msra.mxu0 %v610
  %2324 = vmatpush.msra.mxu0 %v606
  %2325 = vmatpush.msra.mxu0 %v602
  %2326 = vmatpush.msra.mxu0 %v598
  %2327 = vmatpush.msra.mxu0 %v594
  %2328 = vmatpush.msra.mxu0 %v590
  %2329 = vmatpush.msra.mxu0 %v586
  %2330 = vmatmul.f32.gmra.mxu0 %v2092
  %v2331 = vpop.f32.mrf.mxu0
  %v2332 = vadd.f32 0.0, %v2331
  %2333 = vdwg.mxu0
  %v2334 = vadd.f32 %v2250, %v2272
  %v2335 = vadd.f32 %v2251, %v2292
  %v2336 = vadd.f32 %v2252, %v2312
  %v2337 = vadd.f32 %v2253, %v2332
  %v2338 = vxor.u32 %v2334, 2147483648
  %v2339 = vmul.f32 %v2338, 1.442695
  %v2340 = vpow.pop %v2339
  %v2341 = vadd.f32 %v2340, 1.0
  %v2342 = vrcp.pop %v2341
  %v2343 = vmul.f32 %v2341, %v2342
  %v2344 = vsub.f32 1.0, %v2343
  %v2345 = vmul.f32 %v2342, %v2344
  %v2346 = vadd.f32 %v2342, %v2345
  %vm2347 = vweird.f32 %v2341
  %vm2348 = vweird.f32 %v2342
  %vm2349 = vmor %vm2347, %vm2348
  %v2350 = vsel %vm2349, %v2342, %v2346
  %v2351 = vand.u32 2147483647, %v2341
  %vm2352 = vcmp.eq.f32.partialorder %v2351, 8.507059e+37
  %v2353 = vand.u32 %v2341, 2147483648
  %v2354 = vor.u32 1.1754944e-38, %v2353
  %v2355 = vsel %vm2352, %v2354, %v2350
  %v2356 = vmul.f32 1.0, %v2355
  %v2357 = vxor.u32 %v2335, 2147483648
  %v2358 = vmul.f32 %v2357, 1.442695
  %v2359 = vpow.pop %v2358
  %v2360 = vadd.f32 %v2359, 1.0
  %v2361 = vrcp.pop %v2360
  %v2362 = vmul.f32 %v2360, %v2361
  %v2363 = vsub.f32 1.0, %v2362
  %v2364 = vmul.f32 %v2361, %v2363
  %v2365 = vadd.f32 %v2361, %v2364
  %vm2366 = vweird.f32 %v2360
  %vm2367 = vweird.f32 %v2361
  %vm2368 = vmor %vm2366, %vm2367
  %v2369 = vsel %vm2368, %v2361, %v2365
  %v2370 = vand.u32 2147483647, %v2360
  %vm2371 = vcmp.eq.f32.partialorder %v2370, 8.507059e+37
  %v2372 = vand.u32 %v2360, 2147483648
  %v2373 = vor.u32 1.1754944e-38, %v2372
  %v2374 = vsel %vm2371, %v2373, %v2369
  %v2375 = vmul.f32 1.0, %v2374
  %v2376 = vtanh.pop %v2336
  %v2377 = vxor.u32 %v2337, 2147483648
  %v2378 = vmul.f32 %v2377, 1.442695
  %v2379 = vpow.pop %v2378
  %v2380 = vadd.f32 %v2379, 1.0
  %v2381 = vrcp.pop %v2380
  %v2382 = vmul.f32 %v2380, %v2381
  %v2383 = vsub.f32 1.0, %v2382
  %v2384 = vmul.f32 %v2381, %v2383
  %v2385 = vadd.f32 %v2381, %v2384
  %vm2386 = vweird.f32 %v2380
  %vm2387 = vweird.f32 %v2381
  %vm2388 = vmor %vm2386, %vm2387
  %v2389 = vsel %vm2388, %v2381, %v2385
  %v2390 = vand.u32 2147483647, %v2380
  %vm2391 = vcmp.eq.f32.partialorder %v2390, 8.507059e+37
  %v2392 = vand.u32 %v2380, 2147483648
  %v2393 = vor.u32 1.1754944e-38, %v2392
  %v2394 = vsel %vm2391, %v2393, %v2389
  %v2395 = vmul.f32 1.0, %v2394
  %v2396 = vmul.f32 %v2375, %v2090
  %v2397 = vmul.f32 %v2356, %v2376
  %v2398 = vadd.f32 %v2396, %v2397
  %v2399 = vtanh.pop %v2398
  %v2400 = vmul.f32 %v2395, %v2399
  %s2401 = scalar_lea.vmem [#allocation3], 64
  %v2402 = vld [vmem:[%s2401] sm:$0xff]
  %v2403 = vld [vmem:[%s2401 + $0x8] sm:$0xff]
  %v2404 = vld [vmem:[%s2401 + $0x10] sm:$0xff]
  %v2405 = vld [vmem:[%s2401 + $0x18] sm:$0xff]
  %2406 = vmatpush.msra.mxu0 %v707
  %2407 = vmatpush.msra.mxu0 %v703
  %2408 = vmatpush.msra.mxu0 %v699
  %2409 = vmatpush.msra.mxu0 %v695
  %2410 = vmatpush.msra.mxu0 %v691
  %2411 = vmatpush.msra.mxu0 %v687
  %2412 = vmatpush.msra.mxu0 %v683
  %2413 = vmatpush.msra.mxu0 %v679
  %2414 = vmatpush.msra.mxu0 %v675
  %2415 = vmatpush.msra.mxu0 %v671
  %2416 = vmatpush.msra.mxu0 %v667
  %2417 = vmatpush.msra.mxu0 %v663
  %2418 = vmatpush.msra.mxu0 %v659
  %2419 = vmatpush.msra.mxu0 %v655
  %2420 = vmatpush.msra.mxu0 %v651
  %2421 = vmatpush.msra.mxu0 %v647
  %2422 = vmatmul.f32.gmra.mxu0 %v2244
  %v2423 = vpop.f32.mrf.mxu0
  %v2424 = vadd.f32 0.0, %v2423
  %2425 = vdwg.mxu0
  %2426 = vmatpush.msra.mxu0 %v708
  %2427 = vmatpush.msra.mxu0 %v704
  %2428 = vmatpush.msra.mxu0 %v700
  %2429 = vmatpush.msra.mxu0 %v696
  %2430 = vmatpush.msra.mxu0 %v692
  %2431 = vmatpush.msra.mxu0 %v688
  %2432 = vmatpush.msra.mxu0 %v684
  %2433 = vmatpush.msra.mxu0 %v680
  %2434 = vmatpush.msra.mxu0 %v676
  %2435 = vmatpush.msra.mxu0 %v672
  %2436 = vmatpush.msra.mxu0 %v668
  %2437 = vmatpush.msra.mxu0 %v664
  %2438 = vmatpush.msra.mxu0 %v660
  %2439 = vmatpush.msra.mxu0 %v656
  %2440 = vmatpush.msra.mxu0 %v652
  %2441 = vmatpush.msra.mxu0 %v648
  %2442 = vmatmul.f32.gmra.mxu0 %v2244
  %v2443 = vpop.f32.mrf.mxu0
  %v2444 = vadd.f32 0.0, %v2443
  %2445 = vdwg.mxu0
  %2446 = vmatpush.msra.mxu0 %v709
  %2447 = vmatpush.msra.mxu0 %v705
  %2448 = vmatpush.msra.mxu0 %v701
  %2449 = vmatpush.msra.mxu0 %v697
  %2450 = vmatpush.msra.mxu0 %v693
  %2451 = vmatpush.msra.mxu0 %v689
  %2452 = vmatpush.msra.mxu0 %v685
  %2453 = vmatpush.msra.mxu0 %v681
  %2454 = vmatpush.msra.mxu0 %v677
  %2455 = vmatpush.msra.mxu0 %v673
  %2456 = vmatpush.msra.mxu0 %v669
  %2457 = vmatpush.msra.mxu0 %v665
  %2458 = vmatpush.msra.mxu0 %v661
  %2459 = vmatpush.msra.mxu0 %v657
  %2460 = vmatpush.msra.mxu0 %v653
  %2461 = vmatpush.msra.mxu0 %v649
  %2462 = vmatmul.f32.gmra.mxu0 %v2244
  %v2463 = vpop.f32.mrf.mxu0
  %v2464 = vadd.f32 0.0, %v2463
  %2465 = vdwg.mxu0
  %2466 = vmatpush.msra.mxu0 %v710
  %2467 = vmatpush.msra.mxu0 %v706
  %2468 = vmatpush.msra.mxu0 %v702
  %2469 = vmatpush.msra.mxu0 %v698
  %2470 = vmatpush.msra.mxu0 %v694
  %2471 = vmatpush.msra.mxu0 %v690
  %2472 = vmatpush.msra.mxu0 %v686
  %2473 = vmatpush.msra.mxu0 %v682
  %2474 = vmatpush.msra.mxu0 %v678
  %2475 = vmatpush.msra.mxu0 %v674
  %2476 = vmatpush.msra.mxu0 %v670
  %2477 = vmatpush.msra.mxu0 %v666
  %2478 = vmatpush.msra.mxu0 %v662
  %2479 = vmatpush.msra.mxu0 %v658
  %2480 = vmatpush.msra.mxu0 %v654
  %2481 = vmatpush.msra.mxu0 %v650
  %2482 = vmatmul.f32.gmra.mxu0 %v2244
  %v2483 = vpop.f32.mrf.mxu0
  %v2484 = vadd.f32 0.0, %v2483
  %2485 = vdwg.mxu0
  %v2486 = vadd.f32 %v2402, %v2424
  %v2487 = vadd.f32 %v2403, %v2444
  %v2488 = vadd.f32 %v2404, %v2464
  %v2489 = vadd.f32 %v2405, %v2484
  %v2490 = vxor.u32 %v2486, 2147483648
  %v2491 = vmul.f32 %v2490, 1.442695
  %v2492 = vpow.pop %v2491
  %v2493 = vadd.f32 %v2492, 1.0
  %v2494 = vrcp.pop %v2493
  %v2495 = vmul.f32 %v2493, %v2494
  %v2496 = vsub.f32 1.0, %v2495
  %v2497 = vmul.f32 %v2494, %v2496
  %v2498 = vadd.f32 %v2494, %v2497
  %vm2499 = vweird.f32 %v2493
  %vm2500 = vweird.f32 %v2494
  %vm2501 = vmor %vm2499, %vm2500
  %v2502 = vsel %vm2501, %v2494, %v2498
  %v2503 = vand.u32 2147483647, %v2493
  %vm2504 = vcmp.eq.f32.partialorder %v2503, 8.507059e+37
  %v2505 = vand.u32 %v2493, 2147483648
  %v2506 = vor.u32 1.1754944e-38, %v2505
  %v2507 = vsel %vm2504, %v2506, %v2502
  %v2508 = vmul.f32 1.0, %v2507
  %v2509 = vxor.u32 %v2487, 2147483648
  %v2510 = vmul.f32 %v2509, 1.442695
  %v2511 = vpow.pop %v2510
  %v2512 = vadd.f32 %v2511, 1.0
  %v2513 = vrcp.pop %v2512
  %v2514 = vmul.f32 %v2512, %v2513
  %v2515 = vsub.f32 1.0, %v2514
  %v2516 = vmul.f32 %v2513, %v2515
  %v2517 = vadd.f32 %v2513, %v2516
  %vm2518 = vweird.f32 %v2512
  %vm2519 = vweird.f32 %v2513
  %vm2520 = vmor %vm2518, %vm2519
  %v2521 = vsel %vm2520, %v2513, %v2517
  %v2522 = vand.u32 2147483647, %v2512
  %vm2523 = vcmp.eq.f32.partialorder %v2522, 8.507059e+37
  %v2524 = vand.u32 %v2512, 2147483648
  %v2525 = vor.u32 1.1754944e-38, %v2524
  %v2526 = vsel %vm2523, %v2525, %v2521
  %v2527 = vmul.f32 1.0, %v2526
  %v2528 = vtanh.pop %v2488
  %v2529 = vxor.u32 %v2489, 2147483648
  %v2530 = vmul.f32 %v2529, 1.442695
  %v2531 = vpow.pop %v2530
  %v2532 = vadd.f32 %v2531, 1.0
  %v2533 = vrcp.pop %v2532
  %v2534 = vmul.f32 %v2532, %v2533
  %v2535 = vsub.f32 1.0, %v2534
  %v2536 = vmul.f32 %v2533, %v2535
  %v2537 = vadd.f32 %v2533, %v2536
  %vm2538 = vweird.f32 %v2532
  %vm2539 = vweird.f32 %v2533
  %vm2540 = vmor %vm2538, %vm2539
  %v2541 = vsel %vm2540, %v2533, %v2537
  %v2542 = vand.u32 2147483647, %v2532
  %vm2543 = vcmp.eq.f32.partialorder %v2542, 8.507059e+37
  %v2544 = vand.u32 %v2532, 2147483648
  %v2545 = vor.u32 1.1754944e-38, %v2544
  %v2546 = vsel %vm2543, %v2545, %v2541
  %v2547 = vmul.f32 1.0, %v2546
  %v2548 = vmul.f32 %v2527, %v2242
  %v2549 = vmul.f32 %v2508, %v2528
  %v2550 = vadd.f32 %v2548, %v2549
  %v2551 = vtanh.pop %v2550
  %v2552 = vmul.f32 %v2547, %v2551
  %s2553 = scalar_lea.vmem [#allocation4], 40
  %2554 = vst [vmem:[%s2553] sm:$0xff] %v2400
  %s2555 = scalar_lea.vmem [#allocation5], 16
  %2556 = vst [vmem:[%s2555] sm:$0xff] %v2552
  %s2557 = scalar_lea.vmem [#allocation2], 192
  %v2558 = vld [vmem:[%s2557] sm:$0xff]
  %v2559 = vld [vmem:[%s2557 + $0x8] sm:$0xff]
  %v2560 = vld [vmem:[%s2557 + $0x10] sm:$0xff]
  %v2561 = vld [vmem:[%s2557 + $0x18] sm:$0xff]
  %2562 = vmatpush.msra.mxu0 %v643
  %2563 = vmatpush.msra.mxu0 %v639
  %2564 = vmatpush.msra.mxu0 %v635
  %2565 = vmatpush.msra.mxu0 %v631
  %2566 = vmatpush.msra.mxu0 %v627
  %2567 = vmatpush.msra.mxu0 %v623
  %2568 = vmatpush.msra.mxu0 %v619
  %2569 = vmatpush.msra.mxu0 %v615
  %2570 = vmatpush.msra.mxu0 %v611
  %2571 = vmatpush.msra.mxu0 %v607
  %2572 = vmatpush.msra.mxu0 %v603
  %2573 = vmatpush.msra.mxu0 %v599
  %2574 = vmatpush.msra.mxu0 %v595
  %2575 = vmatpush.msra.mxu0 %v591
  %2576 = vmatpush.msra.mxu0 %v587
  %2577 = vmatpush.msra.mxu0 %v583
  %2578 = vmatmul.f32.gmra.mxu0 %v2400
  %v2579 = vpop.f32.mrf.mxu0
  %v2580 = vadd.f32 0.0, %v2579
  %2581 = vdwg.mxu0
  %2582 = vmatpush.msra.mxu0 %v644
  %2583 = vmatpush.msra.mxu0 %v640
  %2584 = vmatpush.msra.mxu0 %v636
  %2585 = vmatpush.msra.mxu0 %v632
  %2586 = vmatpush.msra.mxu0 %v628
  %2587 = vmatpush.msra.mxu0 %v624
  %2588 = vmatpush.msra.mxu0 %v620
  %2589 = vmatpush.msra.mxu0 %v616
  %2590 = vmatpush.msra.mxu0 %v612
  %2591 = vmatpush.msra.mxu0 %v608
  %2592 = vmatpush.msra.mxu0 %v604
  %2593 = vmatpush.msra.mxu0 %v600
  %2594 = vmatpush.msra.mxu0 %v596
  %2595 = vmatpush.msra.mxu0 %v592
  %2596 = vmatpush.msra.mxu0 %v588
  %2597 = vmatpush.msra.mxu0 %v584
  %2598 = vmatmul.f32.gmra.mxu0 %v2400
  %v2599 = vpop.f32.mrf.mxu0
  %v2600 = vadd.f32 0.0, %v2599
  %2601 = vdwg.mxu0
  %2602 = vmatpush.msra.mxu0 %v645
  %2603 = vmatpush.msra.mxu0 %v641
  %2604 = vmatpush.msra.mxu0 %v637
  %2605 = vmatpush.msra.mxu0 %v633
  %2606 = vmatpush.msra.mxu0 %v629
  %2607 = vmatpush.msra.mxu0 %v625
  %2608 = vmatpush.msra.mxu0 %v621
  %2609 = vmatpush.msra.mxu0 %v617
  %2610 = vmatpush.msra.mxu0 %v613
  %2611 = vmatpush.msra.mxu0 %v609
  %2612 = vmatpush.msra.mxu0 %v605
  %2613 = vmatpush.msra.mxu0 %v601
  %2614 = vmatpush.msra.mxu0 %v597
  %2615 = vmatpush.msra.mxu0 %v593
  %2616 = vmatpush.msra.mxu0 %v589
  %2617 = vmatpush.msra.mxu0 %v585
  %2618 = vmatmul.f32.gmra.mxu0 %v2400
  %v2619 = vpop.f32.mrf.mxu0
  %v2620 = vadd.f32 0.0, %v2619
  %2621 = vdwg.mxu0
  %2622 = vmatpush.msra.mxu0 %v646
  %2623 = vmatpush.msra.mxu0 %v642
  %2624 = vmatpush.msra.mxu0 %v638
  %2625 = vmatpush.msra.mxu0 %v634
  %2626 = vmatpush.msra.mxu0 %v630
  %2627 = vmatpush.msra.mxu0 %v626
  %2628 = vmatpush.msra.mxu0 %v622
  %2629 = vmatpush.msra.mxu0 %v618
  %2630 = vmatpush.msra.mxu0 %v614
  %2631 = vmatpush.msra.mxu0 %v610
  %2632 = vmatpush.msra.mxu0 %v606
  %2633 = vmatpush.msra.mxu0 %v602
  %2634 = vmatpush.msra.mxu0 %v598
  %2635 = vmatpush.msra.mxu0 %v594
  %2636 = vmatpush.msra.mxu0 %v590
  %2637 = vmatpush.msra.mxu0 %v586
  %2638 = vmatmul.f32.gmra.mxu0 %v2400
  %v2639 = vpop.f32.mrf.mxu0
  %v2640 = vadd.f32 0.0, %v2639
  %2641 = vdwg.mxu0
  %v2642 = vadd.f32 %v2558, %v2580
  %v2643 = vadd.f32 %v2559, %v2600
  %v2644 = vadd.f32 %v2560, %v2620
  %v2645 = vadd.f32 %v2561, %v2640
  %v2646 = vxor.u32 %v2642, 2147483648
  %v2647 = vmul.f32 %v2646, 1.442695
  %v2648 = vpow.pop %v2647
  %v2649 = vadd.f32 %v2648, 1.0
  %v2650 = vrcp.pop %v2649
  %v2651 = vmul.f32 %v2649, %v2650
  %v2652 = vsub.f32 1.0, %v2651
  %v2653 = vmul.f32 %v2650, %v2652
  %v2654 = vadd.f32 %v2650, %v2653
  %vm2655 = vweird.f32 %v2649
  %vm2656 = vweird.f32 %v2650
  %vm2657 = vmor %vm2655, %vm2656
  %v2658 = vsel %vm2657, %v2650, %v2654
  %v2659 = vand.u32 2147483647, %v2649
  %vm2660 = vcmp.eq.f32.partialorder %v2659, 8.507059e+37
  %v2661 = vand.u32 %v2649, 2147483648
  %v2662 = vor.u32 1.1754944e-38, %v2661
  %v2663 = vsel %vm2660, %v2662, %v2658
  %v2664 = vmul.f32 1.0, %v2663
  %v2665 = vxor.u32 %v2643, 2147483648
  %v2666 = vmul.f32 %v2665, 1.442695
  %v2667 = vpow.pop %v2666
  %v2668 = vadd.f32 %v2667, 1.0
  %v2669 = vrcp.pop %v2668
  %v2670 = vmul.f32 %v2668, %v2669
  %v2671 = vsub.f32 1.0, %v2670
  %v2672 = vmul.f32 %v2669, %v2671
  %v2673 = vadd.f32 %v2669, %v2672
  %vm2674 = vweird.f32 %v2668
  %vm2675 = vweird.f32 %v2669
  %vm2676 = vmor %vm2674, %vm2675
  %v2677 = vsel %vm2676, %v2669, %v2673
  %v2678 = vand.u32 2147483647, %v2668
  %vm2679 = vcmp.eq.f32.partialorder %v2678, 8.507059e+37
  %v2680 = vand.u32 %v2668, 2147483648
  %v2681 = vor.u32 1.1754944e-38, %v2680
  %v2682 = vsel %vm2679, %v2681, %v2677
  %v2683 = vmul.f32 1.0, %v2682
  %v2684 = vtanh.pop %v2644
  %v2685 = vxor.u32 %v2645, 2147483648
  %v2686 = vmul.f32 %v2685, 1.442695
  %v2687 = vpow.pop %v2686
  %v2688 = vadd.f32 %v2687, 1.0
  %v2689 = vrcp.pop %v2688
  %v2690 = vmul.f32 %v2688, %v2689
  %v2691 = vsub.f32 1.0, %v2690
  %v2692 = vmul.f32 %v2689, %v2691
  %v2693 = vadd.f32 %v2689, %v2692
  %vm2694 = vweird.f32 %v2688
  %vm2695 = vweird.f32 %v2689
  %vm2696 = vmor %vm2694, %vm2695
  %v2697 = vsel %vm2696, %v2689, %v2693
  %v2698 = vand.u32 2147483647, %v2688
  %vm2699 = vcmp.eq.f32.partialorder %v2698, 8.507059e+37
  %v2700 = vand.u32 %v2688, 2147483648
  %v2701 = vor.u32 1.1754944e-38, %v2700
  %v2702 = vsel %vm2699, %v2701, %v2697
  %v2703 = vmul.f32 1.0, %v2702
  %v2704 = vmul.f32 %v2683, %v2398
  %v2705 = vmul.f32 %v2664, %v2684
  %v2706 = vadd.f32 %v2704, %v2705
  %v2707 = vtanh.pop %v2706
  %v2708 = vmul.f32 %v2703, %v2707
  %s2709 = scalar_lea.vmem [#allocation3], 32
  %v2710 = vld [vmem:[%s2709] sm:$0xff]
  %v2711 = vld [vmem:[%s2709 + $0x8] sm:$0xff]
  %v2712 = vld [vmem:[%s2709 + $0x10] sm:$0xff]
  %v2713 = vld [vmem:[%s2709 + $0x18] sm:$0xff]
  %2714 = vmatpush.msra.mxu0 %v707
  %2715 = vmatpush.msra.mxu0 %v703
  %2716 = vmatpush.msra.mxu0 %v699
  %2717 = vmatpush.msra.mxu0 %v695
  %2718 = vmatpush.msra.mxu0 %v691
  %2719 = vmatpush.msra.mxu0 %v687
  %2720 = vmatpush.msra.mxu0 %v683
  %2721 = vmatpush.msra.mxu0 %v679
  %2722 = vmatpush.msra.mxu0 %v675
  %2723 = vmatpush.msra.mxu0 %v671
  %2724 = vmatpush.msra.mxu0 %v667
  %2725 = vmatpush.msra.mxu0 %v663
  %2726 = vmatpush.msra.mxu0 %v659
  %2727 = vmatpush.msra.mxu0 %v655
  %2728 = vmatpush.msra.mxu0 %v651
  %2729 = vmatpush.msra.mxu0 %v647
  %2730 = vmatmul.f32.gmra.mxu0 %v2552
  %v2731 = vpop.f32.mrf.mxu0
  %v2732 = vadd.f32 0.0, %v2731
  %2733 = vdwg.mxu0
  %2734 = vmatpush.msra.mxu0 %v708
  %2735 = vmatpush.msra.mxu0 %v704
  %2736 = vmatpush.msra.mxu0 %v700
  %2737 = vmatpush.msra.mxu0 %v696
  %2738 = vmatpush.msra.mxu0 %v692
  %2739 = vmatpush.msra.mxu0 %v688
  %2740 = vmatpush.msra.mxu0 %v684
  %2741 = vmatpush.msra.mxu0 %v680
  %2742 = vmatpush.msra.mxu0 %v676
  %2743 = vmatpush.msra.mxu0 %v672
  %2744 = vmatpush.msra.mxu0 %v668
  %2745 = vmatpush.msra.mxu0 %v664
  %2746 = vmatpush.msra.mxu0 %v660
  %2747 = vmatpush.msra.mxu0 %v656
  %2748 = vmatpush.msra.mxu0 %v652
  %2749 = vmatpush.msra.mxu0 %v648
  %2750 = vmatmul.f32.gmra.mxu0 %v2552
  %v2751 = vpop.f32.mrf.mxu0
  %v2752 = vadd.f32 0.0, %v2751
  %2753 = vdwg.mxu0
  %2754 = vmatpush.msra.mxu0 %v709
  %2755 = vmatpush.msra.mxu0 %v705
  %2756 = vmatpush.msra.mxu0 %v701
  %2757 = vmatpush.msra.mxu0 %v697
  %2758 = vmatpush.msra.mxu0 %v693
  %2759 = vmatpush.msra.mxu0 %v689
  %2760 = vmatpush.msra.mxu0 %v685
  %2761 = vmatpush.msra.mxu0 %v681
  %2762 = vmatpush.msra.mxu0 %v677
  %2763 = vmatpush.msra.mxu0 %v673
  %2764 = vmatpush.msra.mxu0 %v669
  %2765 = vmatpush.msra.mxu0 %v665
  %2766 = vmatpush.msra.mxu0 %v661
  %2767 = vmatpush.msra.mxu0 %v657
  %2768 = vmatpush.msra.mxu0 %v653
  %2769 = vmatpush.msra.mxu0 %v649
  %2770 = vmatmul.f32.gmra.mxu0 %v2552
  %v2771 = vpop.f32.mrf.mxu0
  %v2772 = vadd.f32 0.0, %v2771
  %2773 = vdwg.mxu0
  %2774 = vmatpush.msra.mxu0 %v710
  %2775 = vmatpush.msra.mxu0 %v706
  %2776 = vmatpush.msra.mxu0 %v702
  %2777 = vmatpush.msra.mxu0 %v698
  %2778 = vmatpush.msra.mxu0 %v694
  %2779 = vmatpush.msra.mxu0 %v690
  %2780 = vmatpush.msra.mxu0 %v686
  %2781 = vmatpush.msra.mxu0 %v682
  %2782 = vmatpush.msra.mxu0 %v678
  %2783 = vmatpush.msra.mxu0 %v674
  %2784 = vmatpush.msra.mxu0 %v670
  %2785 = vmatpush.msra.mxu0 %v666
  %2786 = vmatpush.msra.mxu0 %v662
  %2787 = vmatpush.msra.mxu0 %v658
  %2788 = vmatpush.msra.mxu0 %v654
  %2789 = vmatpush.msra.mxu0 %v650
  %2790 = vmatmul.f32.gmra.mxu0 %v2552
  %v2791 = vpop.f32.mrf.mxu0
  %v2792 = vadd.f32 0.0, %v2791
  %2793 = vdwg.mxu0
  %v2794 = vadd.f32 %v2710, %v2732
  %v2795 = vadd.f32 %v2711, %v2752
  %v2796 = vadd.f32 %v2712, %v2772
  %v2797 = vadd.f32 %v2713, %v2792
  %v2798 = vxor.u32 %v2794, 2147483648
  %v2799 = vmul.f32 %v2798, 1.442695
  %v2800 = vpow.pop %v2799
  %v2801 = vadd.f32 %v2800, 1.0
  %v2802 = vrcp.pop %v2801
  %v2803 = vmul.f32 %v2801, %v2802
  %v2804 = vsub.f32 1.0, %v2803
  %v2805 = vmul.f32 %v2802, %v2804
  %v2806 = vadd.f32 %v2802, %v2805
  %vm2807 = vweird.f32 %v2801
  %vm2808 = vweird.f32 %v2802
  %vm2809 = vmor %vm2807, %vm2808
  %v2810 = vsel %vm2809, %v2802, %v2806
  %v2811 = vand.u32 2147483647, %v2801
  %vm2812 = vcmp.eq.f32.partialorder %v2811, 8.507059e+37
  %v2813 = vand.u32 %v2801, 2147483648
  %v2814 = vor.u32 1.1754944e-38, %v2813
  %v2815 = vsel %vm2812, %v2814, %v2810
  %v2816 = vmul.f32 1.0, %v2815
  %v2817 = vxor.u32 %v2795, 2147483648
  %v2818 = vmul.f32 %v2817, 1.442695
  %v2819 = vpow.pop %v2818
  %v2820 = vadd.f32 %v2819, 1.0
  %v2821 = vrcp.pop %v2820
  %v2822 = vmul.f32 %v2820, %v2821
  %v2823 = vsub.f32 1.0, %v2822
  %v2824 = vmul.f32 %v2821, %v2823
  %v2825 = vadd.f32 %v2821, %v2824
  %vm2826 = vweird.f32 %v2820
  %vm2827 = vweird.f32 %v2821
  %vm2828 = vmor %vm2826, %vm2827
  %v2829 = vsel %vm2828, %v2821, %v2825
  %v2830 = vand.u32 2147483647, %v2820
  %vm2831 = vcmp.eq.f32.partialorder %v2830, 8.507059e+37
  %v2832 = vand.u32 %v2820, 2147483648
  %v2833 = vor.u32 1.1754944e-38, %v2832
  %v2834 = vsel %vm2831, %v2833, %v2829
  %v2835 = vmul.f32 1.0, %v2834
  %v2836 = vtanh.pop %v2796
  %v2837 = vxor.u32 %v2797, 2147483648
  %v2838 = vmul.f32 %v2837, 1.442695
  %v2839 = vpow.pop %v2838
  %v2840 = vadd.f32 %v2839, 1.0
  %v2841 = vrcp.pop %v2840
  %v2842 = vmul.f32 %v2840, %v2841
  %v2843 = vsub.f32 1.0, %v2842
  %v2844 = vmul.f32 %v2841, %v2843
  %v2845 = vadd.f32 %v2841, %v2844
  %vm2846 = vweird.f32 %v2840
  %vm2847 = vweird.f32 %v2841
  %vm2848 = vmor %vm2846, %vm2847
  %v2849 = vsel %vm2848, %v2841, %v2845
  %v2850 = vand.u32 2147483647, %v2840
  %vm2851 = vcmp.eq.f32.partialorder %v2850, 8.507059e+37
  %v2852 = vand.u32 %v2840, 2147483648
  %v2853 = vor.u32 1.1754944e-38, %v2852
  %v2854 = vsel %vm2851, %v2853, %v2849
  %v2855 = vmul.f32 1.0, %v2854
  %v2856 = vmul.f32 %v2835, %v2550
  %v2857 = vmul.f32 %v2816, %v2836
  %v2858 = vadd.f32 %v2856, %v2857
  %v2859 = vtanh.pop %v2858
  %v2860 = vmul.f32 %v2855, %v2859
  %s2861 = scalar_lea.vmem [#allocation4], 48
  %2862 = vst [vmem:[%s2861] sm:$0xff] %v2708
  %s2863 = scalar_lea.vmem [#allocation5], 8
  %2864 = vst [vmem:[%s2863] sm:$0xff] %v2860
  %s2865 = scalar_lea.vmem [#allocation2], 224
  %v2866 = vld [vmem:[%s2865] sm:$0xff]
  %v2867 = vld [vmem:[%s2865 + $0x8] sm:$0xff]
  %v2868 = vld [vmem:[%s2865 + $0x10] sm:$0xff]
  %v2869 = vld [vmem:[%s2865 + $0x18] sm:$0xff]
  %2870 = vmatpush.msra.mxu0 %v643
  %2871 = vmatpush.msra.mxu0 %v639
  %2872 = vmatpush.msra.mxu0 %v635
  %2873 = vmatpush.msra.mxu0 %v631
  %2874 = vmatpush.msra.mxu0 %v627
  %2875 = vmatpush.msra.mxu0 %v623
  %2876 = vmatpush.msra.mxu0 %v619
  %2877 = vmatpush.msra.mxu0 %v615
  %2878 = vmatpush.msra.mxu0 %v611
  %2879 = vmatpush.msra.mxu0 %v607
  %2880 = vmatpush.msra.mxu0 %v603
  %2881 = vmatpush.msra.mxu0 %v599
  %2882 = vmatpush.msra.mxu0 %v595
  %2883 = vmatpush.msra.mxu0 %v591
  %2884 = vmatpush.msra.mxu0 %v587
  %2885 = vmatpush.msra.mxu0 %v583
  %2886 = vmatmul.f32.gmra.mxu0 %v2708
  %v2887 = vpop.f32.mrf.mxu0
  %v2888 = vadd.f32 0.0, %v2887
  %2889 = vdwg.mxu0
  %2890 = vmatpush.msra.mxu0 %v644
  %2891 = vmatpush.msra.mxu0 %v640
  %2892 = vmatpush.msra.mxu0 %v636
  %2893 = vmatpush.msra.mxu0 %v632
  %2894 = vmatpush.msra.mxu0 %v628
  %2895 = vmatpush.msra.mxu0 %v624
  %2896 = vmatpush.msra.mxu0 %v620
  %2897 = vmatpush.msra.mxu0 %v616
  %2898 = vmatpush.msra.mxu0 %v612
  %2899 = vmatpush.msra.mxu0 %v608
  %2900 = vmatpush.msra.mxu0 %v604
  %2901 = vmatpush.msra.mxu0 %v600
  %2902 = vmatpush.msra.mxu0 %v596
  %2903 = vmatpush.msra.mxu0 %v592
  %2904 = vmatpush.msra.mxu0 %v588
  %2905 = vmatpush.msra.mxu0 %v584
  %2906 = vmatmul.f32.gmra.mxu0 %v2708
  %v2907 = vpop.f32.mrf.mxu0
  %v2908 = vadd.f32 0.0, %v2907
  %2909 = vdwg.mxu0
  %2910 = vmatpush.msra.mxu0 %v645
  %2911 = vmatpush.msra.mxu0 %v641
  %2912 = vmatpush.msra.mxu0 %v637
  %2913 = vmatpush.msra.mxu0 %v633
  %2914 = vmatpush.msra.mxu0 %v629
  %2915 = vmatpush.msra.mxu0 %v625
  %2916 = vmatpush.msra.mxu0 %v621
  %2917 = vmatpush.msra.mxu0 %v617
  %2918 = vmatpush.msra.mxu0 %v613
  %2919 = vmatpush.msra.mxu0 %v609
  %2920 = vmatpush.msra.mxu0 %v605
  %2921 = vmatpush.msra.mxu0 %v601
  %2922 = vmatpush.msra.mxu0 %v597
  %2923 = vmatpush.msra.mxu0 %v593
  %2924 = vmatpush.msra.mxu0 %v589
  %2925 = vmatpush.msra.mxu0 %v585
  %2926 = vmatmul.f32.gmra.mxu0 %v2708
  %v2927 = vpop.f32.mrf.mxu0
  %v2928 = vadd.f32 0.0, %v2927
  %2929 = vdwg.mxu0
  %2930 = vmatpush.msra.mxu0 %v646
  %2931 = vmatpush.msra.mxu0 %v642
  %2932 = vmatpush.msra.mxu0 %v638
  %2933 = vmatpush.msra.mxu0 %v634
  %2934 = vmatpush.msra.mxu0 %v630
  %2935 = vmatpush.msra.mxu0 %v626
  %2936 = vmatpush.msra.mxu0 %v622
  %2937 = vmatpush.msra.mxu0 %v618
  %2938 = vmatpush.msra.mxu0 %v614
  %2939 = vmatpush.msra.mxu0 %v610
  %2940 = vmatpush.msra.mxu0 %v606
  %2941 = vmatpush.msra.mxu0 %v602
  %2942 = vmatpush.msra.mxu0 %v598
  %2943 = vmatpush.msra.mxu0 %v594
  %2944 = vmatpush.msra.mxu0 %v590
  %2945 = vmatpush.msra.mxu0 %v586
  %2946 = vmatmul.f32.gmra.mxu0 %v2708
  %v2947 = vpop.f32.mrf.mxu0
  %v2948 = vadd.f32 0.0, %v2947
  %2949 = vdwg.mxu0
  %v2950 = vadd.f32 %v2866, %v2888
  %v2951 = vadd.f32 %v2867, %v2908
  %v2952 = vadd.f32 %v2868, %v2928
  %v2953 = vadd.f32 %v2869, %v2948
  %v2954 = vxor.u32 %v2950, 2147483648
  %v2955 = vmul.f32 %v2954, 1.442695
  %v2956 = vpow.pop %v2955
  %v2957 = vadd.f32 %v2956, 1.0
  %v2958 = vrcp.pop %v2957
  %v2959 = vmul.f32 %v2957, %v2958
  %v2960 = vsub.f32 1.0, %v2959
  %v2961 = vmul.f32 %v2958, %v2960
  %v2962 = vadd.f32 %v2958, %v2961
  %vm2963 = vweird.f32 %v2957
  %vm2964 = vweird.f32 %v2958
  %vm2965 = vmor %vm2963, %vm2964
  %v2966 = vsel %vm2965, %v2958, %v2962
  %v2967 = vand.u32 2147483647, %v2957
  %vm2968 = vcmp.eq.f32.partialorder %v2967, 8.507059e+37
  %v2969 = vand.u32 %v2957, 2147483648
  %v2970 = vor.u32 1.1754944e-38, %v2969
  %v2971 = vsel %vm2968, %v2970, %v2966
  %v2972 = vmul.f32 1.0, %v2971
  %v2973 = vxor.u32 %v2951, 2147483648
  %v2974 = vmul.f32 %v2973, 1.442695
  %v2975 = vpow.pop %v2974
  %v2976 = vadd.f32 %v2975, 1.0
  %v2977 = vrcp.pop %v2976
  %v2978 = vmul.f32 %v2976, %v2977
  %v2979 = vsub.f32 1.0, %v2978
  %v2980 = vmul.f32 %v2977, %v2979
  %v2981 = vadd.f32 %v2977, %v2980
  %vm2982 = vweird.f32 %v2976
  %vm2983 = vweird.f32 %v2977
  %vm2984 = vmor %vm2982, %vm2983
  %v2985 = vsel %vm2984, %v2977, %v2981
  %v2986 = vand.u32 2147483647, %v2976
  %vm2987 = vcmp.eq.f32.partialorder %v2986, 8.507059e+37
  %v2988 = vand.u32 %v2976, 2147483648
  %v2989 = vor.u32 1.1754944e-38, %v2988
  %v2990 = vsel %vm2987, %v2989, %v2985
  %v2991 = vmul.f32 1.0, %v2990
  %v2992 = vtanh.pop %v2952
  %v2993 = vxor.u32 %v2953, 2147483648
  %v2994 = vmul.f32 %v2993, 1.442695
  %v2995 = vpow.pop %v2994
  %v2996 = vadd.f32 %v2995, 1.0
  %v2997 = vrcp.pop %v2996
  %v2998 = vmul.f32 %v2996, %v2997
  %v2999 = vsub.f32 1.0, %v2998
  %v3000 = vmul.f32 %v2997, %v2999
  %v3001 = vadd.f32 %v2997, %v3000
  %vm3002 = vweird.f32 %v2996
  %vm3003 = vweird.f32 %v2997
  %vm3004 = vmor %vm3002, %vm3003
  %v3005 = vsel %vm3004, %v2997, %v3001
  %v3006 = vand.u32 2147483647, %v2996
  %vm3007 = vcmp.eq.f32.partialorder %v3006, 8.507059e+37
  %v3008 = vand.u32 %v2996, 2147483648
  %v3009 = vor.u32 1.1754944e-38, %v3008
  %v3010 = vsel %vm3007, %v3009, %v3005
  %v3011 = vmul.f32 1.0, %v3010
  %v3012 = vmul.f32 %v2991, %v2706
  %v3013 = vmul.f32 %v2972, %v2992
  %v3014 = vadd.f32 %v3012, %v3013
  %v3015 = vtanh.pop %v3014
  %v3016 = vmul.f32 %v3011, %v3015
  %v3017 = vld [vmem:[#allocation3] sm:$0xff]
  %v3018 = vld [vmem:[#allocation3 + $0x8] sm:$0xff]
  %v3019 = vld [vmem:[#allocation3 + $0x10] sm:$0xff]
  %v3020 = vld [vmem:[#allocation3 + $0x18] sm:$0xff]
  %3021 = vmatpush.msra.mxu0 %v707
  %3022 = vmatpush.msra.mxu0 %v703
  %3023 = vmatpush.msra.mxu0 %v699
  %3024 = vmatpush.msra.mxu0 %v695
  %3025 = vmatpush.msra.mxu0 %v691
  %3026 = vmatpush.msra.mxu0 %v687
  %3027 = vmatpush.msra.mxu0 %v683
  %3028 = vmatpush.msra.mxu0 %v679
  %3029 = vmatpush.msra.mxu0 %v675
  %3030 = vmatpush.msra.mxu0 %v671
  %3031 = vmatpush.msra.mxu0 %v667
  %3032 = vmatpush.msra.mxu0 %v663
  %3033 = vmatpush.msra.mxu0 %v659
  %3034 = vmatpush.msra.mxu0 %v655
  %3035 = vmatpush.msra.mxu0 %v651
  %3036 = vmatpush.msra.mxu0 %v647
  %3037 = vmatmul.f32.gmra.mxu0 %v2860
  %v3038 = vpop.f32.mrf.mxu0
  %v3039 = vadd.f32 0.0, %v3038
  %3040 = vdwg.mxu0
  %3041 = vmatpush.msra.mxu0 %v708
  %3042 = vmatpush.msra.mxu0 %v704
  %3043 = vmatpush.msra.mxu0 %v700
  %3044 = vmatpush.msra.mxu0 %v696
  %3045 = vmatpush.msra.mxu0 %v692
  %3046 = vmatpush.msra.mxu0 %v688
  %3047 = vmatpush.msra.mxu0 %v684
  %3048 = vmatpush.msra.mxu0 %v680
  %3049 = vmatpush.msra.mxu0 %v676
  %3050 = vmatpush.msra.mxu0 %v672
  %3051 = vmatpush.msra.mxu0 %v668
  %3052 = vmatpush.msra.mxu0 %v664
  %3053 = vmatpush.msra.mxu0 %v660
  %3054 = vmatpush.msra.mxu0 %v656
  %3055 = vmatpush.msra.mxu0 %v652
  %3056 = vmatpush.msra.mxu0 %v648
  %3057 = vmatmul.f32.gmra.mxu0 %v2860
  %v3058 = vpop.f32.mrf.mxu0
  %v3059 = vadd.f32 0.0, %v3058
  %3060 = vdwg.mxu0
  %3061 = vmatpush.msra.mxu0 %v709
  %3062 = vmatpush.msra.mxu0 %v705
  %3063 = vmatpush.msra.mxu0 %v701
  %3064 = vmatpush.msra.mxu0 %v697
  %3065 = vmatpush.msra.mxu0 %v693
  %3066 = vmatpush.msra.mxu0 %v689
  %3067 = vmatpush.msra.mxu0 %v685
  %3068 = vmatpush.msra.mxu0 %v681
  %3069 = vmatpush.msra.mxu0 %v677
  %3070 = vmatpush.msra.mxu0 %v673
  %3071 = vmatpush.msra.mxu0 %v669
  %3072 = vmatpush.msra.mxu0 %v665
  %3073 = vmatpush.msra.mxu0 %v661
  %3074 = vmatpush.msra.mxu0 %v657
  %3075 = vmatpush.msra.mxu0 %v653
  %3076 = vmatpush.msra.mxu0 %v649
  %3077 = vmatmul.f32.gmra.mxu0 %v2860
  %v3078 = vpop.f32.mrf.mxu0
  %v3079 = vadd.f32 0.0, %v3078
  %3080 = vdwg.mxu0
  %3081 = vmatpush.msra.mxu0 %v710
  %3082 = vmatpush.msra.mxu0 %v706
  %3083 = vmatpush.msra.mxu0 %v702
  %3084 = vmatpush.msra.mxu0 %v698
  %3085 = vmatpush.msra.mxu0 %v694
  %3086 = vmatpush.msra.mxu0 %v690
  %3087 = vmatpush.msra.mxu0 %v686
  %3088 = vmatpush.msra.mxu0 %v682
  %3089 = vmatpush.msra.mxu0 %v678
  %3090 = vmatpush.msra.mxu0 %v674
  %3091 = vmatpush.msra.mxu0 %v670
  %3092 = vmatpush.msra.mxu0 %v666
  %3093 = vmatpush.msra.mxu0 %v662
  %3094 = vmatpush.msra.mxu0 %v658
  %3095 = vmatpush.msra.mxu0 %v654
  %3096 = vmatpush.msra.mxu0 %v650
  %3097 = vmatmul.f32.gmra.mxu0 %v2860
  %v3098 = vpop.f32.mrf.mxu0
  %v3099 = vadd.f32 0.0, %v3098
  %3100 = vdwg.mxu0
  %v3101 = vadd.f32 %v3017, %v3039
  %v3102 = vadd.f32 %v3018, %v3059
  %v3103 = vadd.f32 %v3019, %v3079
  %v3104 = vadd.f32 %v3020, %v3099
  %v3105 = vxor.u32 %v3101, 2147483648
  %v3106 = vmul.f32 %v3105, 1.442695
  %v3107 = vpow.pop %v3106
  %v3108 = vadd.f32 %v3107, 1.0
  %v3109 = vrcp.pop %v3108
  %v3110 = vmul.f32 %v3108, %v3109
  %v3111 = vsub.f32 1.0, %v3110
  %v3112 = vmul.f32 %v3109, %v3111
  %v3113 = vadd.f32 %v3109, %v3112
  %vm3114 = vweird.f32 %v3108
  %vm3115 = vweird.f32 %v3109
  %vm3116 = vmor %vm3114, %vm3115
  %v3117 = vsel %vm3116, %v3109, %v3113
  %v3118 = vand.u32 2147483647, %v3108
  %vm3119 = vcmp.eq.f32.partialorder %v3118, 8.507059e+37
  %v3120 = vand.u32 %v3108, 2147483648
  %v3121 = vor.u32 1.1754944e-38, %v3120
  %v3122 = vsel %vm3119, %v3121, %v3117
  %v3123 = vmul.f32 1.0, %v3122
  %v3124 = vxor.u32 %v3102, 2147483648
  %v3125 = vmul.f32 %v3124, 1.442695
  %v3126 = vpow.pop %v3125
  %v3127 = vadd.f32 %v3126, 1.0
  %v3128 = vrcp.pop %v3127
  %v3129 = vmul.f32 %v3127, %v3128
  %v3130 = vsub.f32 1.0, %v3129
  %v3131 = vmul.f32 %v3128, %v3130
  %v3132 = vadd.f32 %v3128, %v3131
  %vm3133 = vweird.f32 %v3127
  %vm3134 = vweird.f32 %v3128
  %vm3135 = vmor %vm3133, %vm3134
  %v3136 = vsel %vm3135, %v3128, %v3132
  %v3137 = vand.u32 2147483647, %v3127
  %vm3138 = vcmp.eq.f32.partialorder %v3137, 8.507059e+37
  %v3139 = vand.u32 %v3127, 2147483648
  %v3140 = vor.u32 1.1754944e-38, %v3139
  %v3141 = vsel %vm3138, %v3140, %v3136
  %v3142 = vmul.f32 1.0, %v3141
  %v3143 = vtanh.pop %v3103
  %v3144 = vxor.u32 %v3104, 2147483648
  %v3145 = vmul.f32 %v3144, 1.442695
  %v3146 = vpow.pop %v3145
  %v3147 = vadd.f32 %v3146, 1.0
  %v3148 = vrcp.pop %v3147
  %v3149 = vmul.f32 %v3147, %v3148
  %v3150 = vsub.f32 1.0, %v3149
  %v3151 = vmul.f32 %v3148, %v3150
  %v3152 = vadd.f32 %v3148, %v3151
  %vm3153 = vweird.f32 %v3147
  %vm3154 = vweird.f32 %v3148
  %vm3155 = vmor %vm3153, %vm3154
  %v3156 = vsel %vm3155, %v3148, %v3152
  %v3157 = vand.u32 2147483647, %v3147
  %vm3158 = vcmp.eq.f32.partialorder %v3157, 8.507059e+37
  %v3159 = vand.u32 %v3147, 2147483648
  %v3160 = vor.u32 1.1754944e-38, %v3159
  %v3161 = vsel %vm3158, %v3160, %v3156
  %v3162 = vmul.f32 1.0, %v3161
  %v3163 = vmul.f32 %v3142, %v2858
  %v3164 = vmul.f32 %v3123, %v3143
  %v3165 = vadd.f32 %v3163, %v3164
  %v3166 = vtanh.pop %v3165
  %v3167 = vmul.f32 %v3162, %v3166
  %s3168 = scalar_lea.vmem [#allocation4], 56
  %3169 = vst [vmem:[%s3168] sm:$0xff] %v3016
  %3170 = vst [vmem:[#allocation5] sm:$0xff] %v3167
  %v3171 = vld [vmem:[#allocation4] sm:$0xff]
  %v3172 = vld [vmem:[#allocation4 + $0x8] sm:$0xff]
  %v3173 = vld [vmem:[#allocation4 + $0x10] sm:$0xff]
  %v3174 = vld [vmem:[#allocation4 + $0x18] sm:$0xff]
  %v3175 = vld [vmem:[#allocation4 + $0x20] sm:$0xff]
  %v3176 = vld [vmem:[#allocation4 + $0x28] sm:$0xff]
  %v3177 = vld [vmem:[#allocation4 + $0x30] sm:$0xff]
  %v3178 = vld [vmem:[#allocation4 + $0x38] sm:$0xff]
  %v3179 = vld [vmem:[#allocation5] sm:$0xff]
  %v3180 = vld [vmem:[#allocation5 + $0x8] sm:$0xff]
  %v3181 = vld [vmem:[#allocation5 + $0x10] sm:$0xff]
  %v3182 = vld [vmem:[#allocation5 + $0x18] sm:$0xff]
  %v3183 = vld [vmem:[#allocation5 + $0x20] sm:$0xff]
  %v3184 = vld [vmem:[#allocation5 + $0x28] sm:$0xff]
  %v3185 = vld [vmem:[#allocation5 + $0x30] sm:$0xff]
  %v3186 = vld [vmem:[#allocation5 + $0x38] sm:$0xff]
  %v3187 = vld [vmem:[%s7] sm:$0xff]
  %v3188 = vld [vmem:[%s7 + $0x8] sm:$0xff]
  %v3189 = vld [vmem:[%s7 + $0x10] sm:$0xff]
  %v3190 = vld [vmem:[%s7 + $0x18] sm:$0xff]
  %v3191 = vld [vmem:[%s7 + $0x20] sm:$0xff]
  %v3192 = vld [vmem:[%s7 + $0x28] sm:$0xff]
  %v3193 = vld [vmem:[%s7 + $0x30] sm:$0xff]
  %v3194 = vld [vmem:[%s7 + $0x38] sm:$0xff]
  %v3195 = vld [vmem:[%s7 + $0x40] sm:$0xff]
  %v3196 = vld [vmem:[%s7 + $0x48] sm:$0xff]
  %v3197 = vld [vmem:[%s7 + $0x50] sm:$0xff]
  %v3198 = vld [vmem:[%s7 + $0x58] sm:$0xff]
  %v3199 = vld [vmem:[%s7 + $0x60] sm:$0xff]
  %v3200 = vld [vmem:[%s7 + $0x68] sm:$0xff]
  %v3201 = vld [vmem:[%s7 + $0x70] sm:$0xff]
  %v3202 = vld [vmem:[%s7 + $0x78] sm:$0xff]
  %v3203 = vld [vmem:[%s8] sm:$0xff]
  %v3204 = vld [vmem:[%s8 + $0x8] sm:$0xff]
  %v3205 = vld [vmem:[%s8 + $0x10] sm:$0xff]
  %v3206 = vld [vmem:[%s8 + $0x18] sm:$0xff]
  %v3207 = vld [vmem:[%s8 + $0x20] sm:$0xff]
  %v3208 = vld [vmem:[%s8 + $0x28] sm:$0xff]
  %v3209 = vld [vmem:[%s8 + $0x30] sm:$0xff]
  %v3210 = vld [vmem:[%s8 + $0x38] sm:$0xff]
  %v3211 = vld [vmem:[%s8 + $0x40] sm:$0xff]
  %v3212 = vld [vmem:[%s8 + $0x48] sm:$0xff]
  %v3213 = vld [vmem:[%s8 + $0x50] sm:$0xff]
  %v3214 = vld [vmem:[%s8 + $0x58] sm:$0xff]
  %v3215 = vld [vmem:[%s8 + $0x60] sm:$0xff]
  %v3216 = vld [vmem:[%s8 + $0x68] sm:$0xff]
  %v3217 = vld [vmem:[%s8 + $0x70] sm:$0xff]
  %v3218 = vld [vmem:[%s8 + $0x78] sm:$0xff]
  %3219 = vmatpush.msra.mxu0 %v3218
  %3220 = vmatpush.msra.mxu0 %v3217
  %3221 = vmatpush.msra.mxu0 %v3216
  %3222 = vmatpush.msra.mxu0 %v3215
  %3223 = vmatpush.msra.mxu0 %v3214
  %3224 = vmatpush.msra.mxu0 %v3213
  %3225 = vmatpush.msra.mxu0 %v3212
  %3226 = vmatpush.msra.mxu0 %v3211
  %3227 = vmatpush.msra.mxu0 %v3210
  %3228 = vmatpush.msra.mxu0 %v3209
  %3229 = vmatpush.msra.mxu0 %v3208
  %3230 = vmatpush.msra.mxu0 %v3207
  %3231 = vmatpush.msra.mxu0 %v3206
  %3232 = vmatpush.msra.mxu0 %v3205
  %3233 = vmatpush.msra.mxu0 %v3204
  %3234 = vmatpush.msra.mxu0 %v3203
  %3235 = vmatmul.f32.gmra.mxu0 %v3179
  %v3236 = vpop.f32.mrf.mxu0
  %v3237 = vadd.f32 0.0, %v3236
  %3238 = vmatmul.f32.gmra.mxu0 %v3180
  %v3239 = vpop.f32.mrf.mxu0
  %v3240 = vadd.f32 0.0, %v3239
  %3241 = vmatmul.f32.gmra.mxu0 %v3181
  %v3242 = vpop.f32.mrf.mxu0
  %v3243 = vadd.f32 0.0, %v3242
  %3244 = vmatmul.f32.gmra.mxu0 %v3182
  %v3245 = vpop.f32.mrf.mxu0
  %v3246 = vadd.f32 0.0, %v3245
  %3247 = vmatmul.f32.gmra.mxu0 %v3183
  %v3248 = vpop.f32.mrf.mxu0
  %v3249 = vadd.f32 0.0, %v3248
  %3250 = vmatmul.f32.gmra.mxu0 %v3184
  %v3251 = vpop.f32.mrf.mxu0
  %v3252 = vadd.f32 0.0, %v3251
  %3253 = vmatmul.f32.gmra.mxu0 %v3185
  %v3254 = vpop.f32.mrf.mxu0
  %v3255 = vadd.f32 0.0, %v3254
  %3256 = vmatmul.f32.gmra.mxu0 %v3186
  %v3257 = vpop.f32.mrf.mxu0
  %v3258 = vadd.f32 0.0, %v3257
  %3259 = vdwg.mxu0
  %3260 = vmatpush.msra.mxu0 %v3202
  %3261 = vmatpush.msra.mxu0 %v3201
  %3262 = vmatpush.msra.mxu0 %v3200
  %3263 = vmatpush.msra.mxu0 %v3199
  %3264 = vmatpush.msra.mxu0 %v3198
  %3265 = vmatpush.msra.mxu0 %v3197
  %3266 = vmatpush.msra.mxu0 %v3196
  %3267 = vmatpush.msra.mxu0 %v3195
  %3268 = vmatpush.msra.mxu0 %v3194
  %3269 = vmatpush.msra.mxu0 %v3193
  %3270 = vmatpush.msra.mxu0 %v3192
  %3271 = vmatpush.msra.mxu0 %v3191
  %3272 = vmatpush.msra.mxu0 %v3190
  %3273 = vmatpush.msra.mxu0 %v3189
  %3274 = vmatpush.msra.mxu0 %v3188
  %3275 = vmatpush.msra.mxu0 %v3187
  %3276 = vmatmul.f32.gmra.mxu0 %v3171
  %v3277 = vpop.f32.mrf.mxu0
  %v3278 = vadd.f32 %v3237, %v3277
  %3279 = vmatmul.f32.gmra.mxu0 %v3172
  %v3280 = vpop.f32.mrf.mxu0
  %v3281 = vadd.f32 %v3240, %v3280
  %3282 = vmatmul.f32.gmra.mxu0 %v3173
  %v3283 = vpop.f32.mrf.mxu0
  %v3284 = vadd.f32 %v3243, %v3283
  %3285 = vmatmul.f32.gmra.mxu0 %v3174
  %v3286 = vpop.f32.mrf.mxu0
  %v3287 = vadd.f32 %v3246, %v3286
  %3288 = vmatmul.f32.gmra.mxu0 %v3175
  %v3289 = vpop.f32.mrf.mxu0
  %v3290 = vadd.f32 %v3249, %v3289
  %3291 = vmatmul.f32.gmra.mxu0 %v3176
  %v3292 = vpop.f32.mrf.mxu0
  %v3293 = vadd.f32 %v3252, %v3292
  %3294 = vmatmul.f32.gmra.mxu0 %v3177
  %v3295 = vpop.f32.mrf.mxu0
  %v3296 = vadd.f32 %v3255, %v3295
  %3297 = vmatmul.f32.gmra.mxu0 %v3178
  %v3298 = vpop.f32.mrf.mxu0
  %v3299 = vadd.f32 %v3258, %v3298
  %3300 = vdwg.mxu0
  %v3301 = vld [vmem:[%s9] sm:$0x1]
  %v3303 = vperm.slane %v3301, 0
  %v3305 = vadd.f32 %v3278, %v3303
  %v3306 = vadd.f32 %v3281, %v3303
  %v3307 = vadd.f32 %v3284, %v3303
  %v3308 = vadd.f32 %v3287, %v3303
  %v3309 = vadd.f32 %v3290, %v3303
  %v3310 = vadd.f32 %v3293, %v3303
  %v3311 = vadd.f32 %v3296, %v3303
  %v3312 = vadd.f32 %v3299, %v3303
  %3313 = vst [vmem:[%s10] sm:$0xff] %v3305
  %3314 = vst [vmem:[%s10 + $0x8] sm:$0xff] %v3306
  %3315 = vst [vmem:[%s10 + $0x10] sm:$0xff] %v3307
  %3316 = vst [vmem:[%s10 + $0x18] sm:$0xff] %v3308
  %3317 = vst [vmem:[%s10 + $0x20] sm:$0xff] %v3309
  %3318 = vst [vmem:[%s10 + $0x28] sm:$0xff] %v3310
  %3319 = vst [vmem:[%s10 + $0x30] sm:$0xff] %v3311
  %3320 = vst [vmem:[%s10 + $0x38] sm:$0xff] %v3312
  // Predicated region
  $region42: #{forward.1} parent=0 // pred_check
    _
  $region43: #{forward.1} parent=0 // pred_check_branch
    %3322 = sbr.rel (0) target = $region45
  $region44: #{forward.1} parent=0 // pred_region
    _
  $region45: #{forward.1} parent=0 // pred_fallthru
    _
  // Predicated region
  $region46: #{forward.1} parent=0 // pred_check
    _
  $region47: #{forward.1} parent=0 // pred_check_branch
    %3324 = sbr.rel (0) target = $region49
  $region48: #{forward.1} parent=0 // pred_region
    _
  $region49: #{forward.1} parent=0 // pred_fallthru
    _

</llo_original>
